<compile_context>
chip_gen: v7x
topology: tpu7x:2x2x1
jax: 0.10.0
libtpu: 0.0.40
codegen_flags: <defaults>
</compile_context>

<pallas_src>
import functools

import jax
import jax.numpy as jnp
from jax.experimental import pallas as pl
from jax.experimental.pallas import tpu as pltpu


def _round_up(v, m):
    return (v + m - 1) // m * m


def _sage_layer_kernel(a_ref, xfull_ref, xtile_ref, w_ref, b_ref, out_ref,
                       *, activation, valid_out):
    """One fused SAGEConv layer on a row tile of nodes.

    a_ref:     [TM, Np]    row-normalized adjacency tile (bf16/f32)
    xfull_ref: [Np, Kp]    features of ALL nodes (neighbor-aggregation operand)
    xtile_ref: [TM, Kp]    features of THIS row tile (root path operand)
    w_ref:     [2*Kp, Op]  fused weights [[W_l]; [W_r]] (host-concatenated, padded)
    b_ref:     [1, Op]     bias (f32)
    out_ref:   [TM, Op]
    """
    compute_dtype = xtile_ref.dtype

    # Mean neighbor aggregation: one MXU matmul against the full node-feature block.
    agg = jnp.dot(a_ref[...], xfull_ref[...],
                  preferred_element_type=jnp.float32).astype(compute_dtype)

    # Fused root + neighbor linear maps: a single K = 2*Kp matmul.
    cat = jnp.concatenate([agg, xtile_ref[...]], axis=1)            # [TM, 2*Kp]
    z = jnp.dot(cat, w_ref[...],
                preferred_element_type=jnp.float32) + b_ref[...]    # [TM, Op] f32

    if activation == "elu":
        # ELU(alpha=1). Clamp the exp argument so the unselected branch never
        # produces inf; exp runs on the EUP slot (effectively free in the bundle).
        z = jnp.where(z > 0, z, jnp.exp(jnp.minimum(z, 0.0)) - 1.0)
    elif activation == "log_softmax":
        # Masked log_softmax over the lane-padded feature axis.
        lane = jax.lax.broadcasted_iota(jnp.int32, z.shape, 1)
        zm = jnp.where(lane < valid_out, z, -jnp.inf)
        m = jnp.max(zm, axis=1, keepdims=True)
        s = zm - m
        lse = jnp.log(jnp.sum(jnp.exp(s), axis=1, keepdims=True))
        z = s - lse

    out_ref[...] = z.astype(out_ref.dtype)


def _sage_layer(a, xfull, w, b, tm, *, activation, valid_out, out_dtype):
    Np, Kp = xfull.shape
    Op = w.shape[1]

    flops = 2 * Np * Np * Kp + 2 * Np * (2 * Kp) * Op
    bytes_accessed = int(
        a.dtype.itemsize * Np * Np
        + xfull.dtype.itemsize * Np * Kp * 2
        + w.dtype.itemsize * 2 * Kp * Op
        + b.dtype.itemsize * Op
        + jnp.dtype(out_dtype).itemsize * Np * Op)

    kernel = functools.partial(_sage_layer_kernel,
                               activation=activation, valid_out=valid_out)

    return pl.pallas_call(
        kernel,
        out_shape=jax.ShapeDtypeStruct((Np, Op), out_dtype),
        grid=(Np // tm,),
        in_specs=[
            pl.BlockSpec((tm, Np), lambda i: (i, 0)),       # adjacency row tile (streamed)
            pl.BlockSpec((Np, Kp), lambda i: (0, 0)),       # all-node features (resident)
            pl.BlockSpec((tm, Kp), lambda i: (i, 0)),       # row-tile features (root path)
            pl.BlockSpec((2 * Kp, Op), lambda i: (0, 0)),   # fused weights (resident)
            pl.BlockSpec((1, Op), lambda i: (0, 0)),        # bias (resident)
        ],
        out_specs=pl.BlockSpec((tm, Op), lambda i: (i, 0)),
        compiler_params=pltpu.CompilerParams(
            dimension_semantics=("parallel",)),
        cost_estimate=pl.CostEstimate(
            flops=flops, transcendentals=Np * Op, bytes_accessed=bytes_accessed),
    )(a, xfull, xfull, w, b)


def graphsage_forward(x, edge_index, params, *, tm=256, use_bf16=True):
    """x: [N, F] float32, edge_index: [2, E] int32 (row 0 = source j, row 1 = target i)."""
    N, F_in = x.shape
    w1l, w1r, b1, w2l, w2r, b2 = params
    H = w1l.shape[1]
    E_out = w2l.shape[1]

    cdt = jnp.bfloat16 if use_bf16 else jnp.float32

    # Padded sizes: rows to a multiple of the row tile, lanes to multiples of 128.
    TM = min(tm, _round_up(N, 8))
    Np = _round_up(N, TM)
    Fp = _round_up(F_in, 128)
    Hp = _round_up(H, 128)
    Ep = _round_up(E_out, 128)

    # --- glue: dense row-normalized adjacency (mean aggregation), zero-padded ---
    A = jnp.zeros((Np, Np), jnp.float32).at[edge_index[1], edge_index[0]].set(1.0)
    deg = jnp.sum(A, axis=1, keepdims=True)
    a_norm = (A / jnp.maximum(deg, 1.0)).astype(cdt)

    xp = jnp.zeros((Np, Fp), cdt).at[:N, :F_in].set(x.astype(cdt))

    # --- fused, lane-padded weights [[W_l]; [W_r]] (zero padding keeps math exact) ---
    w1 = jnp.zeros((2 * Fp, Hp), cdt)
    w1 = w1.at[:F_in, :H].set(w1l.astype(cdt))
    w1 = w1.at[Fp:Fp + F_in, :H].set(w1r.astype(cdt))
    b1p = jnp.zeros((1, Hp), jnp.float32).at[:, :H].set(b1)

    w2 = jnp.zeros((2 * Hp, Ep), cdt)
    w2 = w2.at[:H, :E_out].set(w2l.astype(cdt))
    w2 = w2.at[Hp:Hp + H, :E_out].set(w2r.astype(cdt))
    b2p = jnp.zeros((1, Ep), jnp.float32).at[:, :E_out].set(b2)

    # Layer 1: SAGEConv + ELU.
    # TODO(synk): F.dropout(p=0.2) is identity (eval-mode); training would need
    #             pltpu.prng_seed/prng_random_bits masking.
    h = _sage_layer(a_norm, xp, w1, b1p, TM,
                    activation="elu", valid_out=H, out_dtype=cdt)
    # Layer 2: SAGEConv + masked log_softmax (f32 output).
    z = _sage_layer(a_norm, h, w2, b2p, TM,
                    activation="log_softmax", valid_out=E_out, out_dtype=jnp.float32)
    return z[:N, :E_out]


def graphsage_reference(x, edge_index, params, use_bf16=True):
    """Plain-JAX reference with the same dtype policy (torch SAGEConv semantics)."""
    cdt = jnp.bfloat16 if use_bf16 else jnp.float32
    N = x.shape[0]
    w1l, w1r, b1, w2l, w2r, b2 = params
    A = jnp.zeros((N, N), jnp.float32).at[edge_index[1], edge_index[0]].set(1.0)
    deg = jnp.sum(A, axis=1, keepdims=True)
    a = (A / jnp.maximum(deg, 1.0)).astype(cdt)
    xc = x.astype(cdt)
    agg1 = jnp.dot(a, xc, preferred_element_type=jnp.float32).astype(cdt)
    h = (jnp.dot(agg1, w1l.astype(cdt), preferred_element_type=jnp.float32)
         + jnp.dot(xc, w1r.astype(cdt), preferred_element_type=jnp.float32) + b1)
    h = jnp.where(h > 0, h, jnp.exp(jnp.minimum(h, 0.0)) - 1.0)
    hc = h.astype(cdt)
    agg2 = jnp.dot(a, hc, preferred_element_type=jnp.float32).astype(cdt)
    z = (jnp.dot(agg2, w2l.astype(cdt), preferred_element_type=jnp.float32)
         + jnp.dot(hc, w2r.astype(cdt), preferred_element_type=jnp.float32) + b2)
    return jax.nn.log_softmax(z, axis=1)


def init_params(key, feature_dim, hidden_dim, embedding_dim):
    ks = jax.random.split(key, 6)

    def glorot(k, shape):
        fan_in, fan_out = shape
        lim = (6.0 / (fan_in + fan_out)) ** 0.5
        return jax.random.uniform(k, shape, jnp.float32, -lim, lim)

    # stored already transposed: [in, out]
    w1l = glorot(ks[0], (feature_dim, hidden_dim))
    w1r = glorot(ks[1], (feature_dim, hidden_dim))
    b1 = jnp.zeros((1, hidden_dim), jnp.float32)
    w2l = glorot(ks[2], (hidden_dim, embedding_dim))
    w2r = glorot(ks[3], (hidden_dim, embedding_dim))
    b2 = jnp.zeros((1, embedding_dim), jnp.float32)
    return (w1l, w1r, b1, w2l, w2r, b2)


if __name__ == "__main__":
    key = jax.random.PRNGKey(0)
    k_x, k_e, k_p = jax.random.split(key, 3)

    N = 512              # number of nodes -> 2 row tiles of 256 (exercises the grid)
    feature_dim = 96     # -> padded to 128 lanes
    SAGE_hidden_dim = 64 # -> padded to 128 lanes
    embedding_dim = 48   # -> padded to 128 lanes, masked log_softmax
    num_edges = 4096

    x = jax.random.normal(k_x, (N, feature_dim), jnp.float32)
    edge_index = jax.random.randint(k_e, (2, num_edges), 0, N, jnp.int32)
    params = init_params(k_p, feature_dim, SAGE_hidden_dim, embedding_dim)

    fwd = jax.jit(graphsage_forward)
    emb = fwd(x, edge_index, params)
    jax.block_until_ready(emb)

    assert emb.shape == (N, embedding_dim)
    # rows of log_softmax must exp-sum to 1
    row_sums = jnp.sum(jnp.exp(emb), axis=1)
    assert jnp.allclose(row_sums, jnp.ones((N,)), atol=1e-3)
    # match the plain-JAX reference (same bf16/f32 policy)
    ref = graphsage_reference(x, edge_index, params)
    assert jnp.allclose(emb, ref, atol=1e-2, rtol=1e-2), float(jnp.max(jnp.abs(emb - ref)))

    print("KERNEL_OK")
</pallas_src>

<mosaic_0001>
module attributes {stable_mosaic.version = 11 : i64} {
  func.func @_sage_layer_kernel(%arg0: i32, %arg1: memref<256x512xbf16, #tpu.memory_space<vmem>>, %arg2: memref<512x128xbf16, #tpu.memory_space<vmem>>, %arg3: memref<256x128xbf16, #tpu.memory_space<vmem>>, %arg4: memref<256x128xbf16, #tpu.memory_space<vmem>>, %arg5: memref<1x128xf32, #tpu.memory_space<vmem>>, %arg6: memref<256x128xbf16, #tpu.memory_space<vmem>>) attributes {dimension_semantics = [#tpu.dimension_semantics<parallel>], iteration_bounds = array<i64: 2>, scalar_prefetch = 0 : i64, scratch_operands = 0 : i64, tpu.core_type = #tpu.core_type<tc>, window_params = [{transform_indices = @transform_0, window_bounds = array<i64: 256, 512>}, {pipeline_mode = #tpu.pipeline_mode<synchronous>, transform_indices = @transform_1, window_bounds = array<i64: 512, 128>}, {transform_indices = @transform_2, window_bounds = array<i64: 256, 128>}, {pipeline_mode = #tpu.pipeline_mode<synchronous>, transform_indices = @transform_3, window_bounds = array<i64: 256, 128>}, {pipeline_mode = #tpu.pipeline_mode<synchronous>, transform_indices = @transform_4, window_bounds = array<i64: 1, 128>}, {transform_indices = @transform_5, window_bounds = array<i64: 256, 128>}]} {
    %c0 = arith.constant 0 : index
    %c0_0 = arith.constant 0 : index
    %0 = vector.load %arg1[%c0, %c0_0] : memref<256x512xbf16, #tpu.memory_space<vmem>>, vector<256x512xbf16>
    %c0_1 = arith.constant 0 : index
    %c0_2 = arith.constant 0 : index
    %1 = vector.load %arg2[%c0_1, %c0_2] : memref<512x128xbf16, #tpu.memory_space<vmem>>, vector<512x128xbf16>
    %cst = arith.constant dense<0.000000e+00> : vector<256x128xf32>
    %2 = tpu.matmul %0, %1, %cst {dimension_numbers = #tpu.dot_dimension_numbers<[1], [0], [0], [1], [0, 0, 1, 1], [], []>} : vector<256x512xbf16>, vector<512x128xbf16>, vector<256x128xf32> -> vector<256x128xf32>
    %3 = arith.truncf %2 : vector<256x128xf32> to vector<256x128xbf16>
    %c0_3 = arith.constant 0 : index
    %c0_4 = arith.constant 0 : index
    %4 = vector.load %arg3[%c0_3, %c0_4] : memref<256x128xbf16, #tpu.memory_space<vmem>>, vector<256x128xbf16>
    %5 = tpu.concatenate %3, %4 in 1 : vector<256x128xbf16>, vector<256x128xbf16> -> vector<256x256xbf16>
    %c0_5 = arith.constant 0 : index
    %c0_6 = arith.constant 0 : index
    %6 = vector.load %arg4[%c0_5, %c0_6] : memref<256x128xbf16, #tpu.memory_space<vmem>>, vector<256x128xbf16>
    %cst_7 = arith.constant dense<0.000000e+00> : vector<256x128xf32>
    %7 = tpu.matmul %5, %6, %cst_7 {dimension_numbers = #tpu.dot_dimension_numbers<[1], [0], [0], [1], [0, 0, 1, 1], [], []>} : vector<256x256xbf16>, vector<256x128xbf16>, vector<256x128xf32> -> vector<256x128xf32>
    %c0_8 = arith.constant 0 : index
    %c0_9 = arith.constant 0 : index
    %8 = vector.load %arg5[%c0_8, %c0_9] : memref<1x128xf32, #tpu.memory_space<vmem>>, vector<1x128xf32>
    %9 = vector.broadcast %8 : vector<1x128xf32> to vector<256x128xf32>
    %10 = arith.addf %7, %9 : vector<256x128xf32>
    %cst_10 = arith.constant 0.000000e+00 : f32
    %11 = vector.broadcast %cst_10 : f32 to vector<256x128xf32>
    %12 = arith.cmpf ogt, %10, %11 : vector<256x128xf32>
    %cst_11 = arith.constant 0.000000e+00 : f32
    %13 = vector.broadcast %cst_11 : f32 to vector<256x128xf32>
    %14 = arith.minimumf %10, %13 : vector<256x128xf32>
    %15 = math.exp %14 : vector<256x128xf32>
    %cst_12 = arith.constant 1.000000e+00 : f32
    %16 = vector.broadcast %cst_12 : f32 to vector<256x128xf32>
    %17 = arith.subf %15, %16 : vector<256x128xf32>
    %18 = arith.select %12, %10, %17 : vector<256x128xi1>, vector<256x128xf32>
    %19 = arith.truncf %18 : vector<256x128xf32> to vector<256x128xbf16>
    %c0_13 = arith.constant 0 : index
    %c0_14 = arith.constant 0 : index
    %20 = vector.load %arg6[%c0_13, %c0_14] : memref<256x128xbf16, #tpu.memory_space<vmem>>, vector<256x128xbf16>
    tpu.vector_store %arg6[%c0_13, %c0_14], %19 {strides = array<i32>} : memref<256x128xbf16, #tpu.memory_space<vmem>>, vector<256x128xbf16>,
    return
  }
  func.func @transform_0(%arg0: i32) -> (i32, i32) {
    %c0_i32 = arith.constant 0 : i32
    %c0_i32_0 = arith.constant 0 : i32
    return %arg0, %c0_i32 : i32, i32
  }
  func.func @transform_1(%arg0: i32) -> (i32, i32) {
    %c0_i32 = arith.constant 0 : i32
    %c0_i32_0 = arith.constant 0 : i32
    %c0_i32_1 = arith.constant 0 : i32
    return %c0_i32, %c0_i32_0 : i32, i32
  }
  func.func @transform_2(%arg0: i32) -> (i32, i32) {
    %c0_i32 = arith.constant 0 : i32
    %c0_i32_0 = arith.constant 0 : i32
    return %arg0, %c0_i32 : i32, i32
  }
  func.func @transform_3(%arg0: i32) -> (i32, i32) {
    %c0_i32 = arith.constant 0 : i32
    %c0_i32_0 = arith.constant 0 : i32
    %c0_i32_1 = arith.constant 0 : i32
    return %c0_i32, %c0_i32_0 : i32, i32
  }
  func.func @transform_4(%arg0: i32) -> (i32, i32) {
    %c0_i32 = arith.constant 0 : i32
    %c0_i32_0 = arith.constant 0 : i32
    %c0_i32_1 = arith.constant 0 : i32
    return %c0_i32, %c0_i32_0 : i32, i32
  }
  func.func @transform_5(%arg0: i32) -> (i32, i32) {
    %c0_i32 = arith.constant 0 : i32
    %c0_i32_0 = arith.constant 0 : i32
    return %arg0, %c0_i32 : i32, i32
  }
}

module attributes {stable_mosaic.version = 11 : i64} {
  func.func @_sage_layer_kernel(%arg0: i32, %arg1: memref<256x512xbf16, #tpu.memory_space<vmem>>, %arg2: memref<512x128xbf16, #tpu.memory_space<vmem>>, %arg3: memref<256x128xbf16, #tpu.memory_space<vmem>>, %arg4: memref<256x128xbf16, #tpu.memory_space<vmem>>, %arg5: memref<1x128xf32, #tpu.memory_space<vmem>>, %arg6: memref<256x128xf32, #tpu.memory_space<vmem>>) attributes {dimension_semantics = [#tpu.dimension_semantics<parallel>], iteration_bounds = array<i64: 2>, scalar_prefetch = 0 : i64, scratch_operands = 0 : i64, tpu.core_type = #tpu.core_type<tc>, window_params = [{transform_indices = @transform_0, window_bounds = array<i64: 256, 512>}, {pipeline_mode = #tpu.pipeline_mode<synchronous>, transform_indices = @transform_1, window_bounds = array<i64: 512, 128>}, {transform_indices = @transform_2, window_bounds = array<i64: 256, 128>}, {pipeline_mode = #tpu.pipeline_mode<synchronous>, transform_indices = @transform_3, window_bounds = array<i64: 256, 128>}, {pipeline_mode = #tpu.pipeline_mode<synchronous>, transform_indices = @transform_4, window_bounds = array<i64: 1, 128>}, {transform_indices = @transform_5, window_bounds = array<i64: 256, 128>}]} {
    %c0 = arith.constant 0 : index
    %c0_0 = arith.constant 0 : index
    %0 = vector.load %arg1[%c0, %c0_0] : memref<256x512xbf16, #tpu.memory_space<vmem>>, vector<256x512xbf16>
    %c0_1 = arith.constant 0 : index
    %c0_2 = arith.constant 0 : index
    %1 = vector.load %arg2[%c0_1, %c0_2] : memref<512x128xbf16, #tpu.memory_space<vmem>>, vector<512x128xbf16>
    %cst = arith.constant dense<0.000000e+00> : vector<256x128xf32>
    %2 = tpu.matmul %0, %1, %cst {dimension_numbers = #tpu.dot_dimension_numbers<[1], [0], [0], [1], [0, 0, 1, 1], [], []>} : vector<256x512xbf16>, vector<512x128xbf16>, vector<256x128xf32> -> vector<256x128xf32>
    %3 = arith.truncf %2 : vector<256x128xf32> to vector<256x128xbf16>
    %c0_3 = arith.constant 0 : index
    %c0_4 = arith.constant 0 : index
    %4 = vector.load %arg3[%c0_3, %c0_4] : memref<256x128xbf16, #tpu.memory_space<vmem>>, vector<256x128xbf16>
    %5 = tpu.concatenate %3, %4 in 1 : vector<256x128xbf16>, vector<256x128xbf16> -> vector<256x256xbf16>
    %c0_5 = arith.constant 0 : index
    %c0_6 = arith.constant 0 : index
    %6 = vector.load %arg4[%c0_5, %c0_6] : memref<256x128xbf16, #tpu.memory_space<vmem>>, vector<256x128xbf16>
    %cst_7 = arith.constant dense<0.000000e+00> : vector<256x128xf32>
    %7 = tpu.matmul %5, %6, %cst_7 {dimension_numbers = #tpu.dot_dimension_numbers<[1], [0], [0], [1], [0, 0, 1, 1], [], []>} : vector<256x256xbf16>, vector<256x128xbf16>, vector<256x128xf32> -> vector<256x128xf32>
    %c0_8 = arith.constant 0 : index
    %c0_9 = arith.constant 0 : index
    %8 = vector.load %arg5[%c0_8, %c0_9] : memref<1x128xf32, #tpu.memory_space<vmem>>, vector<1x128xf32>
    %9 = vector.broadcast %8 : vector<1x128xf32> to vector<256x128xf32>
    %10 = arith.addf %7, %9 : vector<256x128xf32>
    %11 = tpu.iota {dimensions = array<i32: 1>} : vector<256x128xi32>
    %c48_i32 = arith.constant 48 : i32
    %12 = vector.broadcast %c48_i32 : i32 to vector<256x128xi32>
    %13 = arith.cmpi slt, %11, %12 : vector<256x128xi32>
    %cst_10 = arith.constant 0xFF800000 : f32
    %14 = vector.broadcast %cst_10 : f32 to vector<256x128xf32>
    %15 = arith.select %13, %10, %14 : vector<256x128xi1>, vector<256x128xf32>
    %cst_11 = arith.constant dense<0xFF800000> : vector<256xf32>
    %16 = vector.multi_reduction <maximumf>, %15, %cst_11 [1] : vector<256x128xf32> to vector<256xf32>
    %17 = vector.shape_cast %16 : vector<256xf32> to vector<256x1xf32>
    %18 = vector.broadcast %17 : vector<256x1xf32> to vector<256x128xf32>
    %19 = arith.subf %15, %18 : vector<256x128xf32>
    %20 = math.exp %19 : vector<256x128xf32>
    %cst_12 = arith.constant dense<0.000000e+00> : vector<256xf32>
    %21 = vector.multi_reduction <add>, %20, %cst_12 [1] : vector<256x128xf32> to vector<256xf32>
    %22 = vector.shape_cast %21 : vector<256xf32> to vector<256x1xf32>
    %23 = math.log %22 : vector<256x1xf32>
    %24 = vector.broadcast %23 : vector<256x1xf32> to vector<256x128xf32>
    %25 = arith.subf %19, %24 : vector<256x128xf32>
    %c0_13 = arith.constant 0 : index
    %c0_14 = arith.constant 0 : index
    %26 = vector.load %arg6[%c0_13, %c0_14] : memref<256x128xf32, #tpu.memory_space<vmem>>, vector<256x128xf32>
    tpu.vector_store %arg6[%c0_13, %c0_14], %25 {strides = array<i32>} : memref<256x128xf32, #tpu.memory_space<vmem>>, vector<256x128xf32>,
    return
  }
  func.func @transform_0(%arg0: i32) -> (i32, i32) {
    %c0_i32 = arith.constant 0 : i32
    %c0_i32_0 = arith.constant 0 : i32
    return %arg0, %c0_i32 : i32, i32
  }
  func.func @transform_1(%arg0: i32) -> (i32, i32) {
    %c0_i32 = arith.constant 0 : i32
    %c0_i32_0 = arith.constant 0 : i32
    %c0_i32_1 = arith.constant 0 : i32
    return %c0_i32, %c0_i32_0 : i32, i32
  }
  func.func @transform_2(%arg0: i32) -> (i32, i32) {
    %c0_i32 = arith.constant 0 : i32
    %c0_i32_0 = arith.constant 0 : i32
    return %arg0, %c0_i32 : i32, i32
  }
  func.func @transform_3(%arg0: i32) -> (i32, i32) {
    %c0_i32 = arith.constant 0 : i32
    %c0_i32_0 = arith.constant 0 : i32
    %c0_i32_1 = arith.constant 0 : i32
    return %c0_i32, %c0_i32_0 : i32, i32
  }
  func.func @transform_4(%arg0: i32) -> (i32, i32) {
    %c0_i32 = arith.constant 0 : i32
    %c0_i32_0 = arith.constant 0 : i32
    %c0_i32_1 = arith.constant 0 : i32
    return %c0_i32, %c0_i32_0 : i32, i32
  }
  func.func @transform_5(%arg0: i32) -> (i32, i32) {
    %c0_i32 = arith.constant 0 : i32
    %c0_i32_0 = arith.constant 0 : i32
    return %arg0, %c0_i32 : i32, i32
  }
}

</mosaic_0001>

<llo_original>
// kernel: graphsage_forward.2
$region0: #{graphsage_forward.2}
  #allocation0 [shape = 'u32[]', space=smem, size = 0x4, offset = 0x4, fixed_abs, tag = 'smem constant byte address 0x4 - core index']
  #allocation1 [shape = 'u32[144,128]{1,0:T(1,128)}', space=vmem, size = 0x12000, scoped, tag = 'internal scratch']
  %s0 = inlined_call_operand.vmem [shape: bf16[512,512], index: 0, kind: input, shape index: {}]
  %s1 = inlined_call_operand.vmem [shape: bf16[512,128], index: 1, kind: input, shape index: {}, may-alias: {1,2}]
  %s2 = inlined_call_operand.vmem [shape: bf16[512,128], index: 2, kind: input, shape index: {}, may-alias: {1,2}]
  %s3 = inlined_call_operand.vmem [shape: bf16[256,128], index: 3, kind: input, shape index: {}]
  %s4 = inlined_call_operand.vmem [shape: f32[1,128], index: 4, kind: input, shape index: {}]
  %s5 = inlined_call_operand.vmem [shape: bf16[512,128], index: 5, kind: output, shape index: {}]
  %s6 = sld [smem:[#allocation0]]
  $region53: #{graphsage_forward.2} parent=0
    _
  %s8 = ssub.s32 1, %s6
  %s9 = scalar_select 0, %s8, %s6
  loop: start=0, step=1, limit=4
  $region2: #{graphsage_forward.2} parent=0 // loop_pre_header
    _
  $region3: #{graphsage_forward.2} parent=0 // loop_header
    %s11 = sphi 0, %s15
    %p12 = scmp.ge.s32.totalorder %s11, 4
    %s21 = sphi 0, %s23
    %s24 = sphi 0, %s21
    %s25 = sphi 0, %s24
    %s41 = sphi 0, %s25
    %s45 = sphi 0, %s45
    %s47 = sphi 0, %s45
    %s48 = sphi 0, %s47
    %s62 = sphi 0, %s48
    %s68 = sphi 0, %s70
    %s71 = sphi 0, %s68
    %s72 = sphi 0, %s71
    %s88 = sphi 0, %s72
    %s92 = sphi 0, %s92
    %s94 = sphi 0, %s92
    %s95 = sphi 0, %s94
    %s109 = sphi 0, %s95
    %s113 = sphi 0, %s113
    %s115 = sphi 0, %s113
    %s116 = sphi 0, %s115
    %s130 = sphi 0, %s116
    %s136 = sphi 0, %s138
    %s139 = sphi 0, %s136
    %s140 = sphi 0, %s139
    %s156 = sphi 0, %s140
  $region4: #{graphsage_forward.2} parent=0 // loop_header_branch
    %14 = sbr.rel (%p12) target = $region8
  $region5: #{graphsage_forward.2} parent=0 // loop_body
    %s16 = ssub.s32 %s11, 1
    %s17 = ssub.s32 %s11, 2
    %s18 = sadd.s32 %s11, 1
    %s19 = ssub.s32 %s11, %s18
    %p20 = scmp.eq.s32.totalorder %s19, 0
    %s22 = sadd.s32 %s21, 1
    %s23 = scalar_select %p20, %s21, %s22
    %p26 = pneg %p20
    %p27 = scmp.eq.s32.totalorder %s11, 1
    %p28 = por %p26, %p27
    %p29 = scmp.ne.s32.totalorder %s21, %s24
    %p30 = scmp.eq.s32.totalorder %s11, 0
    %p31 = por %p29, %p30
    %p32 = scmp.ne.s32.totalorder %s21, %s24
    %p33 = scmp.eq.s32.totalorder %s16, 1
    %p34 = por %p32, %p33
    %p35 = scmp.ne.s32.totalorder %s24, %s25
    %p36 = scmp.eq.s32.totalorder %s16, 0
    %p37 = por %p35, %p36
    %p38 = scmp.ne.s32.totalorder %s24, %s25
    %p39 = scmp.eq.s32.totalorder %s17, 1
    %p40 = por %p38, %p39
    %p42 = scmp.ne.s32.totalorder %s25, %s41
    %p43 = scmp.eq.s32.totalorder %s17, 0
    %p44 = por %p42, %p43
    %s46 = sadd.s32 %s45, 1
    %p49 = scmp.eq.s32.totalorder %s11, 1
    %p50 = scmp.ne.s32.totalorder %s45, %s47
    %p51 = scmp.eq.s32.totalorder %s11, 0
    %p52 = por %p50, %p51
    %p53 = scmp.ne.s32.totalorder %s45, %s47
    %p54 = scmp.eq.s32.totalorder %s16, 1
    %p55 = por %p53, %p54
    %p56 = scmp.ne.s32.totalorder %s47, %s48
    %p57 = scmp.eq.s32.totalorder %s16, 0
    %p58 = por %p56, %p57
    %p59 = scmp.ne.s32.totalorder %s47, %s48
    %p60 = scmp.eq.s32.totalorder %s17, 1
    %p61 = por %p59, %p60
    %p63 = scmp.ne.s32.totalorder %s48, %s62
    %p64 = scmp.eq.s32.totalorder %s17, 0
    %p65 = por %p63, %p64
    %s66 = ssub.s32 %s11, %s18
    %p67 = scmp.eq.s32.totalorder %s66, 0
    %s69 = sadd.s32 %s68, 1
    %s70 = scalar_select %p67, %s68, %s69
    %p73 = pneg %p67
    %p74 = scmp.eq.s32.totalorder %s11, 1
    %p75 = por %p73, %p74
    %p76 = scmp.ne.s32.totalorder %s68, %s71
    %p77 = scmp.eq.s32.totalorder %s11, 0
    %p78 = por %p76, %p77
    %p79 = scmp.ne.s32.totalorder %s68, %s71
    %p80 = scmp.eq.s32.totalorder %s16, 1
    %p81 = por %p79, %p80
    %p82 = scmp.ne.s32.totalorder %s71, %s72
    %p83 = scmp.eq.s32.totalorder %s16, 0
    %p84 = por %p82, %p83
    %p85 = scmp.ne.s32.totalorder %s71, %s72
    %p86 = scmp.eq.s32.totalorder %s17, 1
    %p87 = por %p85, %p86
    %p89 = scmp.ne.s32.totalorder %s72, %s88
    %p90 = scmp.eq.s32.totalorder %s17, 0
    %p91 = por %p89, %p90
    %s93 = sadd.s32 %s92, 1
    %p96 = scmp.eq.s32.totalorder %s11, 1
    %p97 = scmp.ne.s32.totalorder %s92, %s94
    %p98 = scmp.eq.s32.totalorder %s11, 0
    %p99 = por %p97, %p98
    %p100 = scmp.ne.s32.totalorder %s92, %s94
    %p101 = scmp.eq.s32.totalorder %s16, 1
    %p102 = por %p100, %p101
    %p103 = scmp.ne.s32.totalorder %s94, %s95
    %p104 = scmp.eq.s32.totalorder %s16, 0
    %p105 = por %p103, %p104
    %p106 = scmp.ne.s32.totalorder %s94, %s95
    %p107 = scmp.eq.s32.totalorder %s17, 1
    %p108 = por %p106, %p107
    %p110 = scmp.ne.s32.totalorder %s95, %s109
    %p111 = scmp.eq.s32.totalorder %s17, 0
    %p112 = por %p110, %p111
    %s114 = sadd.s32 %s113, 1
    %p117 = scmp.eq.s32.totalorder %s11, 1
    %p118 = scmp.ne.s32.totalorder %s113, %s115
    %p119 = scmp.eq.s32.totalorder %s11, 0
    %p120 = por %p118, %p119
    %p121 = scmp.ne.s32.totalorder %s113, %s115
    %p122 = scmp.eq.s32.totalorder %s16, 1
    %p123 = por %p121, %p122
    %p124 = scmp.ne.s32.totalorder %s115, %s116
    %p125 = scmp.eq.s32.totalorder %s16, 0
    %p126 = por %p124, %p125
    %p127 = scmp.ne.s32.totalorder %s115, %s116
    %p128 = scmp.eq.s32.totalorder %s17, 1
    %p129 = por %p127, %p128
    %p131 = scmp.ne.s32.totalorder %s116, %s130
    %p132 = scmp.eq.s32.totalorder %s17, 0
    %p133 = por %p131, %p132
    %s134 = ssub.s32 %s11, %s18
    %p135 = scmp.eq.s32.totalorder %s134, 0
    %s137 = sadd.s32 %s136, 1
    %s138 = scalar_select %p135, %s136, %s137
    %p141 = pneg %p135
    %p142 = scmp.eq.s32.totalorder %s11, 1
    %p143 = por %p141, %p142
    %p144 = scmp.ne.s32.totalorder %s136, %s139
    %p145 = scmp.eq.s32.totalorder %s11, 0
    %p146 = por %p144, %p145
    %p147 = scmp.ne.s32.totalorder %s136, %s139
    %p148 = scmp.eq.s32.totalorder %s16, 1
    %p149 = por %p147, %p148
    %p150 = scmp.ne.s32.totalorder %s139, %s140
    %p151 = scmp.eq.s32.totalorder %s16, 0
    %p152 = por %p150, %p151
    %p153 = scmp.ne.s32.totalorder %s139, %s140
    %p154 = scmp.eq.s32.totalorder %s17, 1
    %p155 = por %p153, %p154
    %p157 = scmp.ne.s32.totalorder %s140, %s156
    %p158 = scmp.eq.s32.totalorder %s17, 0
    %p159 = por %p157, %p158
    %p160 = scmp.le.s32.totalorder 1, %s11
    %p161 = scmp.lt.s32.totalorder %s11, 3
    %p162 = pnand %p160, %p161
    %p163 = pneg %p162
    // Predicated region
    $region9: #{graphsage_forward.2} parent=5 // pred_check
      _
    $region10: #{graphsage_forward.2} parent=5 // pred_check_branch
      %165 = sbr.rel (%p162) target = $region12
    $region11: #{graphsage_forward.2} parent=5 // pred_region
      %s166 = ssub.s32 %s11, 1
      // Predicated region
      $region13: #{graphsage_forward.2} parent=11 // pred_check
        %p167 = pneg %p58
      $region14: #{graphsage_forward.2} parent=11 // pred_check_branch
        %169 = sbr.rel (%p167) target = $region16
      $region15: #{graphsage_forward.2} parent=11 // pred_region
        _
      $region16: #{graphsage_forward.2} parent=11 // pred_fallthru
        _
      // Predicated region
      $region17: #{graphsage_forward.2} parent=11 // pred_check
        %p170 = pneg %p105
      $region18: #{graphsage_forward.2} parent=11 // pred_check_branch
        %172 = sbr.rel (%p170) target = $region20
      $region19: #{graphsage_forward.2} parent=11 // pred_region
        _
      $region20: #{graphsage_forward.2} parent=11 // pred_fallthru
        _
      // Predicated region
      $region21: #{graphsage_forward.2} parent=11 // pred_check
        %p173 = pneg %p126
      $region22: #{graphsage_forward.2} parent=11 // pred_check_branch
        %175 = sbr.rel (%p173) target = $region24
      $region23: #{graphsage_forward.2} parent=11 // pred_region
        _
      $region24: #{graphsage_forward.2} parent=11 // pred_fallthru
        _
    $region12: #{graphsage_forward.2} parent=5 // pred_fallthru
      _
    %p176 = scmp.lt.s32.totalorder %s11, 2
    // Predicated region
    $region25: #{graphsage_forward.2} parent=5 // pred_check
      %p177 = pneg %p176
    $region26: #{graphsage_forward.2} parent=5 // pred_check_branch
      %179 = sbr.rel (%p177) target = $region28
    $region27: #{graphsage_forward.2} parent=5 // pred_region
      // Predicated region
      $region29: #{graphsage_forward.2} parent=27 // pred_check
        %p180 = pneg %p31
      $region30: #{graphsage_forward.2} parent=27 // pred_check_branch
        %182 = sbr.rel (%p180) target = $region32
      $region31: #{graphsage_forward.2} parent=27 // pred_region
        %s183 = smul.u32 32, %s11
        %p184 = scmp.lt.s32.totalorder %s183, 63
        %s185 = scalar_select %p184, %s183, 63
        %s186 = smul.addr %s185, 4
        %s187 = smul.addr %s186, 4
        %s188 = scalar_lea.vmem %s0, %s187
        %s189 = smul.u32 32, %s11
      $region32: #{graphsage_forward.2} parent=27 // pred_fallthru
        _
      // Predicated region
      $region33: #{graphsage_forward.2} parent=27 // pred_check
        %p190 = pneg %p78
      $region34: #{graphsage_forward.2} parent=27 // pred_check_branch
        %192 = sbr.rel (%p190) target = $region36
      $region35: #{graphsage_forward.2} parent=27 // pred_region
        %s193 = smul.u32 32, %s11
        %p194 = scmp.lt.s32.totalorder %s193, 63
        %s195 = scalar_select %p194, %s193, 63
        %s196 = smul.addr %s195, 4
        %s197 = scalar_lea.vmem %s2, %s196
        %s198 = smul.u32 32, %s11
      $region36: #{graphsage_forward.2} parent=27 // pred_fallthru
        _
    $region28: #{graphsage_forward.2} parent=5 // pred_fallthru
      _
    %p199 = scmp.le.s32.totalorder 1, %s11
    %p200 = scmp.lt.s32.totalorder %s11, 3
    %p201 = pnand %p199, %p200
    %p202 = pneg %p201
    // Predicated region
    $region37: #{graphsage_forward.2} parent=5 // pred_check
      _
    $region38: #{graphsage_forward.2} parent=5 // pred_check_branch
      %204 = sbr.rel (%p201) target = $region40
    $region39: #{graphsage_forward.2} parent=5 // pred_region
      %s205 = ssub.s32 %s11, 1
      %s206 = smul.u32 32, %s16
      %p207 = scmp.lt.s32.totalorder %s206, 63
      %s208 = scalar_select %p207, %s206, 63
      %s209 = smul.addr %s208, 4
      %s210 = smul.addr %s209, 4
      %s211 = scalar_lea.vmem %s0, %s210
      %p212 = pneg %p37
      %p213 = pneg %p34
      %p214 = pneg %p58
      %p215 = pneg %p55
      %s216 = smul.u32 32, %s16
      %p217 = scmp.lt.s32.totalorder %s216, 63
      %s218 = scalar_select %p217, %s216, 63
      %s219 = smul.addr %s218, 4
      %s220 = scalar_lea.vmem %s2, %s219
      %p221 = pneg %p84
      %p222 = pneg %p81
      %p223 = pneg %p105
      %p224 = pneg %p102
      %p225 = pneg %p126
      %p226 = pneg %p123
      %p227 = pneg %p152
      %p228 = pneg %p149
      %s229 = smul.u32 32, %s16
      %p230 = scmp.lt.s32.totalorder %s229, 63
      %s231 = scalar_select %p230, %s229, 63
      %s232 = smul.addr %s231, 4
      %s233 = scalar_lea.vmem %s5, %s232
      %s234 = smul.u32 32, %s16
      %p235 = scmp.lt.s32.totalorder %s234, 63
      %s236 = scalar_select %p235, %s234, 63
      %s237 = smul.addr %s236, 4
      %s238 = smul.addr %s237, 4
      %s239 = scalar_lea.vmem %s0, %s238
      %s240 = smul.u32 32, %s16
      %s241 = smul.u32 32, %s16
      %p242 = scmp.lt.s32.totalorder %s241, 63
      %s243 = scalar_select %p242, %s241, 63
      %s244 = smul.addr %s243, 4
      %s245 = scalar_lea.vmem %s2, %s244
      %s246 = smul.u32 32, %s16
      %s247 = smul.u32 32, %s16
      %p248 = scmp.lt.s32.totalorder %s247, 63
      %s249 = scalar_select %p248, %s247, 63
      %s250 = smul.addr %s249, 4
      %s251 = scalar_lea.vmem %s5, %s250
      %s252 = smul.u32 32, %s16
      %v254 = vld [vmem:[%s239] sm:$0xff]
      %v255 = vld [vmem:[%s239 + $0x8] sm:$0xff]
      %v256 = vld [vmem:[%s239 + $0x10] sm:$0xff]
      %v257 = vld [vmem:[%s239 + $0x18] sm:$0xff]
      %v258 = vld [vmem:[%s239 + $0x20] sm:$0xff]
      %v259 = vld [vmem:[%s239 + $0x28] sm:$0xff]
      %v260 = vld [vmem:[%s239 + $0x30] sm:$0xff]
      %v261 = vld [vmem:[%s239 + $0x38] sm:$0xff]
      %v262 = vld [vmem:[%s239 + $0x40] sm:$0xff]
      %v263 = vld [vmem:[%s239 + $0x48] sm:$0xff]
      %v264 = vld [vmem:[%s239 + $0x50] sm:$0xff]
      %v265 = vld [vmem:[%s239 + $0x58] sm:$0xff]
      %v266 = vld [vmem:[%s239 + $0x60] sm:$0xff]
      %v267 = vld [vmem:[%s239 + $0x68] sm:$0xff]
      %v268 = vld [vmem:[%s239 + $0x70] sm:$0xff]
      %v269 = vld [vmem:[%s239 + $0x78] sm:$0xff]
      %v270 = vld [vmem:[%s239 + $0x80] sm:$0xff]
      %v271 = vld [vmem:[%s239 + $0x88] sm:$0xff]
      %v272 = vld [vmem:[%s239 + $0x90] sm:$0xff]
      %v273 = vld [vmem:[%s239 + $0x98] sm:$0xff]
      %v274 = vld [vmem:[%s239 + $0xa0] sm:$0xff]
      %v275 = vld [vmem:[%s239 + $0xa8] sm:$0xff]
      %v276 = vld [vmem:[%s239 + $0xb0] sm:$0xff]
      %v277 = vld [vmem:[%s239 + $0xb8] sm:$0xff]
      %v278 = vld [vmem:[%s239 + $0xc0] sm:$0xff]
      %v279 = vld [vmem:[%s239 + $0xc8] sm:$0xff]
      %v280 = vld [vmem:[%s239 + $0xd0] sm:$0xff]
      %v281 = vld [vmem:[%s239 + $0xd8] sm:$0xff]
      %v282 = vld [vmem:[%s239 + $0xe0] sm:$0xff]
      %v283 = vld [vmem:[%s239 + $0xe8] sm:$0xff]
      %v284 = vld [vmem:[%s239 + $0xf0] sm:$0xff]
      %v285 = vld [vmem:[%s239 + $0xf8] sm:$0xff]
      %v286 = vld [vmem:[%s239 + $0x100] sm:$0xff]
      %v287 = vld [vmem:[%s239 + $0x108] sm:$0xff]
      %v288 = vld [vmem:[%s239 + $0x110] sm:$0xff]
      %v289 = vld [vmem:[%s239 + $0x118] sm:$0xff]
      %v290 = vld [vmem:[%s239 + $0x120] sm:$0xff]
      %v291 = vld [vmem:[%s239 + $0x128] sm:$0xff]
      %v292 = vld [vmem:[%s239 + $0x130] sm:$0xff]
      %v293 = vld [vmem:[%s239 + $0x138] sm:$0xff]
      %v294 = vld [vmem:[%s239 + $0x140] sm:$0xff]
      %v295 = vld [vmem:[%s239 + $0x148] sm:$0xff]
      %v296 = vld [vmem:[%s239 + $0x150] sm:$0xff]
      %v297 = vld [vmem:[%s239 + $0x158] sm:$0xff]
      %v298 = vld [vmem:[%s239 + $0x160] sm:$0xff]
      %v299 = vld [vmem:[%s239 + $0x168] sm:$0xff]
      %v300 = vld [vmem:[%s239 + $0x170] sm:$0xff]
      %v301 = vld [vmem:[%s239 + $0x178] sm:$0xff]
      %v302 = vld [vmem:[%s239 + $0x180] sm:$0xff]
      %v303 = vld [vmem:[%s239 + $0x188] sm:$0xff]
      %v304 = vld [vmem:[%s239 + $0x190] sm:$0xff]
      %v305 = vld [vmem:[%s239 + $0x198] sm:$0xff]
      %v306 = vld [vmem:[%s239 + $0x1a0] sm:$0xff]
      %v307 = vld [vmem:[%s239 + $0x1a8] sm:$0xff]
      %v308 = vld [vmem:[%s239 + $0x1b0] sm:$0xff]
      %v309 = vld [vmem:[%s239 + $0x1b8] sm:$0xff]
      %v310 = vld [vmem:[%s239 + $0x1c0] sm:$0xff]
      %v311 = vld [vmem:[%s239 + $0x1c8] sm:$0xff]
      %v312 = vld [vmem:[%s239 + $0x1d0] sm:$0xff]
      %v313 = vld [vmem:[%s239 + $0x1d8] sm:$0xff]
      %v314 = vld [vmem:[%s239 + $0x1e0] sm:$0xff]
      %v315 = vld [vmem:[%s239 + $0x1e8] sm:$0xff]
      %v316 = vld [vmem:[%s239 + $0x1f0] sm:$0xff]
      %v317 = vld [vmem:[%s239 + $0x1f8] sm:$0xff]
      %v318 = vld [vmem:[%s1] sm:$0xf]
      %v319 = vld [vmem:[%s1 + $0x4] sm:$0xf]
      %v320 = vld [vmem:[%s1 + $0x8] sm:$0xf]
      %v321 = vld [vmem:[%s1 + $0xc] sm:$0xf]
      %v322 = vld [vmem:[%s1 + $0x10] sm:$0xf]
      %v323 = vld [vmem:[%s1 + $0x14] sm:$0xf]
      %v324 = vld [vmem:[%s1 + $0x18] sm:$0xf]
      %v325 = vld [vmem:[%s1 + $0x1c] sm:$0xf]
      %v326 = vld [vmem:[%s1 + $0x20] sm:$0xf]
      %v327 = vld [vmem:[%s1 + $0x24] sm:$0xf]
      %v328 = vld [vmem:[%s1 + $0x28] sm:$0xf]
      %v329 = vld [vmem:[%s1 + $0x2c] sm:$0xf]
      %v330 = vld [vmem:[%s1 + $0x30] sm:$0xf]
      %v331 = vld [vmem:[%s1 + $0x34] sm:$0xf]
      %v332 = vld [vmem:[%s1 + $0x38] sm:$0xf]
      %v333 = vld [vmem:[%s1 + $0x3c] sm:$0xf]
      %v334 = vld [vmem:[%s1 + $0x40] sm:$0xf]
      %v335 = vld [vmem:[%s1 + $0x44] sm:$0xf]
      %v336 = vld [vmem:[%s1 + $0x48] sm:$0xf]
      %v337 = vld [vmem:[%s1 + $0x4c] sm:$0xf]
      %v338 = vld [vmem:[%s1 + $0x50] sm:$0xf]
      %v339 = vld [vmem:[%s1 + $0x54] sm:$0xf]
      %v340 = vld [vmem:[%s1 + $0x58] sm:$0xf]
      %v341 = vld [vmem:[%s1 + $0x5c] sm:$0xf]
      %v342 = vld [vmem:[%s1 + $0x60] sm:$0xf]
      %v343 = vld [vmem:[%s1 + $0x64] sm:$0xf]
      %v344 = vld [vmem:[%s1 + $0x68] sm:$0xf]
      %v345 = vld [vmem:[%s1 + $0x6c] sm:$0xf]
      %v346 = vld [vmem:[%s1 + $0x70] sm:$0xf]
      %v347 = vld [vmem:[%s1 + $0x74] sm:$0xf]
      %v348 = vld [vmem:[%s1 + $0x78] sm:$0xf]
      %v349 = vld [vmem:[%s1 + $0x7c] sm:$0xf]
      %v350 = vld [vmem:[%s1 + $0x80] sm:$0xf]
      %v351 = vld [vmem:[%s1 + $0x84] sm:$0xf]
      %v352 = vld [vmem:[%s1 + $0x88] sm:$0xf]
      %v353 = vld [vmem:[%s1 + $0x8c] sm:$0xf]
      %v354 = vld [vmem:[%s1 + $0x90] sm:$0xf]
      %v355 = vld [vmem:[%s1 + $0x94] sm:$0xf]
      %v356 = vld [vmem:[%s1 + $0x98] sm:$0xf]
      %v357 = vld [vmem:[%s1 + $0x9c] sm:$0xf]
      %v358 = vld [vmem:[%s1 + $0xa0] sm:$0xf]
      %v359 = vld [vmem:[%s1 + $0xa4] sm:$0xf]
      %v360 = vld [vmem:[%s1 + $0xa8] sm:$0xf]
      %v361 = vld [vmem:[%s1 + $0xac] sm:$0xf]
      %v362 = vld [vmem:[%s1 + $0xb0] sm:$0xf]
      %v363 = vld [vmem:[%s1 + $0xb4] sm:$0xf]
      %v364 = vld [vmem:[%s1 + $0xb8] sm:$0xf]
      %v365 = vld [vmem:[%s1 + $0xbc] sm:$0xf]
      %v366 = vld [vmem:[%s1 + $0xc0] sm:$0xf]
      %v367 = vld [vmem:[%s1 + $0xc4] sm:$0xf]
      %v368 = vld [vmem:[%s1 + $0xc8] sm:$0xf]
      %v369 = vld [vmem:[%s1 + $0xcc] sm:$0xf]
      %v370 = vld [vmem:[%s1 + $0xd0] sm:$0xf]
      %v371 = vld [vmem:[%s1 + $0xd4] sm:$0xf]
      %v372 = vld [vmem:[%s1 + $0xd8] sm:$0xf]
      %v373 = vld [vmem:[%s1 + $0xdc] sm:$0xf]
      %v374 = vld [vmem:[%s1 + $0xe0] sm:$0xf]
      %v375 = vld [vmem:[%s1 + $0xe4] sm:$0xf]
      %v376 = vld [vmem:[%s1 + $0xe8] sm:$0xf]
      %v377 = vld [vmem:[%s1 + $0xec] sm:$0xf]
      %v378 = vld [vmem:[%s1 + $0xf0] sm:$0xf]
      %v379 = vld [vmem:[%s1 + $0xf4] sm:$0xf]
      %v380 = vld [vmem:[%s1 + $0xf8] sm:$0xf]
      %v381 = vld [vmem:[%s1 + $0xfc] sm:$0xf]
      %v446 = vunpack.c.l.b16 %v254
      %v447 = vunpack.c.h.b16 %v254
      %v448 = vunpack.c.l.b16 %v255
      %v449 = vunpack.c.h.b16 %v255
      %v450 = vunpack.c.l.b16 %v256
      %v451 = vunpack.c.h.b16 %v256
      %v452 = vunpack.c.l.b16 %v257
      %v453 = vunpack.c.h.b16 %v257
      %v454 = vunpack.c.l.b16 %v258
      %v455 = vunpack.c.h.b16 %v258
      %v456 = vunpack.c.l.b16 %v259
      %v457 = vunpack.c.h.b16 %v259
      %v458 = vunpack.c.l.b16 %v260
      %v459 = vunpack.c.h.b16 %v260
      %v460 = vunpack.c.l.b16 %v261
      %v461 = vunpack.c.h.b16 %v261
      %v462 = vunpack.c.l.b16 %v262
      %v463 = vunpack.c.h.b16 %v262
      %v464 = vunpack.c.l.b16 %v263
      %v465 = vunpack.c.h.b16 %v263
      %v466 = vunpack.c.l.b16 %v264
      %v467 = vunpack.c.h.b16 %v264
      %v468 = vunpack.c.l.b16 %v265
      %v469 = vunpack.c.h.b16 %v265
      %v470 = vunpack.c.l.b16 %v266
      %v471 = vunpack.c.h.b16 %v266
      %v472 = vunpack.c.l.b16 %v267
      %v473 = vunpack.c.h.b16 %v267
      %v474 = vunpack.c.l.b16 %v268
      %v475 = vunpack.c.h.b16 %v268
      %v476 = vunpack.c.l.b16 %v269
      %v477 = vunpack.c.h.b16 %v269
      %v478 = vunpack.c.l.b16 %v270
      %v479 = vunpack.c.h.b16 %v270
      %v480 = vunpack.c.l.b16 %v271
      %v481 = vunpack.c.h.b16 %v271
      %v482 = vunpack.c.l.b16 %v272
      %v483 = vunpack.c.h.b16 %v272
      %v484 = vunpack.c.l.b16 %v273
      %v485 = vunpack.c.h.b16 %v273
      %v486 = vunpack.c.l.b16 %v274
      %v487 = vunpack.c.h.b16 %v274
      %v488 = vunpack.c.l.b16 %v275
      %v489 = vunpack.c.h.b16 %v275
      %v490 = vunpack.c.l.b16 %v276
      %v491 = vunpack.c.h.b16 %v276
      %v492 = vunpack.c.l.b16 %v277
      %v493 = vunpack.c.h.b16 %v277
      %v494 = vunpack.c.l.b16 %v278
      %v495 = vunpack.c.h.b16 %v278
      %v496 = vunpack.c.l.b16 %v279
      %v497 = vunpack.c.h.b16 %v279
      %v498 = vunpack.c.l.b16 %v280
      %v499 = vunpack.c.h.b16 %v280
      %v500 = vunpack.c.l.b16 %v281
      %v501 = vunpack.c.h.b16 %v281
      %v502 = vunpack.c.l.b16 %v282
      %v503 = vunpack.c.h.b16 %v282
      %v504 = vunpack.c.l.b16 %v283
      %v505 = vunpack.c.h.b16 %v283
      %v506 = vunpack.c.l.b16 %v284
      %v507 = vunpack.c.h.b16 %v284
      %v508 = vunpack.c.l.b16 %v285
      %v509 = vunpack.c.h.b16 %v285
      %v510 = vunpack.c.l.b16 %v286
      %v511 = vunpack.c.h.b16 %v286
      %v512 = vunpack.c.l.b16 %v287
      %v513 = vunpack.c.h.b16 %v287
      %v514 = vunpack.c.l.b16 %v288
      %v515 = vunpack.c.h.b16 %v288
      %v516 = vunpack.c.l.b16 %v289
      %v517 = vunpack.c.h.b16 %v289
      %v518 = vunpack.c.l.b16 %v290
      %v519 = vunpack.c.h.b16 %v290
      %v520 = vunpack.c.l.b16 %v291
      %v521 = vunpack.c.h.b16 %v291
      %v522 = vunpack.c.l.b16 %v292
      %v523 = vunpack.c.h.b16 %v292
      %v524 = vunpack.c.l.b16 %v293
      %v525 = vunpack.c.h.b16 %v293
      %v526 = vunpack.c.l.b16 %v294
      %v527 = vunpack.c.h.b16 %v294
      %v528 = vunpack.c.l.b16 %v295
      %v529 = vunpack.c.h.b16 %v295
      %v530 = vunpack.c.l.b16 %v296
      %v531 = vunpack.c.h.b16 %v296
      %v532 = vunpack.c.l.b16 %v297
      %v533 = vunpack.c.h.b16 %v297
      %v534 = vunpack.c.l.b16 %v298
      %v535 = vunpack.c.h.b16 %v298
      %v536 = vunpack.c.l.b16 %v299
      %v537 = vunpack.c.h.b16 %v299
      %v538 = vunpack.c.l.b16 %v300
      %v539 = vunpack.c.h.b16 %v300
      %v540 = vunpack.c.l.b16 %v301
      %v541 = vunpack.c.h.b16 %v301
      %v542 = vunpack.c.l.b16 %v302
      %v543 = vunpack.c.h.b16 %v302
      %v544 = vunpack.c.l.b16 %v303
      %v545 = vunpack.c.h.b16 %v303
      %v546 = vunpack.c.l.b16 %v304
      %v547 = vunpack.c.h.b16 %v304
      %v548 = vunpack.c.l.b16 %v305
      %v549 = vunpack.c.h.b16 %v305
      %v550 = vunpack.c.l.b16 %v306
      %v551 = vunpack.c.h.b16 %v306
      %v552 = vunpack.c.l.b16 %v307
      %v553 = vunpack.c.h.b16 %v307
      %v554 = vunpack.c.l.b16 %v308
      %v555 = vunpack.c.h.b16 %v308
      %v556 = vunpack.c.l.b16 %v309
      %v557 = vunpack.c.h.b16 %v309
      %v558 = vunpack.c.l.b16 %v310
      %v559 = vunpack.c.h.b16 %v310
      %v560 = vunpack.c.l.b16 %v311
      %v561 = vunpack.c.h.b16 %v311
      %v562 = vunpack.c.l.b16 %v312
      %v563 = vunpack.c.h.b16 %v312
      %v564 = vunpack.c.l.b16 %v313
      %v565 = vunpack.c.h.b16 %v313
      %v566 = vunpack.c.l.b16 %v314
      %v567 = vunpack.c.h.b16 %v314
      %v568 = vunpack.c.l.b16 %v315
      %v569 = vunpack.c.h.b16 %v315
      %v570 = vunpack.c.l.b16 %v316
      %v571 = vunpack.c.h.b16 %v316
      %v572 = vunpack.c.l.b16 %v317
      %v573 = vunpack.c.h.b16 %v317
      %v574 = vpack.c.b16 %v450, %v446
      %v575 = vpack.c.b16 %v451, %v447
      %v576 = vpack.c.b16 %v452, %v448
      %v577 = vpack.c.b16 %v453, %v449
      %v578 = vpack.c.b16 %v458, %v454
      %v579 = vpack.c.b16 %v459, %v455
      %v580 = vpack.c.b16 %v460, %v456
      %v581 = vpack.c.b16 %v461, %v457
      %v582 = vpack.c.b16 %v466, %v462
      %v583 = vpack.c.b16 %v467, %v463
      %v584 = vpack.c.b16 %v468, %v464
      %v585 = vpack.c.b16 %v469, %v465
      %v586 = vpack.c.b16 %v474, %v470
      %v587 = vpack.c.b16 %v475, %v471
      %v588 = vpack.c.b16 %v476, %v472
      %v589 = vpack.c.b16 %v477, %v473
      %v590 = vpack.c.b16 %v482, %v478
      %v591 = vpack.c.b16 %v483, %v479
      %v592 = vpack.c.b16 %v484, %v480
      %v593 = vpack.c.b16 %v485, %v481
      %v594 = vpack.c.b16 %v490, %v486
      %v595 = vpack.c.b16 %v491, %v487
      %v596 = vpack.c.b16 %v492, %v488
      %v597 = vpack.c.b16 %v493, %v489
      %v598 = vpack.c.b16 %v498, %v494
      %v599 = vpack.c.b16 %v499, %v495
      %v600 = vpack.c.b16 %v500, %v496
      %v601 = vpack.c.b16 %v501, %v497
      %v602 = vpack.c.b16 %v506, %v502
      %v603 = vpack.c.b16 %v507, %v503
      %v604 = vpack.c.b16 %v508, %v504
      %v605 = vpack.c.b16 %v509, %v505
      %v606 = vpack.c.b16 %v514, %v510
      %v607 = vpack.c.b16 %v515, %v511
      %v608 = vpack.c.b16 %v516, %v512
      %v609 = vpack.c.b16 %v517, %v513
      %v610 = vpack.c.b16 %v522, %v518
      %v611 = vpack.c.b16 %v523, %v519
      %v612 = vpack.c.b16 %v524, %v520
      %v613 = vpack.c.b16 %v525, %v521
      %v614 = vpack.c.b16 %v530, %v526
      %v615 = vpack.c.b16 %v531, %v527
      %v616 = vpack.c.b16 %v532, %v528
      %v617 = vpack.c.b16 %v533, %v529
      %v618 = vpack.c.b16 %v538, %v534
      %v619 = vpack.c.b16 %v539, %v535
      %v620 = vpack.c.b16 %v540, %v536
      %v621 = vpack.c.b16 %v541, %v537
      %v622 = vpack.c.b16 %v546, %v542
      %v623 = vpack.c.b16 %v547, %v543
      %v624 = vpack.c.b16 %v548, %v544
      %v625 = vpack.c.b16 %v549, %v545
      %v626 = vpack.c.b16 %v554, %v550
      %v627 = vpack.c.b16 %v555, %v551
      %v628 = vpack.c.b16 %v556, %v552
      %v629 = vpack.c.b16 %v557, %v553
      %v630 = vpack.c.b16 %v562, %v558
      %v631 = vpack.c.b16 %v563, %v559
      %v632 = vpack.c.b16 %v564, %v560
      %v633 = vpack.c.b16 %v565, %v561
      %v634 = vpack.c.b16 %v570, %v566
      %v635 = vpack.c.b16 %v571, %v567
      %v636 = vpack.c.b16 %v572, %v568
      %v637 = vpack.c.b16 %v573, %v569
      %v766 = vunpack.c.l.b16 %v318
      %v767 = vunpack.c.l.b16 %v319
      %v768 = vunpack.c.l.b16 %v320
      %v769 = vunpack.c.l.b16 %v321
      %v770 = vunpack.c.l.b16 %v322
      %v771 = vunpack.c.l.b16 %v323
      %v772 = vunpack.c.l.b16 %v324
      %v773 = vunpack.c.l.b16 %v325
      %v774 = vunpack.c.l.b16 %v326
      %v775 = vunpack.c.l.b16 %v327
      %v776 = vunpack.c.l.b16 %v328
      %v777 = vunpack.c.l.b16 %v329
      %v778 = vunpack.c.l.b16 %v330
      %v779 = vunpack.c.l.b16 %v331
      %v780 = vunpack.c.l.b16 %v332
      %v781 = vunpack.c.l.b16 %v333
      %v782 = vunpack.c.l.b16 %v334
      %v783 = vunpack.c.l.b16 %v335
      %v784 = vunpack.c.l.b16 %v336
      %v785 = vunpack.c.l.b16 %v337
      %v786 = vunpack.c.l.b16 %v338
      %v787 = vunpack.c.l.b16 %v339
      %v788 = vunpack.c.l.b16 %v340
      %v789 = vunpack.c.l.b16 %v341
      %v790 = vunpack.c.l.b16 %v342
      %v791 = vunpack.c.l.b16 %v343
      %v792 = vunpack.c.l.b16 %v344
      %v793 = vunpack.c.l.b16 %v345
      %v794 = vunpack.c.l.b16 %v346
      %v795 = vunpack.c.l.b16 %v347
      %v796 = vunpack.c.l.b16 %v348
      %v797 = vunpack.c.l.b16 %v349
      %v798 = vunpack.c.l.b16 %v350
      %v799 = vunpack.c.l.b16 %v351
      %v800 = vunpack.c.l.b16 %v352
      %v801 = vunpack.c.l.b16 %v353
      %v802 = vunpack.c.l.b16 %v354
      %v803 = vunpack.c.l.b16 %v355
      %v804 = vunpack.c.l.b16 %v356
      %v805 = vunpack.c.l.b16 %v357
      %v806 = vunpack.c.l.b16 %v358
      %v807 = vunpack.c.l.b16 %v359
      %v808 = vunpack.c.l.b16 %v360
      %v809 = vunpack.c.l.b16 %v361
      %v810 = vunpack.c.l.b16 %v362
      %v811 = vunpack.c.l.b16 %v363
      %v812 = vunpack.c.l.b16 %v364
      %v813 = vunpack.c.l.b16 %v365
      %v814 = vunpack.c.l.b16 %v366
      %v815 = vunpack.c.l.b16 %v367
      %v816 = vunpack.c.l.b16 %v368
      %v817 = vunpack.c.l.b16 %v369
      %v818 = vunpack.c.l.b16 %v370
      %v819 = vunpack.c.l.b16 %v371
      %v820 = vunpack.c.l.b16 %v372
      %v821 = vunpack.c.l.b16 %v373
      %v822 = vunpack.c.l.b16 %v374
      %v823 = vunpack.c.l.b16 %v375
      %v824 = vunpack.c.l.b16 %v376
      %v825 = vunpack.c.l.b16 %v377
      %v826 = vunpack.c.l.b16 %v378
      %v827 = vunpack.c.l.b16 %v379
      %v828 = vunpack.c.l.b16 %v380
      %v829 = vunpack.c.l.b16 %v381
      %v830 = vpack.c.b16 %v767, %v766
      %v831 = vpack.c.b16 %v769, %v768
      %v832 = vpack.c.b16 %v771, %v770
      %v833 = vpack.c.b16 %v773, %v772
      %v834 = vpack.c.b16 %v775, %v774
      %v835 = vpack.c.b16 %v777, %v776
      %v836 = vpack.c.b16 %v779, %v778
      %v837 = vpack.c.b16 %v781, %v780
      %v838 = vpack.c.b16 %v783, %v782
      %v839 = vpack.c.b16 %v785, %v784
      %v840 = vpack.c.b16 %v787, %v786
      %v841 = vpack.c.b16 %v789, %v788
      %v842 = vpack.c.b16 %v791, %v790
      %v843 = vpack.c.b16 %v793, %v792
      %v844 = vpack.c.b16 %v795, %v794
      %v845 = vpack.c.b16 %v797, %v796
      %v846 = vpack.c.b16 %v799, %v798
      %v847 = vpack.c.b16 %v801, %v800
      %v848 = vpack.c.b16 %v803, %v802
      %v849 = vpack.c.b16 %v805, %v804
      %v850 = vpack.c.b16 %v807, %v806
      %v851 = vpack.c.b16 %v809, %v808
      %v852 = vpack.c.b16 %v811, %v810
      %v853 = vpack.c.b16 %v813, %v812
      %v854 = vpack.c.b16 %v815, %v814
      %v855 = vpack.c.b16 %v817, %v816
      %v856 = vpack.c.b16 %v819, %v818
      %v857 = vpack.c.b16 %v821, %v820
      %v858 = vpack.c.b16 %v823, %v822
      %v859 = vpack.c.b16 %v825, %v824
      %v860 = vpack.c.b16 %v827, %v826
      %v861 = vpack.c.b16 %v829, %v828
      %894 = vmatprep.subr.bf16.mxu0 0
      %895 = vmatpush1.bf16.msra.mxu0 %v830
      %896 = vmatprep.subr.bf16.mxu0 0
      %897 = vmatpush1.bf16.msra.mxu0 %v831
      %898 = vmatprep.subr.bf16.mxu0 0
      %899 = vmatpush1.bf16.msra.mxu0 %v832
      %900 = vmatprep.subr.bf16.mxu0 0
      %901 = vmatpush1.bf16.msra.mxu0 %v833
      %902 = vmatprep.subr.bf16.mxu0 0
      %903 = vmatpush1.bf16.msra.mxu0 %v834
      %904 = vmatprep.subr.bf16.mxu0 0
      %905 = vmatpush1.bf16.msra.mxu0 %v835
      %906 = vmatprep.subr.bf16.mxu0 0
      %907 = vmatpush1.bf16.msra.mxu0 %v836
      %908 = vmatprep.subr.bf16.mxu0 0
      %909 = vmatpush1.bf16.msra.mxu0 %v837
      %910 = vmatprep.subr.bf16.mxu0 0
      %911 = vmatpush1.bf16.msra.mxu0 %v838
      %912 = vmatprep.subr.bf16.mxu0 0
      %913 = vmatpush1.bf16.msra.mxu0 %v839
      %914 = vmatprep.subr.bf16.mxu0 0
      %915 = vmatpush1.bf16.msra.mxu0 %v840
      %916 = vmatprep.subr.bf16.mxu0 0
      %917 = vmatpush1.bf16.msra.mxu0 %v841
      %918 = vmatprep.subr.bf16.mxu0 0
      %919 = vmatpush1.bf16.msra.mxu0 %v842
      %920 = vmatprep.subr.bf16.mxu0 0
      %921 = vmatpush1.bf16.msra.mxu0 %v843
      %922 = vmatprep.subr.bf16.mxu0 0
      %923 = vmatpush1.bf16.msra.mxu0 %v844
      %924 = vmatprep.subr.bf16.mxu0 0
      %925 = vmatpush1.bf16.msra.mxu0 %v845
      %926 = vmatprep.mubr.bf16.mxu0 %v575
      %927 = vmatmul.mubr.bf16.gmra.mrb[0].mxu0 %v574
      %v928 = vpop.f32.mrb[0].mxu0
      %v929 = vadd.f32 0.0, %v928
      %v930 = vpop.f32.mrb[0].mxu0
      %v931 = vpop.f32.mrb[0].mxu0
      %v932 = vadd.f32 0.0, %v931
      %v933 = vpop.f32.mrb[0].mxu0
      %934 = vmatprep.mubr.bf16.mxu0 %v579
      %935 = vmatmul.mubr.bf16.gmra.mrb[0].mxu0 %v578
      %v936 = vpop.f32.mrb[0].mxu0
      %v937 = vadd.f32 0.0, %v936
      %v938 = vpop.f32.mrb[0].mxu0
      %v939 = vpop.f32.mrb[0].mxu0
      %v940 = vadd.f32 0.0, %v939
      %v941 = vpop.f32.mrb[0].mxu0
      %942 = vmatprep.mubr.bf16.mxu0 %v583
      %943 = vmatmul.mubr.bf16.gmra.mrb[0].mxu0 %v582
      %v944 = vpop.f32.mrb[0].mxu0
      %v945 = vadd.f32 0.0, %v944
      %v946 = vpop.f32.mrb[0].mxu0
      %v947 = vpop.f32.mrb[0].mxu0
      %v948 = vadd.f32 0.0, %v947
      %v949 = vpop.f32.mrb[0].mxu0
      %950 = vmatprep.mubr.bf16.mxu0 %v587
      %951 = vmatmul.mubr.bf16.gmra.mrb[0].mxu0 %v586
      %v952 = vpop.f32.mrb[0].mxu0
      %v953 = vadd.f32 0.0, %v952
      %v954 = vpop.f32.mrb[0].mxu0
      %v955 = vpop.f32.mrb[0].mxu0
      %v956 = vadd.f32 0.0, %v955
      %v957 = vpop.f32.mrb[0].mxu0
      %958 = vmatprep.mubr.bf16.mxu0 %v591
      %959 = vmatmul.mubr.bf16.gmra.mrb[0].mxu0 %v590
      %v960 = vpop.f32.mrb[0].mxu0
      %v961 = vadd.f32 0.0, %v960
      %v962 = vpop.f32.mrb[0].mxu0
      %v963 = vpop.f32.mrb[0].mxu0
      %v964 = vadd.f32 0.0, %v963
      %v965 = vpop.f32.mrb[0].mxu0
      %966 = vmatprep.mubr.bf16.mxu0 %v595
      %967 = vmatmul.mubr.bf16.gmra.mrb[0].mxu0 %v594
      %v968 = vpop.f32.mrb[0].mxu0
      %v969 = vadd.f32 0.0, %v968
      %v970 = vpop.f32.mrb[0].mxu0
      %v971 = vpop.f32.mrb[0].mxu0
      %v972 = vadd.f32 0.0, %v971
      %v973 = vpop.f32.mrb[0].mxu0
      %974 = vmatprep.mubr.bf16.mxu0 %v599
      %975 = vmatmul.mubr.bf16.gmra.mrb[0].mxu0 %v598
      %v976 = vpop.f32.mrb[0].mxu0
      %v977 = vadd.f32 0.0, %v976
      %v978 = vpop.f32.mrb[0].mxu0
      %v979 = vpop.f32.mrb[0].mxu0
      %v980 = vadd.f32 0.0, %v979
      %v981 = vpop.f32.mrb[0].mxu0
      %982 = vmatprep.mubr.bf16.mxu0 %v603
      %983 = vmatmul.mubr.bf16.gmra.mrb[0].mxu0 %v602
      %v984 = vpop.f32.mrb[0].mxu0
      %v985 = vadd.f32 0.0, %v984
      %v986 = vpop.f32.mrb[0].mxu0
      %v987 = vpop.f32.mrb[0].mxu0
      %v988 = vadd.f32 0.0, %v987
      %v989 = vpop.f32.mrb[0].mxu0
      %990 = vmatprep.mubr.bf16.mxu0 %v607
      %991 = vmatmul.mubr.bf16.gmra.mrb[0].mxu0 %v606
      %v992 = vpop.f32.mrb[0].mxu0
      %v993 = vadd.f32 0.0, %v992
      %v994 = vpop.f32.mrb[0].mxu0
      %v995 = vpop.f32.mrb[0].mxu0
      %v996 = vadd.f32 0.0, %v995
      %v997 = vpop.f32.mrb[0].mxu0
      %998 = vmatprep.mubr.bf16.mxu0 %v611
      %999 = vmatmul.mubr.bf16.gmra.mrb[0].mxu0 %v610
      %v1000 = vpop.f32.mrb[0].mxu0
      %v1001 = vadd.f32 0.0, %v1000
      %v1002 = vpop.f32.mrb[0].mxu0
      %v1003 = vpop.f32.mrb[0].mxu0
      %v1004 = vadd.f32 0.0, %v1003
      %v1005 = vpop.f32.mrb[0].mxu0
      %1006 = vmatprep.mubr.bf16.mxu0 %v615
      %1007 = vmatmul.mubr.bf16.gmra.mrb[0].mxu0 %v614
      %v1008 = vpop.f32.mrb[0].mxu0
      %v1009 = vadd.f32 0.0, %v1008
      %v1010 = vpop.f32.mrb[0].mxu0
      %v1011 = vpop.f32.mrb[0].mxu0
      %v1012 = vadd.f32 0.0, %v1011
      %v1013 = vpop.f32.mrb[0].mxu0
      %1014 = vmatprep.mubr.bf16.mxu0 %v619
      %1015 = vmatmul.mubr.bf16.gmra.mrb[0].mxu0 %v618
      %v1016 = vpop.f32.mrb[0].mxu0
      %v1017 = vadd.f32 0.0, %v1016
      %v1018 = vpop.f32.mrb[0].mxu0
      %v1019 = vpop.f32.mrb[0].mxu0
      %v1020 = vadd.f32 0.0, %v1019
      %v1021 = vpop.f32.mrb[0].mxu0
      %1022 = vmatprep.mubr.bf16.mxu0 %v623
      %1023 = vmatmul.mubr.bf16.gmra.mrb[0].mxu0 %v622
      %v1024 = vpop.f32.mrb[0].mxu0
      %v1025 = vadd.f32 0.0, %v1024
      %v1026 = vpop.f32.mrb[0].mxu0
      %v1027 = vpop.f32.mrb[0].mxu0
      %v1028 = vadd.f32 0.0, %v1027
      %v1029 = vpop.f32.mrb[0].mxu0
      %1030 = vmatprep.mubr.bf16.mxu0 %v627
      %1031 = vmatmul.mubr.bf16.gmra.mrb[0].mxu0 %v626
      %v1032 = vpop.f32.mrb[0].mxu0
      %v1033 = vadd.f32 0.0, %v1032
      %v1034 = vpop.f32.mrb[0].mxu0
      %v1035 = vpop.f32.mrb[0].mxu0
      %v1036 = vadd.f32 0.0, %v1035
      %v1037 = vpop.f32.mrb[0].mxu0
      %1038 = vmatprep.mubr.bf16.mxu0 %v631
      %1039 = vmatmul.mubr.bf16.gmra.mrb[0].mxu0 %v630
      %v1040 = vpop.f32.mrb[0].mxu0
      %v1041 = vadd.f32 0.0, %v1040
      %v1042 = vpop.f32.mrb[0].mxu0
      %v1043 = vpop.f32.mrb[0].mxu0
      %v1044 = vadd.f32 0.0, %v1043
      %v1045 = vpop.f32.mrb[0].mxu0
      %1046 = vmatprep.mubr.bf16.mxu0 %v635
      %1047 = vmatmul.mubr.bf16.gmra.mrb[0].mxu0 %v634
      %v1048 = vpop.f32.mrb[0].mxu0
      %v1049 = vadd.f32 0.0, %v1048
      %v1050 = vpop.f32.mrb[0].mxu0
      %v1051 = vpop.f32.mrb[0].mxu0
      %v1052 = vadd.f32 0.0, %v1051
      %v1053 = vpop.f32.mrb[0].mxu0
      %1054 = vdwg.mxu0
      %1055 = vmatprep.subr.bf16.mxu0 0
      %1056 = vmatpush1.bf16.msra.mxu0 %v846
      %1057 = vmatprep.subr.bf16.mxu0 0
      %1058 = vmatpush1.bf16.msra.mxu0 %v847
      %1059 = vmatprep.subr.bf16.mxu0 0
      %1060 = vmatpush1.bf16.msra.mxu0 %v848
      %1061 = vmatprep.subr.bf16.mxu0 0
      %1062 = vmatpush1.bf16.msra.mxu0 %v849
      %1063 = vmatprep.subr.bf16.mxu0 0
      %1064 = vmatpush1.bf16.msra.mxu0 %v850
      %1065 = vmatprep.subr.bf16.mxu0 0
      %1066 = vmatpush1.bf16.msra.mxu0 %v851
      %1067 = vmatprep.subr.bf16.mxu0 0
      %1068 = vmatpush1.bf16.msra.mxu0 %v852
      %1069 = vmatprep.subr.bf16.mxu0 0
      %1070 = vmatpush1.bf16.msra.mxu0 %v853
      %1071 = vmatprep.subr.bf16.mxu0 0
      %1072 = vmatpush1.bf16.msra.mxu0 %v854
      %1073 = vmatprep.subr.bf16.mxu0 0
      %1074 = vmatpush1.bf16.msra.mxu0 %v855
      %1075 = vmatprep.subr.bf16.mxu0 0
      %1076 = vmatpush1.bf16.msra.mxu0 %v856
      %1077 = vmatprep.subr.bf16.mxu0 0
      %1078 = vmatpush1.bf16.msra.mxu0 %v857
      %1079 = vmatprep.subr.bf16.mxu0 0
      %1080 = vmatpush1.bf16.msra.mxu0 %v858
      %1081 = vmatprep.subr.bf16.mxu0 0
      %1082 = vmatpush1.bf16.msra.mxu0 %v859
      %1083 = vmatprep.subr.bf16.mxu0 0
      %1084 = vmatpush1.bf16.msra.mxu0 %v860
      %1085 = vmatprep.subr.bf16.mxu0 0
      %1086 = vmatpush1.bf16.msra.mxu0 %v861
      %1087 = vmatprep.mubr.bf16.mxu0 %v577
      %1088 = vmatmul.mubr.bf16.gmra.mrb[0].mxu0 %v576
      %v1089 = vpop.f32.mrb[0].mxu0
      %v1090 = vadd.f32 %v929, %v1089
      %v1091 = vpop.f32.mrb[0].mxu0
      %v1092 = vpop.f32.mrb[0].mxu0
      %v1093 = vadd.f32 %v932, %v1092
      %v1094 = vpop.f32.mrb[0].mxu0
      %1095 = vmatprep.mubr.bf16.mxu0 %v581
      %1096 = vmatmul.mubr.bf16.gmra.mrb[0].mxu0 %v580
      %v1097 = vpop.f32.mrb[0].mxu0
      %v1098 = vadd.f32 %v937, %v1097
      %v1099 = vpop.f32.mrb[0].mxu0
      %v1100 = vpop.f32.mrb[0].mxu0
      %v1101 = vadd.f32 %v940, %v1100
      %v1102 = vpop.f32.mrb[0].mxu0
      %1103 = vmatprep.mubr.bf16.mxu0 %v585
      %1104 = vmatmul.mubr.bf16.gmra.mrb[0].mxu0 %v584
      %v1105 = vpop.f32.mrb[0].mxu0
      %v1106 = vadd.f32 %v945, %v1105
      %v1107 = vpop.f32.mrb[0].mxu0
      %v1108 = vpop.f32.mrb[0].mxu0
      %v1109 = vadd.f32 %v948, %v1108
      %v1110 = vpop.f32.mrb[0].mxu0
      %1111 = vmatprep.mubr.bf16.mxu0 %v589
      %1112 = vmatmul.mubr.bf16.gmra.mrb[0].mxu0 %v588
      %v1113 = vpop.f32.mrb[0].mxu0
      %v1114 = vadd.f32 %v953, %v1113
      %v1115 = vpop.f32.mrb[0].mxu0
      %v1116 = vpop.f32.mrb[0].mxu0
      %v1117 = vadd.f32 %v956, %v1116
      %v1118 = vpop.f32.mrb[0].mxu0
      %1119 = vmatprep.mubr.bf16.mxu0 %v593
      %1120 = vmatmul.mubr.bf16.gmra.mrb[0].mxu0 %v592
      %v1121 = vpop.f32.mrb[0].mxu0
      %v1122 = vadd.f32 %v961, %v1121
      %v1123 = vpop.f32.mrb[0].mxu0
      %v1124 = vpop.f32.mrb[0].mxu0
      %v1125 = vadd.f32 %v964, %v1124
      %v1126 = vpop.f32.mrb[0].mxu0
      %1127 = vmatprep.mubr.bf16.mxu0 %v597
      %1128 = vmatmul.mubr.bf16.gmra.mrb[0].mxu0 %v596
      %v1129 = vpop.f32.mrb[0].mxu0
      %v1130 = vadd.f32 %v969, %v1129
      %v1131 = vpop.f32.mrb[0].mxu0
      %v1132 = vpop.f32.mrb[0].mxu0
      %v1133 = vadd.f32 %v972, %v1132
      %v1134 = vpop.f32.mrb[0].mxu0
      %1135 = vmatprep.mubr.bf16.mxu0 %v601
      %1136 = vmatmul.mubr.bf16.gmra.mrb[0].mxu0 %v600
      %v1137 = vpop.f32.mrb[0].mxu0
      %v1138 = vadd.f32 %v977, %v1137
      %v1139 = vpop.f32.mrb[0].mxu0
      %v1140 = vpop.f32.mrb[0].mxu0
      %v1141 = vadd.f32 %v980, %v1140
      %v1142 = vpop.f32.mrb[0].mxu0
      %1143 = vmatprep.mubr.bf16.mxu0 %v605
      %1144 = vmatmul.mubr.bf16.gmra.mrb[0].mxu0 %v604
      %v1145 = vpop.f32.mrb[0].mxu0
      %v1146 = vadd.f32 %v985, %v1145
      %v1147 = vpop.f32.mrb[0].mxu0
      %v1148 = vpop.f32.mrb[0].mxu0
      %v1149 = vadd.f32 %v988, %v1148
      %v1150 = vpop.f32.mrb[0].mxu0
      %1151 = vmatprep.mubr.bf16.mxu0 %v609
      %1152 = vmatmul.mubr.bf16.gmra.mrb[0].mxu0 %v608
      %v1153 = vpop.f32.mrb[0].mxu0
      %v1154 = vadd.f32 %v993, %v1153
      %v1155 = vpop.f32.mrb[0].mxu0
      %v1156 = vpop.f32.mrb[0].mxu0
      %v1157 = vadd.f32 %v996, %v1156
      %v1158 = vpop.f32.mrb[0].mxu0
      %1159 = vmatprep.mubr.bf16.mxu0 %v613
      %1160 = vmatmul.mubr.bf16.gmra.mrb[0].mxu0 %v612
      %v1161 = vpop.f32.mrb[0].mxu0
      %v1162 = vadd.f32 %v1001, %v1161
      %v1163 = vpop.f32.mrb[0].mxu0
      %v1164 = vpop.f32.mrb[0].mxu0
      %v1165 = vadd.f32 %v1004, %v1164
      %v1166 = vpop.f32.mrb[0].mxu0
      %1167 = vmatprep.mubr.bf16.mxu0 %v617
      %1168 = vmatmul.mubr.bf16.gmra.mrb[0].mxu0 %v616
      %v1169 = vpop.f32.mrb[0].mxu0
      %v1170 = vadd.f32 %v1009, %v1169
      %v1171 = vpop.f32.mrb[0].mxu0
      %v1172 = vpop.f32.mrb[0].mxu0
      %v1173 = vadd.f32 %v1012, %v1172
      %v1174 = vpop.f32.mrb[0].mxu0
      %1175 = vmatprep.mubr.bf16.mxu0 %v621
      %1176 = vmatmul.mubr.bf16.gmra.mrb[0].mxu0 %v620
      %v1177 = vpop.f32.mrb[0].mxu0
      %v1178 = vadd.f32 %v1017, %v1177
      %v1179 = vpop.f32.mrb[0].mxu0
      %v1180 = vpop.f32.mrb[0].mxu0
      %v1181 = vadd.f32 %v1020, %v1180
      %v1182 = vpop.f32.mrb[0].mxu0
      %1183 = vmatprep.mubr.bf16.mxu0 %v625
      %1184 = vmatmul.mubr.bf16.gmra.mrb[0].mxu0 %v624
      %v1185 = vpop.f32.mrb[0].mxu0
      %v1186 = vadd.f32 %v1025, %v1185
      %v1187 = vpop.f32.mrb[0].mxu0
      %v1188 = vpop.f32.mrb[0].mxu0
      %v1189 = vadd.f32 %v1028, %v1188
      %v1190 = vpop.f32.mrb[0].mxu0
      %1191 = vmatprep.mubr.bf16.mxu0 %v629
      %1192 = vmatmul.mubr.bf16.gmra.mrb[0].mxu0 %v628
      %v1193 = vpop.f32.mrb[0].mxu0
      %v1194 = vadd.f32 %v1033, %v1193
      %v1195 = vpop.f32.mrb[0].mxu0
      %v1196 = vpop.f32.mrb[0].mxu0
      %v1197 = vadd.f32 %v1036, %v1196
      %v1198 = vpop.f32.mrb[0].mxu0
      %1199 = vmatprep.mubr.bf16.mxu0 %v633
      %1200 = vmatmul.mubr.bf16.gmra.mrb[0].mxu0 %v632
      %v1201 = vpop.f32.mrb[0].mxu0
      %v1202 = vadd.f32 %v1041, %v1201
      %v1203 = vpop.f32.mrb[0].mxu0
      %v1204 = vpop.f32.mrb[0].mxu0
      %v1205 = vadd.f32 %v1044, %v1204
      %v1206 = vpop.f32.mrb[0].mxu0
      %1207 = vmatprep.mubr.bf16.mxu0 %v637
      %1208 = vmatmul.mubr.bf16.gmra.mrb[0].mxu0 %v636
      %v1209 = vpop.f32.mrb[0].mxu0
      %v1210 = vadd.f32 %v1049, %v1209
      %v1211 = vpop.f32.mrb[0].mxu0
      %v1212 = vpop.f32.mrb[0].mxu0
      %v1213 = vadd.f32 %v1052, %v1212
      %v1214 = vpop.f32.mrb[0].mxu0
      %1215 = vdwg.mxu0
      %v1216 = vpack.c.bf16 %v1093, %v1090
      %v1217 = vpack.c.bf16 %v1101, %v1098
      %v1218 = vpack.c.bf16 %v1109, %v1106
      %v1219 = vpack.c.bf16 %v1117, %v1114
      %v1220 = vpack.c.bf16 %v1125, %v1122
      %v1221 = vpack.c.bf16 %v1133, %v1130
      %v1222 = vpack.c.bf16 %v1141, %v1138
      %v1223 = vpack.c.bf16 %v1149, %v1146
      %v1224 = vpack.c.bf16 %v1157, %v1154
      %v1225 = vpack.c.bf16 %v1165, %v1162
      %v1226 = vpack.c.bf16 %v1173, %v1170
      %v1227 = vpack.c.bf16 %v1181, %v1178
      %v1228 = vpack.c.bf16 %v1189, %v1186
      %v1229 = vpack.c.bf16 %v1197, %v1194
      %v1230 = vpack.c.bf16 %v1205, %v1202
      %v1231 = vpack.c.bf16 %v1213, %v1210
      %v1232 = vld [vmem:[%s245] sm:$0xf]
      %v1233 = vld [vmem:[%s245 + $0x4] sm:$0xf]
      %v1234 = vld [vmem:[%s245 + $0x8] sm:$0xf]
      %v1235 = vld [vmem:[%s245 + $0xc] sm:$0xf]
      %v1236 = vld [vmem:[%s245 + $0x10] sm:$0xf]
      %v1237 = vld [vmem:[%s245 + $0x14] sm:$0xf]
      %v1238 = vld [vmem:[%s245 + $0x18] sm:$0xf]
      %v1239 = vld [vmem:[%s245 + $0x1c] sm:$0xf]
      %v1240 = vld [vmem:[%s245 + $0x20] sm:$0xf]
      %v1241 = vld [vmem:[%s245 + $0x24] sm:$0xf]
      %v1242 = vld [vmem:[%s245 + $0x28] sm:$0xf]
      %v1243 = vld [vmem:[%s245 + $0x2c] sm:$0xf]
      %v1244 = vld [vmem:[%s245 + $0x30] sm:$0xf]
      %v1245 = vld [vmem:[%s245 + $0x34] sm:$0xf]
      %v1246 = vld [vmem:[%s245 + $0x38] sm:$0xf]
      %v1247 = vld [vmem:[%s245 + $0x3c] sm:$0xf]
      %v1248 = vld [vmem:[%s245 + $0x40] sm:$0xf]
      %v1249 = vld [vmem:[%s245 + $0x44] sm:$0xf]
      %v1250 = vld [vmem:[%s245 + $0x48] sm:$0xf]
      %v1251 = vld [vmem:[%s245 + $0x4c] sm:$0xf]
      %v1252 = vld [vmem:[%s245 + $0x50] sm:$0xf]
      %v1253 = vld [vmem:[%s245 + $0x54] sm:$0xf]
      %v1254 = vld [vmem:[%s245 + $0x58] sm:$0xf]
      %v1255 = vld [vmem:[%s245 + $0x5c] sm:$0xf]
      %v1256 = vld [vmem:[%s245 + $0x60] sm:$0xf]
      %v1257 = vld [vmem:[%s245 + $0x64] sm:$0xf]
      %v1258 = vld [vmem:[%s245 + $0x68] sm:$0xf]
      %v1259 = vld [vmem:[%s245 + $0x6c] sm:$0xf]
      %v1260 = vld [vmem:[%s245 + $0x70] sm:$0xf]
      %v1261 = vld [vmem:[%s245 + $0x74] sm:$0xf]
      %v1262 = vld [vmem:[%s245 + $0x78] sm:$0xf]
      %v1263 = vld [vmem:[%s245 + $0x7c] sm:$0xf]
      %v1296 = vunpack.c.l.b16 %v1232
      %v1297 = vunpack.c.l.b16 %v1233
      %v1298 = vunpack.c.l.b16 %v1234
      %v1299 = vunpack.c.l.b16 %v1235
      %v1300 = vunpack.c.l.b16 %v1236
      %v1301 = vunpack.c.l.b16 %v1237
      %v1302 = vunpack.c.l.b16 %v1238
      %v1303 = vunpack.c.l.b16 %v1239
      %v1304 = vunpack.c.l.b16 %v1240
      %v1305 = vunpack.c.l.b16 %v1241
      %v1306 = vunpack.c.l.b16 %v1242
      %v1307 = vunpack.c.l.b16 %v1243
      %v1308 = vunpack.c.l.b16 %v1244
      %v1309 = vunpack.c.l.b16 %v1245
      %v1310 = vunpack.c.l.b16 %v1246
      %v1311 = vunpack.c.l.b16 %v1247
      %v1312 = vunpack.c.l.b16 %v1248
      %v1313 = vunpack.c.l.b16 %v1249
      %v1314 = vunpack.c.l.b16 %v1250
      %v1315 = vunpack.c.l.b16 %v1251
      %v1316 = vunpack.c.l.b16 %v1252
      %v1317 = vunpack.c.l.b16 %v1253
      %v1318 = vunpack.c.l.b16 %v1254
      %v1319 = vunpack.c.l.b16 %v1255
      %v1320 = vunpack.c.l.b16 %v1256
      %v1321 = vunpack.c.l.b16 %v1257
      %v1322 = vunpack.c.l.b16 %v1258
      %v1323 = vunpack.c.l.b16 %v1259
      %v1324 = vunpack.c.l.b16 %v1260
      %v1325 = vunpack.c.l.b16 %v1261
      %v1326 = vunpack.c.l.b16 %v1262
      %v1327 = vunpack.c.l.b16 %v1263
      %v1328 = vpack.c.b16 %v1297, %v1296
      %v1329 = vpack.c.b16 %v1299, %v1298
      %v1330 = vpack.c.b16 %v1301, %v1300
      %v1331 = vpack.c.b16 %v1303, %v1302
      %v1332 = vpack.c.b16 %v1305, %v1304
      %v1333 = vpack.c.b16 %v1307, %v1306
      %v1334 = vpack.c.b16 %v1309, %v1308
      %v1335 = vpack.c.b16 %v1311, %v1310
      %v1336 = vpack.c.b16 %v1313, %v1312
      %v1337 = vpack.c.b16 %v1315, %v1314
      %v1338 = vpack.c.b16 %v1317, %v1316
      %v1339 = vpack.c.b16 %v1319, %v1318
      %v1340 = vpack.c.b16 %v1321, %v1320
      %v1341 = vpack.c.b16 %v1323, %v1322
      %v1342 = vpack.c.b16 %v1325, %v1324
      %v1343 = vpack.c.b16 %v1327, %v1326
      %v1360 = vld [vmem:[%s3] sm:$0xf]
      %v1361 = vld [vmem:[%s3 + $0x4] sm:$0xf]
      %v1362 = vld [vmem:[%s3 + $0x8] sm:$0xf]
      %v1363 = vld [vmem:[%s3 + $0xc] sm:$0xf]
      %v1364 = vld [vmem:[%s3 + $0x10] sm:$0xf]
      %v1365 = vld [vmem:[%s3 + $0x14] sm:$0xf]
      %v1366 = vld [vmem:[%s3 + $0x18] sm:$0xf]
      %v1367 = vld [vmem:[%s3 + $0x1c] sm:$0xf]
      %v1368 = vld [vmem:[%s3 + $0x20] sm:$0xf]
      %v1369 = vld [vmem:[%s3 + $0x24] sm:$0xf]
      %v1370 = vld [vmem:[%s3 + $0x28] sm:$0xf]
      %v1371 = vld [vmem:[%s3 + $0x2c] sm:$0xf]
      %v1372 = vld [vmem:[%s3 + $0x30] sm:$0xf]
      %v1373 = vld [vmem:[%s3 + $0x34] sm:$0xf]
      %v1374 = vld [vmem:[%s3 + $0x38] sm:$0xf]
      %v1375 = vld [vmem:[%s3 + $0x3c] sm:$0xf]
      %v1376 = vld [vmem:[%s3 + $0x40] sm:$0xf]
      %v1377 = vld [vmem:[%s3 + $0x44] sm:$0xf]
      %v1378 = vld [vmem:[%s3 + $0x48] sm:$0xf]
      %v1379 = vld [vmem:[%s3 + $0x4c] sm:$0xf]
      %v1380 = vld [vmem:[%s3 + $0x50] sm:$0xf]
      %v1381 = vld [vmem:[%s3 + $0x54] sm:$0xf]
      %v1382 = vld [vmem:[%s3 + $0x58] sm:$0xf]
      %v1383 = vld [vmem:[%s3 + $0x5c] sm:$0xf]
      %v1384 = vld [vmem:[%s3 + $0x60] sm:$0xf]
      %v1385 = vld [vmem:[%s3 + $0x64] sm:$0xf]
      %v1386 = vld [vmem:[%s3 + $0x68] sm:$0xf]
      %v1387 = vld [vmem:[%s3 + $0x6c] sm:$0xf]
      %v1388 = vld [vmem:[%s3 + $0x70] sm:$0xf]
      %v1389 = vld [vmem:[%s3 + $0x74] sm:$0xf]
      %v1390 = vld [vmem:[%s3 + $0x78] sm:$0xf]
      %v1391 = vld [vmem:[%s3 + $0x7c] sm:$0xf]
      %v1392 = vld [vmem:[%s4] sm:$0x1]
      %v1394 = vlaneseq
      %v1395 = vshrl.u32 %v1394, 7
      %v1396 = vsub.s32 0, %v1395
      %v1397 = vrot.slane %v1392, %v1396
      %v1431 = vunpack.c.l.b16 %v1360
      %v1432 = vunpack.c.l.b16 %v1361
      %v1433 = vunpack.c.l.b16 %v1362
      %v1434 = vunpack.c.l.b16 %v1363
      %v1435 = vunpack.c.l.b16 %v1364
      %v1436 = vunpack.c.l.b16 %v1365
      %v1437 = vunpack.c.l.b16 %v1366
      %v1438 = vunpack.c.l.b16 %v1367
      %v1439 = vunpack.c.l.b16 %v1368
      %v1440 = vunpack.c.l.b16 %v1369
      %v1441 = vunpack.c.l.b16 %v1370
      %v1442 = vunpack.c.l.b16 %v1371
      %v1443 = vunpack.c.l.b16 %v1372
      %v1444 = vunpack.c.l.b16 %v1373
      %v1445 = vunpack.c.l.b16 %v1374
      %v1446 = vunpack.c.l.b16 %v1375
      %v1447 = vunpack.c.l.b16 %v1376
      %v1448 = vunpack.c.l.b16 %v1377
      %v1449 = vunpack.c.l.b16 %v1378
      %v1450 = vunpack.c.l.b16 %v1379
      %v1451 = vunpack.c.l.b16 %v1380
      %v1452 = vunpack.c.l.b16 %v1381
      %v1453 = vunpack.c.l.b16 %v1382
      %v1454 = vunpack.c.l.b16 %v1383
      %v1455 = vunpack.c.l.b16 %v1384
      %v1456 = vunpack.c.l.b16 %v1385
      %v1457 = vunpack.c.l.b16 %v1386
      %v1458 = vunpack.c.l.b16 %v1387
      %v1459 = vunpack.c.l.b16 %v1388
      %v1460 = vunpack.c.l.b16 %v1389
      %v1461 = vunpack.c.l.b16 %v1390
      %v1462 = vunpack.c.l.b16 %v1391
      %v1463 = vpack.c.b16 %v1432, %v1431
      %v1464 = vpack.c.b16 %v1434, %v1433
      %v1465 = vpack.c.b16 %v1436, %v1435
      %v1466 = vpack.c.b16 %v1438, %v1437
      %v1467 = vpack.c.b16 %v1440, %v1439
      %v1468 = vpack.c.b16 %v1442, %v1441
      %v1469 = vpack.c.b16 %v1444, %v1443
      %v1470 = vpack.c.b16 %v1446, %v1445
      %v1471 = vpack.c.b16 %v1448, %v1447
      %v1472 = vpack.c.b16 %v1450, %v1449
      %v1473 = vpack.c.b16 %v1452, %v1451
      %v1474 = vpack.c.b16 %v1454, %v1453
      %v1475 = vpack.c.b16 %v1456, %v1455
      %v1476 = vpack.c.b16 %v1458, %v1457
      %v1477 = vpack.c.b16 %v1460, %v1459
      %v1478 = vpack.c.b16 %v1462, %v1461
      %1495 = vmatprep.subr.bf16.mxu0 0
      %1496 = vmatpush1.bf16.msra.mxu0 %v1463
      %1497 = vmatprep.subr.bf16.mxu0 0
      %1498 = vmatpush1.bf16.msra.mxu0 %v1464
      %1499 = vmatprep.subr.bf16.mxu0 0
      %1500 = vmatpush1.bf16.msra.mxu0 %v1465
      %1501 = vmatprep.subr.bf16.mxu0 0
      %1502 = vmatpush1.bf16.msra.mxu0 %v1466
      %1503 = vmatprep.subr.bf16.mxu0 0
      %1504 = vmatpush1.bf16.msra.mxu0 %v1467
      %1505 = vmatprep.subr.bf16.mxu0 0
      %1506 = vmatpush1.bf16.msra.mxu0 %v1468
      %1507 = vmatprep.subr.bf16.mxu0 0
      %1508 = vmatpush1.bf16.msra.mxu0 %v1469
      %1509 = vmatprep.subr.bf16.mxu0 0
      %1510 = vmatpush1.bf16.msra.mxu0 %v1470
      %1511 = vmatprep.subr.bf16.mxu0 0
      %1512 = vmatpush1.bf16.msra.mxu0 %v1471
      %1513 = vmatprep.subr.bf16.mxu0 0
      %1514 = vmatpush1.bf16.msra.mxu0 %v1472
      %1515 = vmatprep.subr.bf16.mxu0 0
      %1516 = vmatpush1.bf16.msra.mxu0 %v1473
      %1517 = vmatprep.subr.bf16.mxu0 0
      %1518 = vmatpush1.bf16.msra.mxu0 %v1474
      %1519 = vmatprep.subr.bf16.mxu0 0
      %1520 = vmatpush1.bf16.msra.mxu0 %v1475
      %1521 = vmatprep.subr.bf16.mxu0 0
      %1522 = vmatpush1.bf16.msra.mxu0 %v1476
      %1523 = vmatprep.subr.bf16.mxu0 0
      %1524 = vmatpush1.bf16.msra.mxu0 %v1477
      %1525 = vmatprep.subr.bf16.mxu0 0
      %1526 = vmatpush1.bf16.msra.mxu0 %v1478
      %1527 = vmatprep.mubr.bf16.mxu0 %v1328
      %1528 = vmatmul.mubr.bf16.gmra.mrb[0].mxu0 %v1216
      %v1529 = vpop.f32.mrb[0].mxu0
      %v1530 = vadd.f32 %v1397, %v1529
      %v1531 = vpop.f32.mrb[0].mxu0
      %v1532 = vpop.f32.mrb[0].mxu0
      %v1533 = vadd.f32 %v1397, %v1532
      %v1534 = vpop.f32.mrb[0].mxu0
      %1535 = vmatprep.mubr.bf16.mxu0 %v1329
      %1536 = vmatmul.mubr.bf16.gmra.mrb[0].mxu0 %v1217
      %v1537 = vpop.f32.mrb[0].mxu0
      %v1538 = vadd.f32 %v1397, %v1537
      %v1539 = vpop.f32.mrb[0].mxu0
      %v1540 = vpop.f32.mrb[0].mxu0
      %v1541 = vadd.f32 %v1397, %v1540
      %v1542 = vpop.f32.mrb[0].mxu0
      %1543 = vmatprep.mubr.bf16.mxu0 %v1330
      %1544 = vmatmul.mubr.bf16.gmra.mrb[0].mxu0 %v1218
      %v1545 = vpop.f32.mrb[0].mxu0
      %v1546 = vadd.f32 %v1397, %v1545
      %v1547 = vpop.f32.mrb[0].mxu0
      %v1548 = vpop.f32.mrb[0].mxu0
      %v1549 = vadd.f32 %v1397, %v1548
      %v1550 = vpop.f32.mrb[0].mxu0
      %1551 = vmatprep.mubr.bf16.mxu0 %v1331
      %1552 = vmatmul.mubr.bf16.gmra.mrb[0].mxu0 %v1219
      %v1553 = vpop.f32.mrb[0].mxu0
      %v1554 = vadd.f32 %v1397, %v1553
      %v1555 = vpop.f32.mrb[0].mxu0
      %v1556 = vpop.f32.mrb[0].mxu0
      %v1557 = vadd.f32 %v1397, %v1556
      %v1558 = vpop.f32.mrb[0].mxu0
      %1559 = vmatprep.mubr.bf16.mxu0 %v1332
      %1560 = vmatmul.mubr.bf16.gmra.mrb[0].mxu0 %v1220
      %v1561 = vpop.f32.mrb[0].mxu0
      %v1562 = vadd.f32 %v1397, %v1561
      %v1563 = vpop.f32.mrb[0].mxu0
      %v1564 = vpop.f32.mrb[0].mxu0
      %v1565 = vadd.f32 %v1397, %v1564
      %v1566 = vpop.f32.mrb[0].mxu0
      %1567 = vmatprep.mubr.bf16.mxu0 %v1333
      %1568 = vmatmul.mubr.bf16.gmra.mrb[0].mxu0 %v1221
      %v1569 = vpop.f32.mrb[0].mxu0
      %v1570 = vadd.f32 %v1397, %v1569
      %v1571 = vpop.f32.mrb[0].mxu0
      %v1572 = vpop.f32.mrb[0].mxu0
      %v1573 = vadd.f32 %v1397, %v1572
      %v1574 = vpop.f32.mrb[0].mxu0
      %1575 = vmatprep.mubr.bf16.mxu0 %v1334
      %1576 = vmatmul.mubr.bf16.gmra.mrb[0].mxu0 %v1222
      %v1577 = vpop.f32.mrb[0].mxu0
      %v1578 = vadd.f32 %v1397, %v1577
      %v1579 = vpop.f32.mrb[0].mxu0
      %v1580 = vpop.f32.mrb[0].mxu0
      %v1581 = vadd.f32 %v1397, %v1580
      %v1582 = vpop.f32.mrb[0].mxu0
      %1583 = vmatprep.mubr.bf16.mxu0 %v1335
      %1584 = vmatmul.mubr.bf16.gmra.mrb[0].mxu0 %v1223
      %v1585 = vpop.f32.mrb[0].mxu0
      %v1586 = vadd.f32 %v1397, %v1585
      %v1587 = vpop.f32.mrb[0].mxu0
      %v1588 = vpop.f32.mrb[0].mxu0
      %v1589 = vadd.f32 %v1397, %v1588
      %v1590 = vpop.f32.mrb[0].mxu0
      %1591 = vmatprep.mubr.bf16.mxu0 %v1336
      %1592 = vmatmul.mubr.bf16.gmra.mrb[0].mxu0 %v1224
      %v1593 = vpop.f32.mrb[0].mxu0
      %v1594 = vadd.f32 %v1397, %v1593
      %v1595 = vpop.f32.mrb[0].mxu0
      %v1596 = vpop.f32.mrb[0].mxu0
      %v1597 = vadd.f32 %v1397, %v1596
      %v1598 = vpop.f32.mrb[0].mxu0
      %1599 = vmatprep.mubr.bf16.mxu0 %v1337
      %1600 = vmatmul.mubr.bf16.gmra.mrb[0].mxu0 %v1225
      %v1601 = vpop.f32.mrb[0].mxu0
      %v1602 = vadd.f32 %v1397, %v1601
      %v1603 = vpop.f32.mrb[0].mxu0
      %v1604 = vpop.f32.mrb[0].mxu0
      %v1605 = vadd.f32 %v1397, %v1604
      %v1606 = vpop.f32.mrb[0].mxu0
      %1607 = vmatprep.mubr.bf16.mxu0 %v1338
      %1608 = vmatmul.mubr.bf16.gmra.mrb[0].mxu0 %v1226
      %v1609 = vpop.f32.mrb[0].mxu0
      %v1610 = vadd.f32 %v1397, %v1609
      %v1611 = vpop.f32.mrb[0].mxu0
      %v1612 = vpop.f32.mrb[0].mxu0
      %v1613 = vadd.f32 %v1397, %v1612
      %v1614 = vpop.f32.mrb[0].mxu0
      %1615 = vmatprep.mubr.bf16.mxu0 %v1339
      %1616 = vmatmul.mubr.bf16.gmra.mrb[0].mxu0 %v1227
      %v1617 = vpop.f32.mrb[0].mxu0
      %v1618 = vadd.f32 %v1397, %v1617
      %v1619 = vpop.f32.mrb[0].mxu0
      %v1620 = vpop.f32.mrb[0].mxu0
      %v1621 = vadd.f32 %v1397, %v1620
      %v1622 = vpop.f32.mrb[0].mxu0
      %1623 = vmatprep.mubr.bf16.mxu0 %v1340
      %1624 = vmatmul.mubr.bf16.gmra.mrb[0].mxu0 %v1228
      %v1625 = vpop.f32.mrb[0].mxu0
      %v1626 = vadd.f32 %v1397, %v1625
      %v1627 = vpop.f32.mrb[0].mxu0
      %v1628 = vpop.f32.mrb[0].mxu0
      %v1629 = vadd.f32 %v1397, %v1628
      %v1630 = vpop.f32.mrb[0].mxu0
      %1631 = vmatprep.mubr.bf16.mxu0 %v1341
      %1632 = vmatmul.mubr.bf16.gmra.mrb[0].mxu0 %v1229
      %v1633 = vpop.f32.mrb[0].mxu0
      %v1634 = vadd.f32 %v1397, %v1633
      %v1635 = vpop.f32.mrb[0].mxu0
      %v1636 = vpop.f32.mrb[0].mxu0
      %v1637 = vadd.f32 %v1397, %v1636
      %v1638 = vpop.f32.mrb[0].mxu0
      %1639 = vmatprep.mubr.bf16.mxu0 %v1342
      %1640 = vmatmul.mubr.bf16.gmra.mrb[0].mxu0 %v1230
      %v1641 = vpop.f32.mrb[0].mxu0
      %v1642 = vadd.f32 %v1397, %v1641
      %v1643 = vpop.f32.mrb[0].mxu0
      %v1644 = vpop.f32.mrb[0].mxu0
      %v1645 = vadd.f32 %v1397, %v1644
      %v1646 = vpop.f32.mrb[0].mxu0
      %1647 = vmatprep.mubr.bf16.mxu0 %v1343
      %1648 = vmatmul.mubr.bf16.gmra.mrb[0].mxu0 %v1231
      %v1649 = vpop.f32.mrb[0].mxu0
      %v1650 = vadd.f32 %v1397, %v1649
      %v1651 = vpop.f32.mrb[0].mxu0
      %v1652 = vpop.f32.mrb[0].mxu0
      %v1653 = vadd.f32 %v1397, %v1652
      %v1654 = vpop.f32.mrb[0].mxu0
      %1655 = vdwg.mxu0
      %vm1656 = vcmp.gt.f32.partialorder %v1530, 0.0
      %vm1657 = vcmp.gt.f32.partialorder %v1533, 0.0
      %vm1658 = vcmp.gt.f32.partialorder %v1538, 0.0
      %vm1659 = vcmp.gt.f32.partialorder %v1541, 0.0
      %vm1660 = vcmp.gt.f32.partialorder %v1546, 0.0
      %vm1661 = vcmp.gt.f32.partialorder %v1549, 0.0
      %vm1662 = vcmp.gt.f32.partialorder %v1554, 0.0
      %vm1663 = vcmp.gt.f32.partialorder %v1557, 0.0
      %vm1664 = vcmp.gt.f32.partialorder %v1562, 0.0
      %vm1665 = vcmp.gt.f32.partialorder %v1565, 0.0
      %vm1666 = vcmp.gt.f32.partialorder %v1570, 0.0
      %vm1667 = vcmp.gt.f32.partialorder %v1573, 0.0
      %vm1668 = vcmp.gt.f32.partialorder %v1578, 0.0
      %vm1669 = vcmp.gt.f32.partialorder %v1581, 0.0
      %vm1670 = vcmp.gt.f32.partialorder %v1586, 0.0
      %vm1671 = vcmp.gt.f32.partialorder %v1589, 0.0
      %vm1672 = vcmp.gt.f32.partialorder %v1594, 0.0
      %vm1673 = vcmp.gt.f32.partialorder %v1597, 0.0
      %vm1674 = vcmp.gt.f32.partialorder %v1602, 0.0
      %vm1675 = vcmp.gt.f32.partialorder %v1605, 0.0
      %vm1676 = vcmp.gt.f32.partialorder %v1610, 0.0
      %vm1677 = vcmp.gt.f32.partialorder %v1613, 0.0
      %vm1678 = vcmp.gt.f32.partialorder %v1618, 0.0
      %vm1679 = vcmp.gt.f32.partialorder %v1621, 0.0
      %vm1680 = vcmp.gt.f32.partialorder %v1626, 0.0
      %vm1681 = vcmp.gt.f32.partialorder %v1629, 0.0
      %vm1682 = vcmp.gt.f32.partialorder %v1634, 0.0
      %vm1683 = vcmp.gt.f32.partialorder %v1637, 0.0
      %vm1684 = vcmp.gt.f32.partialorder %v1642, 0.0
      %vm1685 = vcmp.gt.f32.partialorder %v1645, 0.0
      %vm1686 = vcmp.gt.f32.partialorder %v1650, 0.0
      %vm1687 = vcmp.gt.f32.partialorder %v1653, 0.0
      %v1688 = vmin.f32 %v1530, 0.0
      %v1689 = vmin.f32 %v1533, 0.0
      %v1690 = vmin.f32 %v1538, 0.0
      %v1691 = vmin.f32 %v1541, 0.0
      %v1692 = vmin.f32 %v1546, 0.0
      %v1693 = vmin.f32 %v1549, 0.0
      %v1694 = vmin.f32 %v1554, 0.0
      %v1695 = vmin.f32 %v1557, 0.0
      %v1696 = vmin.f32 %v1562, 0.0
      %v1697 = vmin.f32 %v1565, 0.0
      %v1698 = vmin.f32 %v1570, 0.0
      %v1699 = vmin.f32 %v1573, 0.0
      %v1700 = vmin.f32 %v1578, 0.0
      %v1701 = vmin.f32 %v1581, 0.0
      %v1702 = vmin.f32 %v1586, 0.0
      %v1703 = vmin.f32 %v1589, 0.0
      %v1704 = vmin.f32 %v1594, 0.0
      %v1705 = vmin.f32 %v1597, 0.0
      %v1706 = vmin.f32 %v1602, 0.0
      %v1707 = vmin.f32 %v1605, 0.0
      %v1708 = vmin.f32 %v1610, 0.0
      %v1709 = vmin.f32 %v1613, 0.0
      %v1710 = vmin.f32 %v1618, 0.0
      %v1711 = vmin.f32 %v1621, 0.0
      %v1712 = vmin.f32 %v1626, 0.0
      %v1713 = vmin.f32 %v1629, 0.0
      %v1714 = vmin.f32 %v1634, 0.0
      %v1715 = vmin.f32 %v1637, 0.0
      %v1716 = vmin.f32 %v1642, 0.0
      %v1717 = vmin.f32 %v1645, 0.0
      %v1718 = vmin.f32 %v1650, 0.0
      %v1719 = vmin.f32 %v1653, 0.0
      %v1720 = vmul.f32 %v1688, 1.442695
      %v1721 = vpow.pop %v1720
      %v1722 = vmul.f32 %v1689, 1.442695
      %v1723 = vpow.pop %v1722
      %v1724 = vmul.f32 %v1690, 1.442695
      %v1725 = vpow.pop %v1724
      %v1726 = vmul.f32 %v1691, 1.442695
      %v1727 = vpow.pop %v1726
      %v1728 = vmul.f32 %v1692, 1.442695
      %v1729 = vpow.pop %v1728
      %v1730 = vmul.f32 %v1693, 1.442695
      %v1731 = vpow.pop %v1730
      %v1732 = vmul.f32 %v1694, 1.442695
      %v1733 = vpow.pop %v1732
      %v1734 = vmul.f32 %v1695, 1.442695
      %v1735 = vpow.pop %v1734
      %v1736 = vmul.f32 %v1696, 1.442695
      %v1737 = vpow.pop %v1736
      %v1738 = vmul.f32 %v1697, 1.442695
      %v1739 = vpow.pop %v1738
      %v1740 = vmul.f32 %v1698, 1.442695
      %v1741 = vpow.pop %v1740
      %v1742 = vmul.f32 %v1699, 1.442695
      %v1743 = vpow.pop %v1742
      %v1744 = vmul.f32 %v1700, 1.442695
      %v1745 = vpow.pop %v1744
      %v1746 = vmul.f32 %v1701, 1.442695
      %v1747 = vpow.pop %v1746
      %v1748 = vmul.f32 %v1702, 1.442695
      %v1749 = vpow.pop %v1748
      %v1750 = vmul.f32 %v1703, 1.442695
      %v1751 = vpow.pop %v1750
      %v1752 = vmul.f32 %v1704, 1.442695
      %v1753 = vpow.pop %v1752
      %v1754 = vmul.f32 %v1705, 1.442695
      %v1755 = vpow.pop %v1754
      %v1756 = vmul.f32 %v1706, 1.442695
      %v1757 = vpow.pop %v1756
      %v1758 = vmul.f32 %v1707, 1.442695
      %v1759 = vpow.pop %v1758
      %v1760 = vmul.f32 %v1708, 1.442695
      %v1761 = vpow.pop %v1760
      %v1762 = vmul.f32 %v1709, 1.442695
      %v1763 = vpow.pop %v1762
      %v1764 = vmul.f32 %v1710, 1.442695
      %v1765 = vpow.pop %v1764
      %v1766 = vmul.f32 %v1711, 1.442695
      %v1767 = vpow.pop %v1766
      %v1768 = vmul.f32 %v1712, 1.442695
      %v1769 = vpow.pop %v1768
      %v1770 = vmul.f32 %v1713, 1.442695
      %v1771 = vpow.pop %v1770
      %v1772 = vmul.f32 %v1714, 1.442695
      %v1773 = vpow.pop %v1772
      %v1774 = vmul.f32 %v1715, 1.442695
      %v1775 = vpow.pop %v1774
      %v1776 = vmul.f32 %v1716, 1.442695
      %v1777 = vpow.pop %v1776
      %v1778 = vmul.f32 %v1717, 1.442695
      %v1779 = vpow.pop %v1778
      %v1780 = vmul.f32 %v1718, 1.442695
      %v1781 = vpow.pop %v1780
      %v1782 = vmul.f32 %v1719, 1.442695
      %v1783 = vpow.pop %v1782
      %v1784 = vsub.f32 %v1721, 1.0
      %v1785 = vsub.f32 %v1723, 1.0
      %v1786 = vsub.f32 %v1725, 1.0
      %v1787 = vsub.f32 %v1727, 1.0
      %v1788 = vsub.f32 %v1729, 1.0
      %v1789 = vsub.f32 %v1731, 1.0
      %v1790 = vsub.f32 %v1733, 1.0
      %v1791 = vsub.f32 %v1735, 1.0
      %v1792 = vsub.f32 %v1737, 1.0
      %v1793 = vsub.f32 %v1739, 1.0
      %v1794 = vsub.f32 %v1741, 1.0
      %v1795 = vsub.f32 %v1743, 1.0
      %v1796 = vsub.f32 %v1745, 1.0
      %v1797 = vsub.f32 %v1747, 1.0
      %v1798 = vsub.f32 %v1749, 1.0
      %v1799 = vsub.f32 %v1751, 1.0
      %v1800 = vsub.f32 %v1753, 1.0
      %v1801 = vsub.f32 %v1755, 1.0
      %v1802 = vsub.f32 %v1757, 1.0
      %v1803 = vsub.f32 %v1759, 1.0
      %v1804 = vsub.f32 %v1761, 1.0
      %v1805 = vsub.f32 %v1763, 1.0
      %v1806 = vsub.f32 %v1765, 1.0
      %v1807 = vsub.f32 %v1767, 1.0
      %v1808 = vsub.f32 %v1769, 1.0
      %v1809 = vsub.f32 %v1771, 1.0
      %v1810 = vsub.f32 %v1773, 1.0
      %v1811 = vsub.f32 %v1775, 1.0
      %v1812 = vsub.f32 %v1777, 1.0
      %v1813 = vsub.f32 %v1779, 1.0
      %v1814 = vsub.f32 %v1781, 1.0
      %v1815 = vsub.f32 %v1783, 1.0
      %v1816 = vsel %vm1656, %v1530, %v1784
      %v1817 = vsel %vm1657, %v1533, %v1785
      %v1818 = vsel %vm1658, %v1538, %v1786
      %v1819 = vsel %vm1659, %v1541, %v1787
      %v1820 = vsel %vm1660, %v1546, %v1788
      %v1821 = vsel %vm1661, %v1549, %v1789
      %v1822 = vsel %vm1662, %v1554, %v1790
      %v1823 = vsel %vm1663, %v1557, %v1791
      %v1824 = vsel %vm1664, %v1562, %v1792
      %v1825 = vsel %vm1665, %v1565, %v1793
      %v1826 = vsel %vm1666, %v1570, %v1794
      %v1827 = vsel %vm1667, %v1573, %v1795
      %v1828 = vsel %vm1668, %v1578, %v1796
      %v1829 = vsel %vm1669, %v1581, %v1797
      %v1830 = vsel %vm1670, %v1586, %v1798
      %v1831 = vsel %vm1671, %v1589, %v1799
      %v1832 = vsel %vm1672, %v1594, %v1800
      %v1833 = vsel %vm1673, %v1597, %v1801
      %v1834 = vsel %vm1674, %v1602, %v1802
      %v1835 = vsel %vm1675, %v1605, %v1803
      %v1836 = vsel %vm1676, %v1610, %v1804
      %v1837 = vsel %vm1677, %v1613, %v1805
      %v1838 = vsel %vm1678, %v1618, %v1806
      %v1839 = vsel %vm1679, %v1621, %v1807
      %v1840 = vsel %vm1680, %v1626, %v1808
      %v1841 = vsel %vm1681, %v1629, %v1809
      %v1842 = vsel %vm1682, %v1634, %v1810
      %v1843 = vsel %vm1683, %v1637, %v1811
      %v1844 = vsel %vm1684, %v1642, %v1812
      %v1845 = vsel %vm1685, %v1645, %v1813
      %v1846 = vsel %vm1686, %v1650, %v1814
      %v1847 = vsel %vm1687, %v1653, %v1815
      %v1848 = vpack.c.bf16 %v1817, %v1816
      %v1849 = vpack.c.bf16 %v1819, %v1818
      %v1850 = vpack.c.bf16 %v1821, %v1820
      %v1851 = vpack.c.bf16 %v1823, %v1822
      %v1852 = vpack.c.bf16 %v1825, %v1824
      %v1853 = vpack.c.bf16 %v1827, %v1826
      %v1854 = vpack.c.bf16 %v1829, %v1828
      %v1855 = vpack.c.bf16 %v1831, %v1830
      %v1856 = vpack.c.bf16 %v1833, %v1832
      %v1857 = vpack.c.bf16 %v1835, %v1834
      %v1858 = vpack.c.bf16 %v1837, %v1836
      %v1859 = vpack.c.bf16 %v1839, %v1838
      %v1860 = vpack.c.bf16 %v1841, %v1840
      %v1861 = vpack.c.bf16 %v1843, %v1842
      %v1862 = vpack.c.bf16 %v1845, %v1844
      %v1863 = vpack.c.bf16 %v1847, %v1846
      %v1880 = vunpack.c.l.b16 %v1848
      %v1881 = vunpack.c.h.b16 %v1848
      %v1882 = vunpack.c.l.b16 %v1849
      %v1883 = vunpack.c.h.b16 %v1849
      %v1884 = vunpack.c.l.b16 %v1850
      %v1885 = vunpack.c.h.b16 %v1850
      %v1886 = vunpack.c.l.b16 %v1851
      %v1887 = vunpack.c.h.b16 %v1851
      %v1888 = vunpack.c.l.b16 %v1852
      %v1889 = vunpack.c.h.b16 %v1852
      %v1890 = vunpack.c.l.b16 %v1853
      %v1891 = vunpack.c.h.b16 %v1853
      %v1892 = vunpack.c.l.b16 %v1854
      %v1893 = vunpack.c.h.b16 %v1854
      %v1894 = vunpack.c.l.b16 %v1855
      %v1895 = vunpack.c.h.b16 %v1855
      %v1896 = vunpack.c.l.b16 %v1856
      %v1897 = vunpack.c.h.b16 %v1856
      %v1898 = vunpack.c.l.b16 %v1857
      %v1899 = vunpack.c.h.b16 %v1857
      %v1900 = vunpack.c.l.b16 %v1858
      %v1901 = vunpack.c.h.b16 %v1858
      %v1902 = vunpack.c.l.b16 %v1859
      %v1903 = vunpack.c.h.b16 %v1859
      %v1904 = vunpack.c.l.b16 %v1860
      %v1905 = vunpack.c.h.b16 %v1860
      %v1906 = vunpack.c.l.b16 %v1861
      %v1907 = vunpack.c.h.b16 %v1861
      %v1908 = vunpack.c.l.b16 %v1862
      %v1909 = vunpack.c.h.b16 %v1862
      %v1910 = vunpack.c.l.b16 %v1863
      %v1911 = vunpack.c.h.b16 %v1863
      %v1912 = vpack.c.b16 %v1880, %v1880
      %v1913 = vpack.c.b16 %v1881, %v1881
      %v1914 = vpack.c.b16 %v1882, %v1882
      %v1915 = vpack.c.b16 %v1883, %v1883
      %v1916 = vpack.c.b16 %v1884, %v1884
      %v1917 = vpack.c.b16 %v1885, %v1885
      %v1918 = vpack.c.b16 %v1886, %v1886
      %v1919 = vpack.c.b16 %v1887, %v1887
      %v1920 = vpack.c.b16 %v1888, %v1888
      %v1921 = vpack.c.b16 %v1889, %v1889
      %v1922 = vpack.c.b16 %v1890, %v1890
      %v1923 = vpack.c.b16 %v1891, %v1891
      %v1924 = vpack.c.b16 %v1892, %v1892
      %v1925 = vpack.c.b16 %v1893, %v1893
      %v1926 = vpack.c.b16 %v1894, %v1894
      %v1927 = vpack.c.b16 %v1895, %v1895
      %v1928 = vpack.c.b16 %v1896, %v1896
      %v1929 = vpack.c.b16 %v1897, %v1897
      %v1930 = vpack.c.b16 %v1898, %v1898
      %v1931 = vpack.c.b16 %v1899, %v1899
      %v1932 = vpack.c.b16 %v1900, %v1900
      %v1933 = vpack.c.b16 %v1901, %v1901
      %v1934 = vpack.c.b16 %v1902, %v1902
      %v1935 = vpack.c.b16 %v1903, %v1903
      %v1936 = vpack.c.b16 %v1904, %v1904
      %v1937 = vpack.c.b16 %v1905, %v1905
      %v1938 = vpack.c.b16 %v1906, %v1906
      %v1939 = vpack.c.b16 %v1907, %v1907
      %v1940 = vpack.c.b16 %v1908, %v1908
      %v1941 = vpack.c.b16 %v1909, %v1909
      %v1942 = vpack.c.b16 %v1910, %v1910
      %v1943 = vpack.c.b16 %v1911, %v1911
      %1976 = vst [vmem:[%s251] sm:$0xf] %v1912
      %1977 = vst [vmem:[%s251 + $0x4] sm:$0xf] %v1913
      %1978 = vst [vmem:[%s251 + $0x8] sm:$0xf] %v1914
      %1979 = vst [vmem:[%s251 + $0xc] sm:$0xf] %v1915
      %1980 = vst [vmem:[%s251 + $0x10] sm:$0xf] %v1916
      %1981 = vst [vmem:[%s251 + $0x14] sm:$0xf] %v1917
      %1982 = vst [vmem:[%s251 + $0x18] sm:$0xf] %v1918
      %1983 = vst [vmem:[%s251 + $0x1c] sm:$0xf] %v1919
      %1984 = vst [vmem:[%s251 + $0x20] sm:$0xf] %v1920
      %1985 = vst [vmem:[%s251 + $0x24] sm:$0xf] %v1921
      %1986 = vst [vmem:[%s251 + $0x28] sm:$0xf] %v1922
      %1987 = vst [vmem:[%s251 + $0x2c] sm:$0xf] %v1923
      %1988 = vst [vmem:[%s251 + $0x30] sm:$0xf] %v1924
      %1989 = vst [vmem:[%s251 + $0x34] sm:$0xf] %v1925
      %1990 = vst [vmem:[%s251 + $0x38] sm:$0xf] %v1926
      %1991 = vst [vmem:[%s251 + $0x3c] sm:$0xf] %v1927
      %1992 = vst [vmem:[%s251 + $0x40] sm:$0xf] %v1928
      %1993 = vst [vmem:[%s251 + $0x44] sm:$0xf] %v1929
      %1994 = vst [vmem:[%s251 + $0x48] sm:$0xf] %v1930
      %1995 = vst [vmem:[%s251 + $0x4c] sm:$0xf] %v1931
      %1996 = vst [vmem:[%s251 + $0x50] sm:$0xf] %v1932
      %1997 = vst [vmem:[%s251 + $0x54] sm:$0xf] %v1933
      %1998 = vst [vmem:[%s251 + $0x58] sm:$0xf] %v1934
      %1999 = vst [vmem:[%s251 + $0x5c] sm:$0xf] %v1935
      %2000 = vst [vmem:[%s251 + $0x60] sm:$0xf] %v1936
      %2001 = vst [vmem:[%s251 + $0x64] sm:$0xf] %v1937
      %2002 = vst [vmem:[%s251 + $0x68] sm:$0xf] %v1938
      %2003 = vst [vmem:[%s251 + $0x6c] sm:$0xf] %v1939
      %2004 = vst [vmem:[%s251 + $0x70] sm:$0xf] %v1940
      %2005 = vst [vmem:[%s251 + $0x74] sm:$0xf] %v1941
      %2006 = vst [vmem:[%s251 + $0x78] sm:$0xf] %v1942
      %2007 = vst [vmem:[%s251 + $0x7c] sm:$0xf] %v1943
      %s2008 = smul.u32 32, %s16
      %p2009 = scmp.lt.s32.totalorder %s2008, 63
      %s2010 = scalar_select %p2009, %s2008, 63
      %s2011 = smul.addr %s2010, 4
      %s2012 = scalar_lea.vmem %s5, %s2011
      // Predicated region
      $region41: #{graphsage_forward.2} parent=39 // pred_check
        %p2013 = pneg %p149
      $region42: #{graphsage_forward.2} parent=39 // pred_check_branch
        %2015 = sbr.rel (%p2013) target = $region44
      $region43: #{graphsage_forward.2} parent=39 // pred_region
        %s2016 = smul.u32 32, %s16
      $region44: #{graphsage_forward.2} parent=39 // pred_fallthru
        _
    $region40: #{graphsage_forward.2} parent=5 // pred_fallthru
      _
    %p2017 = scmp.le.s32.totalorder 2, %s11
    // Predicated region
    $region45: #{graphsage_forward.2} parent=5 // pred_check
      %p2018 = pneg %p2017
    $region46: #{graphsage_forward.2} parent=5 // pred_check_branch
      %2020 = sbr.rel (%p2018) target = $region48
    $region47: #{graphsage_forward.2} parent=5 // pred_region
      %s2021 = ssub.s32 %s11, 2
      // Predicated region
      $region49: #{graphsage_forward.2} parent=47 // pred_check
        %p2022 = pneg %p155
      $region50: #{graphsage_forward.2} parent=47 // pred_check_branch
        %2024 = sbr.rel (%p2022) target = $region52
      $region51: #{graphsage_forward.2} parent=47 // pred_region
        %s2025 = smul.u32 32, %s17
        %p2026 = scmp.lt.s32.totalorder %s2025, 63
        %s2027 = scalar_select %p2026, %s2025, 63
        %s2028 = smul.addr %s2027, 4
        %s2029 = scalar_lea.vmem %s5, %s2028
      $region52: #{graphsage_forward.2} parent=47 // pred_fallthru
        _
    $region48: #{graphsage_forward.2} parent=5 // pred_fallthru
      _
  $region6: #{graphsage_forward.2} parent=0 // loop_footer
    %s15 = sadd.s32 1, %s11
  $region7: #{graphsage_forward.2} parent=0 // loop_footer_branch
    %10 = sbr.rel target = $region3
  $region8: #{graphsage_forward.2} parent=0 // loop_exit
    _

// kernel: graphsage_forward.3
$region0: #{graphsage_forward.3}
  #allocation0 [shape = 'u32[]', space=smem, size = 0x4, offset = 0x4, fixed_abs, tag = 'smem constant byte address 0x4 - core index']
  #allocation1 [shape = 'u32[144,128]{1,0:T(1,128)}', space=vmem, size = 0x12000, scoped, tag = 'internal scratch']
  %s0 = inlined_call_operand.vmem [shape: bf16[512,512], index: 0, kind: input, shape index: {}]
  %s1 = inlined_call_operand.vmem [shape: bf16[512,128], index: 1, kind: input, shape index: {}, may-alias: {1,2}]
  %s2 = inlined_call_operand.vmem [shape: bf16[512,128], index: 2, kind: input, shape index: {}, may-alias: {1,2}]
  %s3 = inlined_call_operand.vmem [shape: bf16[256,128], index: 3, kind: input, shape index: {}]
  %s4 = inlined_call_operand.vmem [shape: f32[1,128], index: 4, kind: input, shape index: {}]
  %s5 = inlined_call_operand.vmem [shape: f32[512,128], index: 5, kind: output, shape index: {}]
  %s6 = sld [smem:[#allocation0]]
  $region53: #{graphsage_forward.3} parent=0
    _
  %s8 = ssub.s32 1, %s6
  %s9 = scalar_select 0, %s8, %s6
  loop: start=0, step=1, limit=4
  $region2: #{graphsage_forward.3} parent=0 // loop_pre_header
    _
  $region3: #{graphsage_forward.3} parent=0 // loop_header
    %s11 = sphi 0, %s15
    %p12 = scmp.ge.s32.totalorder %s11, 4
    %s21 = sphi 0, %s23
    %s24 = sphi 0, %s21
    %s25 = sphi 0, %s24
    %s41 = sphi 0, %s25
    %s45 = sphi 0, %s45
    %s47 = sphi 0, %s45
    %s48 = sphi 0, %s47
    %s62 = sphi 0, %s48
    %s68 = sphi 0, %s70
    %s71 = sphi 0, %s68
    %s72 = sphi 0, %s71
    %s88 = sphi 0, %s72
    %s92 = sphi 0, %s92
    %s94 = sphi 0, %s92
    %s95 = sphi 0, %s94
    %s109 = sphi 0, %s95
    %s113 = sphi 0, %s113
    %s115 = sphi 0, %s113
    %s116 = sphi 0, %s115
    %s130 = sphi 0, %s116
    %s136 = sphi 0, %s138
    %s139 = sphi 0, %s136
    %s140 = sphi 0, %s139
    %s156 = sphi 0, %s140
  $region4: #{graphsage_forward.3} parent=0 // loop_header_branch
    %14 = sbr.rel (%p12) target = $region8
  $region5: #{graphsage_forward.3} parent=0 // loop_body
    %s16 = ssub.s32 %s11, 1
    %s17 = ssub.s32 %s11, 2
    %s18 = sadd.s32 %s11, 1
    %s19 = ssub.s32 %s11, %s18
    %p20 = scmp.eq.s32.totalorder %s19, 0
    %s22 = sadd.s32 %s21, 1
    %s23 = scalar_select %p20, %s21, %s22
    %p26 = pneg %p20
    %p27 = scmp.eq.s32.totalorder %s11, 1
    %p28 = por %p26, %p27
    %p29 = scmp.ne.s32.totalorder %s21, %s24
    %p30 = scmp.eq.s32.totalorder %s11, 0
    %p31 = por %p29, %p30
    %p32 = scmp.ne.s32.totalorder %s21, %s24
    %p33 = scmp.eq.s32.totalorder %s16, 1
    %p34 = por %p32, %p33
    %p35 = scmp.ne.s32.totalorder %s24, %s25
    %p36 = scmp.eq.s32.totalorder %s16, 0
    %p37 = por %p35, %p36
    %p38 = scmp.ne.s32.totalorder %s24, %s25
    %p39 = scmp.eq.s32.totalorder %s17, 1
    %p40 = por %p38, %p39
    %p42 = scmp.ne.s32.totalorder %s25, %s41
    %p43 = scmp.eq.s32.totalorder %s17, 0
    %p44 = por %p42, %p43
    %s46 = sadd.s32 %s45, 1
    %p49 = scmp.eq.s32.totalorder %s11, 1
    %p50 = scmp.ne.s32.totalorder %s45, %s47
    %p51 = scmp.eq.s32.totalorder %s11, 0
    %p52 = por %p50, %p51
    %p53 = scmp.ne.s32.totalorder %s45, %s47
    %p54 = scmp.eq.s32.totalorder %s16, 1
    %p55 = por %p53, %p54
    %p56 = scmp.ne.s32.totalorder %s47, %s48
    %p57 = scmp.eq.s32.totalorder %s16, 0
    %p58 = por %p56, %p57
    %p59 = scmp.ne.s32.totalorder %s47, %s48
    %p60 = scmp.eq.s32.totalorder %s17, 1
    %p61 = por %p59, %p60
    %p63 = scmp.ne.s32.totalorder %s48, %s62
    %p64 = scmp.eq.s32.totalorder %s17, 0
    %p65 = por %p63, %p64
    %s66 = ssub.s32 %s11, %s18
    %p67 = scmp.eq.s32.totalorder %s66, 0
    %s69 = sadd.s32 %s68, 1
    %s70 = scalar_select %p67, %s68, %s69
    %p73 = pneg %p67
    %p74 = scmp.eq.s32.totalorder %s11, 1
    %p75 = por %p73, %p74
    %p76 = scmp.ne.s32.totalorder %s68, %s71
    %p77 = scmp.eq.s32.totalorder %s11, 0
    %p78 = por %p76, %p77
    %p79 = scmp.ne.s32.totalorder %s68, %s71
    %p80 = scmp.eq.s32.totalorder %s16, 1
    %p81 = por %p79, %p80
    %p82 = scmp.ne.s32.totalorder %s71, %s72
    %p83 = scmp.eq.s32.totalorder %s16, 0
    %p84 = por %p82, %p83
    %p85 = scmp.ne.s32.totalorder %s71, %s72
    %p86 = scmp.eq.s32.totalorder %s17, 1
    %p87 = por %p85, %p86
    %p89 = scmp.ne.s32.totalorder %s72, %s88
    %p90 = scmp.eq.s32.totalorder %s17, 0
    %p91 = por %p89, %p90
    %s93 = sadd.s32 %s92, 1
    %p96 = scmp.eq.s32.totalorder %s11, 1
    %p97 = scmp.ne.s32.totalorder %s92, %s94
    %p98 = scmp.eq.s32.totalorder %s11, 0
    %p99 = por %p97, %p98
    %p100 = scmp.ne.s32.totalorder %s92, %s94
    %p101 = scmp.eq.s32.totalorder %s16, 1
    %p102 = por %p100, %p101
    %p103 = scmp.ne.s32.totalorder %s94, %s95
    %p104 = scmp.eq.s32.totalorder %s16, 0
    %p105 = por %p103, %p104
    %p106 = scmp.ne.s32.totalorder %s94, %s95
    %p107 = scmp.eq.s32.totalorder %s17, 1
    %p108 = por %p106, %p107
    %p110 = scmp.ne.s32.totalorder %s95, %s109
    %p111 = scmp.eq.s32.totalorder %s17, 0
    %p112 = por %p110, %p111
    %s114 = sadd.s32 %s113, 1
    %p117 = scmp.eq.s32.totalorder %s11, 1
    %p118 = scmp.ne.s32.totalorder %s113, %s115
    %p119 = scmp.eq.s32.totalorder %s11, 0
    %p120 = por %p118, %p119
    %p121 = scmp.ne.s32.totalorder %s113, %s115
    %p122 = scmp.eq.s32.totalorder %s16, 1
    %p123 = por %p121, %p122
    %p124 = scmp.ne.s32.totalorder %s115, %s116
    %p125 = scmp.eq.s32.totalorder %s16, 0
    %p126 = por %p124, %p125
    %p127 = scmp.ne.s32.totalorder %s115, %s116
    %p128 = scmp.eq.s32.totalorder %s17, 1
    %p129 = por %p127, %p128
    %p131 = scmp.ne.s32.totalorder %s116, %s130
    %p132 = scmp.eq.s32.totalorder %s17, 0
    %p133 = por %p131, %p132
    %s134 = ssub.s32 %s11, %s18
    %p135 = scmp.eq.s32.totalorder %s134, 0
    %s137 = sadd.s32 %s136, 1
    %s138 = scalar_select %p135, %s136, %s137
    %p141 = pneg %p135
    %p142 = scmp.eq.s32.totalorder %s11, 1
    %p143 = por %p141, %p142
    %p144 = scmp.ne.s32.totalorder %s136, %s139
    %p145 = scmp.eq.s32.totalorder %s11, 0
    %p146 = por %p144, %p145
    %p147 = scmp.ne.s32.totalorder %s136, %s139
    %p148 = scmp.eq.s32.totalorder %s16, 1
    %p149 = por %p147, %p148
    %p150 = scmp.ne.s32.totalorder %s139, %s140
    %p151 = scmp.eq.s32.totalorder %s16, 0
    %p152 = por %p150, %p151
    %p153 = scmp.ne.s32.totalorder %s139, %s140
    %p154 = scmp.eq.s32.totalorder %s17, 1
    %p155 = por %p153, %p154
    %p157 = scmp.ne.s32.totalorder %s140, %s156
    %p158 = scmp.eq.s32.totalorder %s17, 0
    %p159 = por %p157, %p158
    %p160 = scmp.le.s32.totalorder 1, %s11
    %p161 = scmp.lt.s32.totalorder %s11, 3
    %p162 = pnand %p160, %p161
    %p163 = pneg %p162
    // Predicated region
    $region9: #{graphsage_forward.3} parent=5 // pred_check
      _
    $region10: #{graphsage_forward.3} parent=5 // pred_check_branch
      %165 = sbr.rel (%p162) target = $region12
    $region11: #{graphsage_forward.3} parent=5 // pred_region
      %s166 = ssub.s32 %s11, 1
      // Predicated region
      $region13: #{graphsage_forward.3} parent=11 // pred_check
        %p167 = pneg %p58
      $region14: #{graphsage_forward.3} parent=11 // pred_check_branch
        %169 = sbr.rel (%p167) target = $region16
      $region15: #{graphsage_forward.3} parent=11 // pred_region
        _
      $region16: #{graphsage_forward.3} parent=11 // pred_fallthru
        _
      // Predicated region
      $region17: #{graphsage_forward.3} parent=11 // pred_check
        %p170 = pneg %p105
      $region18: #{graphsage_forward.3} parent=11 // pred_check_branch
        %172 = sbr.rel (%p170) target = $region20
      $region19: #{graphsage_forward.3} parent=11 // pred_region
        _
      $region20: #{graphsage_forward.3} parent=11 // pred_fallthru
        _
      // Predicated region
      $region21: #{graphsage_forward.3} parent=11 // pred_check
        %p173 = pneg %p126
      $region22: #{graphsage_forward.3} parent=11 // pred_check_branch
        %175 = sbr.rel (%p173) target = $region24
      $region23: #{graphsage_forward.3} parent=11 // pred_region
        _
      $region24: #{graphsage_forward.3} parent=11 // pred_fallthru
        _
    $region12: #{graphsage_forward.3} parent=5 // pred_fallthru
      _
    %p176 = scmp.lt.s32.totalorder %s11, 2
    // Predicated region
    $region25: #{graphsage_forward.3} parent=5 // pred_check
      %p177 = pneg %p176
    $region26: #{graphsage_forward.3} parent=5 // pred_check_branch
      %179 = sbr.rel (%p177) target = $region28
    $region27: #{graphsage_forward.3} parent=5 // pred_region
      // Predicated region
      $region29: #{graphsage_forward.3} parent=27 // pred_check
        %p180 = pneg %p31
      $region30: #{graphsage_forward.3} parent=27 // pred_check_branch
        %182 = sbr.rel (%p180) target = $region32
      $region31: #{graphsage_forward.3} parent=27 // pred_region
        %s183 = smul.u32 32, %s11
        %p184 = scmp.lt.s32.totalorder %s183, 63
        %s185 = scalar_select %p184, %s183, 63
        %s186 = smul.addr %s185, 4
        %s187 = smul.addr %s186, 4
        %s188 = scalar_lea.vmem %s0, %s187
        %s189 = smul.u32 32, %s11
      $region32: #{graphsage_forward.3} parent=27 // pred_fallthru
        _
      // Predicated region
      $region33: #{graphsage_forward.3} parent=27 // pred_check
        %p190 = pneg %p78
      $region34: #{graphsage_forward.3} parent=27 // pred_check_branch
        %192 = sbr.rel (%p190) target = $region36
      $region35: #{graphsage_forward.3} parent=27 // pred_region
        %s193 = smul.u32 32, %s11
        %p194 = scmp.lt.s32.totalorder %s193, 63
        %s195 = scalar_select %p194, %s193, 63
        %s196 = smul.addr %s195, 4
        %s197 = scalar_lea.vmem %s2, %s196
        %s198 = smul.u32 32, %s11
      $region36: #{graphsage_forward.3} parent=27 // pred_fallthru
        _
    $region28: #{graphsage_forward.3} parent=5 // pred_fallthru
      _
    %p199 = scmp.le.s32.totalorder 1, %s11
    %p200 = scmp.lt.s32.totalorder %s11, 3
    %p201 = pnand %p199, %p200
    %p202 = pneg %p201
    // Predicated region
    $region37: #{graphsage_forward.3} parent=5 // pred_check
      _
    $region38: #{graphsage_forward.3} parent=5 // pred_check_branch
      %204 = sbr.rel (%p201) target = $region40
    $region39: #{graphsage_forward.3} parent=5 // pred_region
      %s205 = ssub.s32 %s11, 1
      %s206 = smul.u32 32, %s16
      %p207 = scmp.lt.s32.totalorder %s206, 63
      %s208 = scalar_select %p207, %s206, 63
      %s209 = smul.addr %s208, 4
      %s210 = smul.addr %s209, 4
      %s211 = scalar_lea.vmem %s0, %s210
      %p212 = pneg %p37
      %p213 = pneg %p34
      %p214 = pneg %p58
      %p215 = pneg %p55
      %s216 = smul.u32 32, %s16
      %p217 = scmp.lt.s32.totalorder %s216, 63
      %s218 = scalar_select %p217, %s216, 63
      %s219 = smul.addr %s218, 4
      %s220 = scalar_lea.vmem %s2, %s219
      %p221 = pneg %p84
      %p222 = pneg %p81
      %p223 = pneg %p105
      %p224 = pneg %p102
      %p225 = pneg %p126
      %p226 = pneg %p123
      %p227 = pneg %p152
      %p228 = pneg %p149
      %s229 = smul.u32 32, %s16
      %p230 = scmp.lt.s32.totalorder %s229, 63
      %s231 = scalar_select %p230, %s229, 63
      %s232 = smul.addr %s231, 8
      %s233 = scalar_lea.vmem %s5, %s232
      %s234 = smul.u32 32, %s16
      %p235 = scmp.lt.s32.totalorder %s234, 63
      %s236 = scalar_select %p235, %s234, 63
      %s237 = smul.addr %s236, 4
      %s238 = smul.addr %s237, 4
      %s239 = scalar_lea.vmem %s0, %s238
      %s240 = smul.u32 32, %s16
      %s241 = smul.u32 32, %s16
      %p242 = scmp.lt.s32.totalorder %s241, 63
      %s243 = scalar_select %p242, %s241, 63
      %s244 = smul.addr %s243, 4
      %s245 = scalar_lea.vmem %s2, %s244
      %s246 = smul.u32 32, %s16
      %s247 = smul.u32 32, %s16
      %p248 = scmp.lt.s32.totalorder %s247, 63
      %s249 = scalar_select %p248, %s247, 63
      %s250 = smul.addr %s249, 8
      %s251 = scalar_lea.vmem %s5, %s250
      %s252 = smul.u32 32, %s16
      %v254 = vld [vmem:[%s239] sm:$0xff]
      %v255 = vld [vmem:[%s239 + $0x8] sm:$0xff]
      %v256 = vld [vmem:[%s239 + $0x10] sm:$0xff]
      %v257 = vld [vmem:[%s239 + $0x18] sm:$0xff]
      %v258 = vld [vmem:[%s239 + $0x20] sm:$0xff]
      %v259 = vld [vmem:[%s239 + $0x28] sm:$0xff]
      %v260 = vld [vmem:[%s239 + $0x30] sm:$0xff]
      %v261 = vld [vmem:[%s239 + $0x38] sm:$0xff]
      %v262 = vld [vmem:[%s239 + $0x40] sm:$0xff]
      %v263 = vld [vmem:[%s239 + $0x48] sm:$0xff]
      %v264 = vld [vmem:[%s239 + $0x50] sm:$0xff]
      %v265 = vld [vmem:[%s239 + $0x58] sm:$0xff]
      %v266 = vld [vmem:[%s239 + $0x60] sm:$0xff]
      %v267 = vld [vmem:[%s239 + $0x68] sm:$0xff]
      %v268 = vld [vmem:[%s239 + $0x70] sm:$0xff]
      %v269 = vld [vmem:[%s239 + $0x78] sm:$0xff]
      %v270 = vld [vmem:[%s239 + $0x80] sm:$0xff]
      %v271 = vld [vmem:[%s239 + $0x88] sm:$0xff]
      %v272 = vld [vmem:[%s239 + $0x90] sm:$0xff]
      %v273 = vld [vmem:[%s239 + $0x98] sm:$0xff]
      %v274 = vld [vmem:[%s239 + $0xa0] sm:$0xff]
      %v275 = vld [vmem:[%s239 + $0xa8] sm:$0xff]
      %v276 = vld [vmem:[%s239 + $0xb0] sm:$0xff]
      %v277 = vld [vmem:[%s239 + $0xb8] sm:$0xff]
      %v278 = vld [vmem:[%s239 + $0xc0] sm:$0xff]
      %v279 = vld [vmem:[%s239 + $0xc8] sm:$0xff]
      %v280 = vld [vmem:[%s239 + $0xd0] sm:$0xff]
      %v281 = vld [vmem:[%s239 + $0xd8] sm:$0xff]
      %v282 = vld [vmem:[%s239 + $0xe0] sm:$0xff]
      %v283 = vld [vmem:[%s239 + $0xe8] sm:$0xff]
      %v284 = vld [vmem:[%s239 + $0xf0] sm:$0xff]
      %v285 = vld [vmem:[%s239 + $0xf8] sm:$0xff]
      %v286 = vld [vmem:[%s239 + $0x100] sm:$0xff]
      %v287 = vld [vmem:[%s239 + $0x108] sm:$0xff]
      %v288 = vld [vmem:[%s239 + $0x110] sm:$0xff]
      %v289 = vld [vmem:[%s239 + $0x118] sm:$0xff]
      %v290 = vld [vmem:[%s239 + $0x120] sm:$0xff]
      %v291 = vld [vmem:[%s239 + $0x128] sm:$0xff]
      %v292 = vld [vmem:[%s239 + $0x130] sm:$0xff]
      %v293 = vld [vmem:[%s239 + $0x138] sm:$0xff]
      %v294 = vld [vmem:[%s239 + $0x140] sm:$0xff]
      %v295 = vld [vmem:[%s239 + $0x148] sm:$0xff]
      %v296 = vld [vmem:[%s239 + $0x150] sm:$0xff]
      %v297 = vld [vmem:[%s239 + $0x158] sm:$0xff]
      %v298 = vld [vmem:[%s239 + $0x160] sm:$0xff]
      %v299 = vld [vmem:[%s239 + $0x168] sm:$0xff]
      %v300 = vld [vmem:[%s239 + $0x170] sm:$0xff]
      %v301 = vld [vmem:[%s239 + $0x178] sm:$0xff]
      %v302 = vld [vmem:[%s239 + $0x180] sm:$0xff]
      %v303 = vld [vmem:[%s239 + $0x188] sm:$0xff]
      %v304 = vld [vmem:[%s239 + $0x190] sm:$0xff]
      %v305 = vld [vmem:[%s239 + $0x198] sm:$0xff]
      %v306 = vld [vmem:[%s239 + $0x1a0] sm:$0xff]
      %v307 = vld [vmem:[%s239 + $0x1a8] sm:$0xff]
      %v308 = vld [vmem:[%s239 + $0x1b0] sm:$0xff]
      %v309 = vld [vmem:[%s239 + $0x1b8] sm:$0xff]
      %v310 = vld [vmem:[%s239 + $0x1c0] sm:$0xff]
      %v311 = vld [vmem:[%s239 + $0x1c8] sm:$0xff]
      %v312 = vld [vmem:[%s239 + $0x1d0] sm:$0xff]
      %v313 = vld [vmem:[%s239 + $0x1d8] sm:$0xff]
      %v314 = vld [vmem:[%s239 + $0x1e0] sm:$0xff]
      %v315 = vld [vmem:[%s239 + $0x1e8] sm:$0xff]
      %v316 = vld [vmem:[%s239 + $0x1f0] sm:$0xff]
      %v317 = vld [vmem:[%s239 + $0x1f8] sm:$0xff]
      %v318 = vld [vmem:[%s1] sm:$0xf]
      %v319 = vld [vmem:[%s1 + $0x4] sm:$0xf]
      %v320 = vld [vmem:[%s1 + $0x8] sm:$0xf]
      %v321 = vld [vmem:[%s1 + $0xc] sm:$0xf]
      %v322 = vld [vmem:[%s1 + $0x10] sm:$0xf]
      %v323 = vld [vmem:[%s1 + $0x14] sm:$0xf]
      %v324 = vld [vmem:[%s1 + $0x18] sm:$0xf]
      %v325 = vld [vmem:[%s1 + $0x1c] sm:$0xf]
      %v326 = vld [vmem:[%s1 + $0x20] sm:$0xf]
      %v327 = vld [vmem:[%s1 + $0x24] sm:$0xf]
      %v328 = vld [vmem:[%s1 + $0x28] sm:$0xf]
      %v329 = vld [vmem:[%s1 + $0x2c] sm:$0xf]
      %v330 = vld [vmem:[%s1 + $0x30] sm:$0xf]
      %v331 = vld [vmem:[%s1 + $0x34] sm:$0xf]
      %v332 = vld [vmem:[%s1 + $0x38] sm:$0xf]
      %v333 = vld [vmem:[%s1 + $0x3c] sm:$0xf]
      %v334 = vld [vmem:[%s1 + $0x40] sm:$0xf]
      %v335 = vld [vmem:[%s1 + $0x44] sm:$0xf]
      %v336 = vld [vmem:[%s1 + $0x48] sm:$0xf]
      %v337 = vld [vmem:[%s1 + $0x4c] sm:$0xf]
      %v338 = vld [vmem:[%s1 + $0x50] sm:$0xf]
      %v339 = vld [vmem:[%s1 + $0x54] sm:$0xf]
      %v340 = vld [vmem:[%s1 + $0x58] sm:$0xf]
      %v341 = vld [vmem:[%s1 + $0x5c] sm:$0xf]
      %v342 = vld [vmem:[%s1 + $0x60] sm:$0xf]
      %v343 = vld [vmem:[%s1 + $0x64] sm:$0xf]
      %v344 = vld [vmem:[%s1 + $0x68] sm:$0xf]
      %v345 = vld [vmem:[%s1 + $0x6c] sm:$0xf]
      %v346 = vld [vmem:[%s1 + $0x70] sm:$0xf]
      %v347 = vld [vmem:[%s1 + $0x74] sm:$0xf]
      %v348 = vld [vmem:[%s1 + $0x78] sm:$0xf]
      %v349 = vld [vmem:[%s1 + $0x7c] sm:$0xf]
      %v350 = vld [vmem:[%s1 + $0x80] sm:$0xf]
      %v351 = vld [vmem:[%s1 + $0x84] sm:$0xf]
      %v352 = vld [vmem:[%s1 + $0x88] sm:$0xf]
      %v353 = vld [vmem:[%s1 + $0x8c] sm:$0xf]
      %v354 = vld [vmem:[%s1 + $0x90] sm:$0xf]
      %v355 = vld [vmem:[%s1 + $0x94] sm:$0xf]
      %v356 = vld [vmem:[%s1 + $0x98] sm:$0xf]
      %v357 = vld [vmem:[%s1 + $0x9c] sm:$0xf]
      %v358 = vld [vmem:[%s1 + $0xa0] sm:$0xf]
      %v359 = vld [vmem:[%s1 + $0xa4] sm:$0xf]
      %v360 = vld [vmem:[%s1 + $0xa8] sm:$0xf]
      %v361 = vld [vmem:[%s1 + $0xac] sm:$0xf]
      %v362 = vld [vmem:[%s1 + $0xb0] sm:$0xf]
      %v363 = vld [vmem:[%s1 + $0xb4] sm:$0xf]
      %v364 = vld [vmem:[%s1 + $0xb8] sm:$0xf]
      %v365 = vld [vmem:[%s1 + $0xbc] sm:$0xf]
      %v366 = vld [vmem:[%s1 + $0xc0] sm:$0xf]
      %v367 = vld [vmem:[%s1 + $0xc4] sm:$0xf]
      %v368 = vld [vmem:[%s1 + $0xc8] sm:$0xf]
      %v369 = vld [vmem:[%s1 + $0xcc] sm:$0xf]
      %v370 = vld [vmem:[%s1 + $0xd0] sm:$0xf]
      %v371 = vld [vmem:[%s1 + $0xd4] sm:$0xf]
      %v372 = vld [vmem:[%s1 + $0xd8] sm:$0xf]
      %v373 = vld [vmem:[%s1 + $0xdc] sm:$0xf]
      %v374 = vld [vmem:[%s1 + $0xe0] sm:$0xf]
      %v375 = vld [vmem:[%s1 + $0xe4] sm:$0xf]
      %v376 = vld [vmem:[%s1 + $0xe8] sm:$0xf]
      %v377 = vld [vmem:[%s1 + $0xec] sm:$0xf]
      %v378 = vld [vmem:[%s1 + $0xf0] sm:$0xf]
      %v379 = vld [vmem:[%s1 + $0xf4] sm:$0xf]
      %v380 = vld [vmem:[%s1 + $0xf8] sm:$0xf]
      %v381 = vld [vmem:[%s1 + $0xfc] sm:$0xf]
      %v446 = vunpack.c.l.b16 %v254
      %v447 = vunpack.c.h.b16 %v254
      %v448 = vunpack.c.l.b16 %v255
      %v449 = vunpack.c.h.b16 %v255
      %v450 = vunpack.c.l.b16 %v256
      %v451 = vunpack.c.h.b16 %v256
      %v452 = vunpack.c.l.b16 %v257
      %v453 = vunpack.c.h.b16 %v257
      %v454 = vunpack.c.l.b16 %v258
      %v455 = vunpack.c.h.b16 %v258
      %v456 = vunpack.c.l.b16 %v259
      %v457 = vunpack.c.h.b16 %v259
      %v458 = vunpack.c.l.b16 %v260
      %v459 = vunpack.c.h.b16 %v260
      %v460 = vunpack.c.l.b16 %v261
      %v461 = vunpack.c.h.b16 %v261
      %v462 = vunpack.c.l.b16 %v262
      %v463 = vunpack.c.h.b16 %v262
      %v464 = vunpack.c.l.b16 %v263
      %v465 = vunpack.c.h.b16 %v263
      %v466 = vunpack.c.l.b16 %v264
      %v467 = vunpack.c.h.b16 %v264
      %v468 = vunpack.c.l.b16 %v265
      %v469 = vunpack.c.h.b16 %v265
      %v470 = vunpack.c.l.b16 %v266
      %v471 = vunpack.c.h.b16 %v266
      %v472 = vunpack.c.l.b16 %v267
      %v473 = vunpack.c.h.b16 %v267
      %v474 = vunpack.c.l.b16 %v268
      %v475 = vunpack.c.h.b16 %v268
      %v476 = vunpack.c.l.b16 %v269
      %v477 = vunpack.c.h.b16 %v269
      %v478 = vunpack.c.l.b16 %v270
      %v479 = vunpack.c.h.b16 %v270
      %v480 = vunpack.c.l.b16 %v271
      %v481 = vunpack.c.h.b16 %v271
      %v482 = vunpack.c.l.b16 %v272
      %v483 = vunpack.c.h.b16 %v272
      %v484 = vunpack.c.l.b16 %v273
      %v485 = vunpack.c.h.b16 %v273
      %v486 = vunpack.c.l.b16 %v274
      %v487 = vunpack.c.h.b16 %v274
      %v488 = vunpack.c.l.b16 %v275
      %v489 = vunpack.c.h.b16 %v275
      %v490 = vunpack.c.l.b16 %v276
      %v491 = vunpack.c.h.b16 %v276
      %v492 = vunpack.c.l.b16 %v277
      %v493 = vunpack.c.h.b16 %v277
      %v494 = vunpack.c.l.b16 %v278
      %v495 = vunpack.c.h.b16 %v278
      %v496 = vunpack.c.l.b16 %v279
      %v497 = vunpack.c.h.b16 %v279
      %v498 = vunpack.c.l.b16 %v280
      %v499 = vunpack.c.h.b16 %v280
      %v500 = vunpack.c.l.b16 %v281
      %v501 = vunpack.c.h.b16 %v281
      %v502 = vunpack.c.l.b16 %v282
      %v503 = vunpack.c.h.b16 %v282
      %v504 = vunpack.c.l.b16 %v283
      %v505 = vunpack.c.h.b16 %v283
      %v506 = vunpack.c.l.b16 %v284
      %v507 = vunpack.c.h.b16 %v284
      %v508 = vunpack.c.l.b16 %v285
      %v509 = vunpack.c.h.b16 %v285
      %v510 = vunpack.c.l.b16 %v286
      %v511 = vunpack.c.h.b16 %v286
      %v512 = vunpack.c.l.b16 %v287
      %v513 = vunpack.c.h.b16 %v287
      %v514 = vunpack.c.l.b16 %v288
      %v515 = vunpack.c.h.b16 %v288
      %v516 = vunpack.c.l.b16 %v289
      %v517 = vunpack.c.h.b16 %v289
      %v518 = vunpack.c.l.b16 %v290
      %v519 = vunpack.c.h.b16 %v290
      %v520 = vunpack.c.l.b16 %v291
      %v521 = vunpack.c.h.b16 %v291
      %v522 = vunpack.c.l.b16 %v292
      %v523 = vunpack.c.h.b16 %v292
      %v524 = vunpack.c.l.b16 %v293
      %v525 = vunpack.c.h.b16 %v293
      %v526 = vunpack.c.l.b16 %v294
      %v527 = vunpack.c.h.b16 %v294
      %v528 = vunpack.c.l.b16 %v295
      %v529 = vunpack.c.h.b16 %v295
      %v530 = vunpack.c.l.b16 %v296
      %v531 = vunpack.c.h.b16 %v296
      %v532 = vunpack.c.l.b16 %v297
      %v533 = vunpack.c.h.b16 %v297
      %v534 = vunpack.c.l.b16 %v298
      %v535 = vunpack.c.h.b16 %v298
      %v536 = vunpack.c.l.b16 %v299
      %v537 = vunpack.c.h.b16 %v299
      %v538 = vunpack.c.l.b16 %v300
      %v539 = vunpack.c.h.b16 %v300
      %v540 = vunpack.c.l.b16 %v301
      %v541 = vunpack.c.h.b16 %v301
      %v542 = vunpack.c.l.b16 %v302
      %v543 = vunpack.c.h.b16 %v302
      %v544 = vunpack.c.l.b16 %v303
      %v545 = vunpack.c.h.b16 %v303
      %v546 = vunpack.c.l.b16 %v304
      %v547 = vunpack.c.h.b16 %v304
      %v548 = vunpack.c.l.b16 %v305
      %v549 = vunpack.c.h.b16 %v305
      %v550 = vunpack.c.l.b16 %v306
      %v551 = vunpack.c.h.b16 %v306
      %v552 = vunpack.c.l.b16 %v307
      %v553 = vunpack.c.h.b16 %v307
      %v554 = vunpack.c.l.b16 %v308
      %v555 = vunpack.c.h.b16 %v308
      %v556 = vunpack.c.l.b16 %v309
      %v557 = vunpack.c.h.b16 %v309
      %v558 = vunpack.c.l.b16 %v310
      %v559 = vunpack.c.h.b16 %v310
      %v560 = vunpack.c.l.b16 %v311
      %v561 = vunpack.c.h.b16 %v311
      %v562 = vunpack.c.l.b16 %v312
      %v563 = vunpack.c.h.b16 %v312
      %v564 = vunpack.c.l.b16 %v313
      %v565 = vunpack.c.h.b16 %v313
      %v566 = vunpack.c.l.b16 %v314
      %v567 = vunpack.c.h.b16 %v314
      %v568 = vunpack.c.l.b16 %v315
      %v569 = vunpack.c.h.b16 %v315
      %v570 = vunpack.c.l.b16 %v316
      %v571 = vunpack.c.h.b16 %v316
      %v572 = vunpack.c.l.b16 %v317
      %v573 = vunpack.c.h.b16 %v317
      %v574 = vpack.c.b16 %v450, %v446
      %v575 = vpack.c.b16 %v451, %v447
      %v576 = vpack.c.b16 %v452, %v448
      %v577 = vpack.c.b16 %v453, %v449
      %v578 = vpack.c.b16 %v458, %v454
      %v579 = vpack.c.b16 %v459, %v455
      %v580 = vpack.c.b16 %v460, %v456
      %v581 = vpack.c.b16 %v461, %v457
      %v582 = vpack.c.b16 %v466, %v462
      %v583 = vpack.c.b16 %v467, %v463
      %v584 = vpack.c.b16 %v468, %v464
      %v585 = vpack.c.b16 %v469, %v465
      %v586 = vpack.c.b16 %v474, %v470
      %v587 = vpack.c.b16 %v475, %v471
      %v588 = vpack.c.b16 %v476, %v472
      %v589 = vpack.c.b16 %v477, %v473
      %v590 = vpack.c.b16 %v482, %v478
      %v591 = vpack.c.b16 %v483, %v479
      %v592 = vpack.c.b16 %v484, %v480
      %v593 = vpack.c.b16 %v485, %v481
      %v594 = vpack.c.b16 %v490, %v486
      %v595 = vpack.c.b16 %v491, %v487
      %v596 = vpack.c.b16 %v492, %v488
      %v597 = vpack.c.b16 %v493, %v489
      %v598 = vpack.c.b16 %v498, %v494
      %v599 = vpack.c.b16 %v499, %v495
      %v600 = vpack.c.b16 %v500, %v496
      %v601 = vpack.c.b16 %v501, %v497
      %v602 = vpack.c.b16 %v506, %v502
      %v603 = vpack.c.b16 %v507, %v503
      %v604 = vpack.c.b16 %v508, %v504
      %v605 = vpack.c.b16 %v509, %v505
      %v606 = vpack.c.b16 %v514, %v510
      %v607 = vpack.c.b16 %v515, %v511
      %v608 = vpack.c.b16 %v516, %v512
      %v609 = vpack.c.b16 %v517, %v513
      %v610 = vpack.c.b16 %v522, %v518
      %v611 = vpack.c.b16 %v523, %v519
      %v612 = vpack.c.b16 %v524, %v520
      %v613 = vpack.c.b16 %v525, %v521
      %v614 = vpack.c.b16 %v530, %v526
      %v615 = vpack.c.b16 %v531, %v527
      %v616 = vpack.c.b16 %v532, %v528
      %v617 = vpack.c.b16 %v533, %v529
      %v618 = vpack.c.b16 %v538, %v534
      %v619 = vpack.c.b16 %v539, %v535
      %v620 = vpack.c.b16 %v540, %v536
      %v621 = vpack.c.b16 %v541, %v537
      %v622 = vpack.c.b16 %v546, %v542
      %v623 = vpack.c.b16 %v547, %v543
      %v624 = vpack.c.b16 %v548, %v544
      %v625 = vpack.c.b16 %v549, %v545
      %v626 = vpack.c.b16 %v554, %v550
      %v627 = vpack.c.b16 %v555, %v551
      %v628 = vpack.c.b16 %v556, %v552
      %v629 = vpack.c.b16 %v557, %v553
      %v630 = vpack.c.b16 %v562, %v558
      %v631 = vpack.c.b16 %v563, %v559
      %v632 = vpack.c.b16 %v564, %v560
      %v633 = vpack.c.b16 %v565, %v561
      %v634 = vpack.c.b16 %v570, %v566
      %v635 = vpack.c.b16 %v571, %v567
      %v636 = vpack.c.b16 %v572, %v568
      %v637 = vpack.c.b16 %v573, %v569
      %v766 = vunpack.c.l.b16 %v318
      %v767 = vunpack.c.l.b16 %v319
      %v768 = vunpack.c.l.b16 %v320
      %v769 = vunpack.c.l.b16 %v321
      %v770 = vunpack.c.l.b16 %v322
      %v771 = vunpack.c.l.b16 %v323
      %v772 = vunpack.c.l.b16 %v324
      %v773 = vunpack.c.l.b16 %v325
      %v774 = vunpack.c.l.b16 %v326
      %v775 = vunpack.c.l.b16 %v327
      %v776 = vunpack.c.l.b16 %v328
      %v777 = vunpack.c.l.b16 %v329
      %v778 = vunpack.c.l.b16 %v330
      %v779 = vunpack.c.l.b16 %v331
      %v780 = vunpack.c.l.b16 %v332
      %v781 = vunpack.c.l.b16 %v333
      %v782 = vunpack.c.l.b16 %v334
      %v783 = vunpack.c.l.b16 %v335
      %v784 = vunpack.c.l.b16 %v336
      %v785 = vunpack.c.l.b16 %v337
      %v786 = vunpack.c.l.b16 %v338
      %v787 = vunpack.c.l.b16 %v339
      %v788 = vunpack.c.l.b16 %v340
      %v789 = vunpack.c.l.b16 %v341
      %v790 = vunpack.c.l.b16 %v342
      %v791 = vunpack.c.l.b16 %v343
      %v792 = vunpack.c.l.b16 %v344
      %v793 = vunpack.c.l.b16 %v345
      %v794 = vunpack.c.l.b16 %v346
      %v795 = vunpack.c.l.b16 %v347
      %v796 = vunpack.c.l.b16 %v348
      %v797 = vunpack.c.l.b16 %v349
      %v798 = vunpack.c.l.b16 %v350
      %v799 = vunpack.c.l.b16 %v351
      %v800 = vunpack.c.l.b16 %v352
      %v801 = vunpack.c.l.b16 %v353
      %v802 = vunpack.c.l.b16 %v354
      %v803 = vunpack.c.l.b16 %v355
      %v804 = vunpack.c.l.b16 %v356
      %v805 = vunpack.c.l.b16 %v357
      %v806 = vunpack.c.l.b16 %v358
      %v807 = vunpack.c.l.b16 %v359
      %v808 = vunpack.c.l.b16 %v360
      %v809 = vunpack.c.l.b16 %v361
      %v810 = vunpack.c.l.b16 %v362
      %v811 = vunpack.c.l.b16 %v363
      %v812 = vunpack.c.l.b16 %v364
      %v813 = vunpack.c.l.b16 %v365
      %v814 = vunpack.c.l.b16 %v366
      %v815 = vunpack.c.l.b16 %v367
      %v816 = vunpack.c.l.b16 %v368
      %v817 = vunpack.c.l.b16 %v369
      %v818 = vunpack.c.l.b16 %v370
      %v819 = vunpack.c.l.b16 %v371
      %v820 = vunpack.c.l.b16 %v372
      %v821 = vunpack.c.l.b16 %v373
      %v822 = vunpack.c.l.b16 %v374
      %v823 = vunpack.c.l.b16 %v375
      %v824 = vunpack.c.l.b16 %v376
      %v825 = vunpack.c.l.b16 %v377
      %v826 = vunpack.c.l.b16 %v378
      %v827 = vunpack.c.l.b16 %v379
      %v828 = vunpack.c.l.b16 %v380
      %v829 = vunpack.c.l.b16 %v381
      %v830 = vpack.c.b16 %v767, %v766
      %v831 = vpack.c.b16 %v769, %v768
      %v832 = vpack.c.b16 %v771, %v770
      %v833 = vpack.c.b16 %v773, %v772
      %v834 = vpack.c.b16 %v775, %v774
      %v835 = vpack.c.b16 %v777, %v776
      %v836 = vpack.c.b16 %v779, %v778
      %v837 = vpack.c.b16 %v781, %v780
      %v838 = vpack.c.b16 %v783, %v782
      %v839 = vpack.c.b16 %v785, %v784
      %v840 = vpack.c.b16 %v787, %v786
      %v841 = vpack.c.b16 %v789, %v788
      %v842 = vpack.c.b16 %v791, %v790
      %v843 = vpack.c.b16 %v793, %v792
      %v844 = vpack.c.b16 %v795, %v794
      %v845 = vpack.c.b16 %v797, %v796
      %v846 = vpack.c.b16 %v799, %v798
      %v847 = vpack.c.b16 %v801, %v800
      %v848 = vpack.c.b16 %v803, %v802
      %v849 = vpack.c.b16 %v805, %v804
      %v850 = vpack.c.b16 %v807, %v806
      %v851 = vpack.c.b16 %v809, %v808
      %v852 = vpack.c.b16 %v811, %v810
      %v853 = vpack.c.b16 %v813, %v812
      %v854 = vpack.c.b16 %v815, %v814
      %v855 = vpack.c.b16 %v817, %v816
      %v856 = vpack.c.b16 %v819, %v818
      %v857 = vpack.c.b16 %v821, %v820
      %v858 = vpack.c.b16 %v823, %v822
      %v859 = vpack.c.b16 %v825, %v824
      %v860 = vpack.c.b16 %v827, %v826
      %v861 = vpack.c.b16 %v829, %v828
      %894 = vmatprep.subr.bf16.mxu0 0
      %895 = vmatpush1.bf16.msra.mxu0 %v830
      %896 = vmatprep.subr.bf16.mxu0 0
      %897 = vmatpush1.bf16.msra.mxu0 %v831
      %898 = vmatprep.subr.bf16.mxu0 0
      %899 = vmatpush1.bf16.msra.mxu0 %v832
      %900 = vmatprep.subr.bf16.mxu0 0
      %901 = vmatpush1.bf16.msra.mxu0 %v833
      %902 = vmatprep.subr.bf16.mxu0 0
      %903 = vmatpush1.bf16.msra.mxu0 %v834
      %904 = vmatprep.subr.bf16.mxu0 0
      %905 = vmatpush1.bf16.msra.mxu0 %v835
      %906 = vmatprep.subr.bf16.mxu0 0
      %907 = vmatpush1.bf16.msra.mxu0 %v836
      %908 = vmatprep.subr.bf16.mxu0 0
      %909 = vmatpush1.bf16.msra.mxu0 %v837
      %910 = vmatprep.subr.bf16.mxu0 0
      %911 = vmatpush1.bf16.msra.mxu0 %v838
      %912 = vmatprep.subr.bf16.mxu0 0
      %913 = vmatpush1.bf16.msra.mxu0 %v839
      %914 = vmatprep.subr.bf16.mxu0 0
      %915 = vmatpush1.bf16.msra.mxu0 %v840
      %916 = vmatprep.subr.bf16.mxu0 0
      %917 = vmatpush1.bf16.msra.mxu0 %v841
      %918 = vmatprep.subr.bf16.mxu0 0
      %919 = vmatpush1.bf16.msra.mxu0 %v842
      %920 = vmatprep.subr.bf16.mxu0 0
      %921 = vmatpush1.bf16.msra.mxu0 %v843
      %922 = vmatprep.subr.bf16.mxu0 0
      %923 = vmatpush1.bf16.msra.mxu0 %v844
      %924 = vmatprep.subr.bf16.mxu0 0
      %925 = vmatpush1.bf16.msra.mxu0 %v845
      %926 = vmatprep.mubr.bf16.mxu0 %v575
      %927 = vmatmul.mubr.bf16.gmra.mrb[0].mxu0 %v574
      %v928 = vpop.f32.mrb[0].mxu0
      %v929 = vadd.f32 0.0, %v928
      %v930 = vpop.f32.mrb[0].mxu0
      %v931 = vpop.f32.mrb[0].mxu0
      %v932 = vadd.f32 0.0, %v931
      %v933 = vpop.f32.mrb[0].mxu0
      %934 = vmatprep.mubr.bf16.mxu0 %v579
      %935 = vmatmul.mubr.bf16.gmra.mrb[0].mxu0 %v578
      %v936 = vpop.f32.mrb[0].mxu0
      %v937 = vadd.f32 0.0, %v936
      %v938 = vpop.f32.mrb[0].mxu0
      %v939 = vpop.f32.mrb[0].mxu0
      %v940 = vadd.f32 0.0, %v939
      %v941 = vpop.f32.mrb[0].mxu0
      %942 = vmatprep.mubr.bf16.mxu0 %v583
      %943 = vmatmul.mubr.bf16.gmra.mrb[0].mxu0 %v582
      %v944 = vpop.f32.mrb[0].mxu0
      %v945 = vadd.f32 0.0, %v944
      %v946 = vpop.f32.mrb[0].mxu0
      %v947 = vpop.f32.mrb[0].mxu0
      %v948 = vadd.f32 0.0, %v947
      %v949 = vpop.f32.mrb[0].mxu0
      %950 = vmatprep.mubr.bf16.mxu0 %v587
      %951 = vmatmul.mubr.bf16.gmra.mrb[0].mxu0 %v586
      %v952 = vpop.f32.mrb[0].mxu0
      %v953 = vadd.f32 0.0, %v952
      %v954 = vpop.f32.mrb[0].mxu0
      %v955 = vpop.f32.mrb[0].mxu0
      %v956 = vadd.f32 0.0, %v955
      %v957 = vpop.f32.mrb[0].mxu0
      %958 = vmatprep.mubr.bf16.mxu0 %v591
      %959 = vmatmul.mubr.bf16.gmra.mrb[0].mxu0 %v590
      %v960 = vpop.f32.mrb[0].mxu0
      %v961 = vadd.f32 0.0, %v960
      %v962 = vpop.f32.mrb[0].mxu0
      %v963 = vpop.f32.mrb[0].mxu0
      %v964 = vadd.f32 0.0, %v963
      %v965 = vpop.f32.mrb[0].mxu0
      %966 = vmatprep.mubr.bf16.mxu0 %v595
      %967 = vmatmul.mubr.bf16.gmra.mrb[0].mxu0 %v594
      %v968 = vpop.f32.mrb[0].mxu0
      %v969 = vadd.f32 0.0, %v968
      %v970 = vpop.f32.mrb[0].mxu0
      %v971 = vpop.f32.mrb[0].mxu0
      %v972 = vadd.f32 0.0, %v971
      %v973 = vpop.f32.mrb[0].mxu0
      %974 = vmatprep.mubr.bf16.mxu0 %v599
      %975 = vmatmul.mubr.bf16.gmra.mrb[0].mxu0 %v598
      %v976 = vpop.f32.mrb[0].mxu0
      %v977 = vadd.f32 0.0, %v976
      %v978 = vpop.f32.mrb[0].mxu0
      %v979 = vpop.f32.mrb[0].mxu0
      %v980 = vadd.f32 0.0, %v979
      %v981 = vpop.f32.mrb[0].mxu0
      %982 = vmatprep.mubr.bf16.mxu0 %v603
      %983 = vmatmul.mubr.bf16.gmra.mrb[0].mxu0 %v602
      %v984 = vpop.f32.mrb[0].mxu0
      %v985 = vadd.f32 0.0, %v984
      %v986 = vpop.f32.mrb[0].mxu0
      %v987 = vpop.f32.mrb[0].mxu0
      %v988 = vadd.f32 0.0, %v987
      %v989 = vpop.f32.mrb[0].mxu0
      %990 = vmatprep.mubr.bf16.mxu0 %v607
      %991 = vmatmul.mubr.bf16.gmra.mrb[0].mxu0 %v606
      %v992 = vpop.f32.mrb[0].mxu0
      %v993 = vadd.f32 0.0, %v992
      %v994 = vpop.f32.mrb[0].mxu0
      %v995 = vpop.f32.mrb[0].mxu0
      %v996 = vadd.f32 0.0, %v995
      %v997 = vpop.f32.mrb[0].mxu0
      %998 = vmatprep.mubr.bf16.mxu0 %v611
      %999 = vmatmul.mubr.bf16.gmra.mrb[0].mxu0 %v610
      %v1000 = vpop.f32.mrb[0].mxu0
      %v1001 = vadd.f32 0.0, %v1000
      %v1002 = vpop.f32.mrb[0].mxu0
      %v1003 = vpop.f32.mrb[0].mxu0
      %v1004 = vadd.f32 0.0, %v1003
      %v1005 = vpop.f32.mrb[0].mxu0
      %1006 = vmatprep.mubr.bf16.mxu0 %v615
      %1007 = vmatmul.mubr.bf16.gmra.mrb[0].mxu0 %v614
      %v1008 = vpop.f32.mrb[0].mxu0
      %v1009 = vadd.f32 0.0, %v1008
      %v1010 = vpop.f32.mrb[0].mxu0
      %v1011 = vpop.f32.mrb[0].mxu0
      %v1012 = vadd.f32 0.0, %v1011
      %v1013 = vpop.f32.mrb[0].mxu0
      %1014 = vmatprep.mubr.bf16.mxu0 %v619
      %1015 = vmatmul.mubr.bf16.gmra.mrb[0].mxu0 %v618
      %v1016 = vpop.f32.mrb[0].mxu0
      %v1017 = vadd.f32 0.0, %v1016
      %v1018 = vpop.f32.mrb[0].mxu0
      %v1019 = vpop.f32.mrb[0].mxu0
      %v1020 = vadd.f32 0.0, %v1019
      %v1021 = vpop.f32.mrb[0].mxu0
      %1022 = vmatprep.mubr.bf16.mxu0 %v623
      %1023 = vmatmul.mubr.bf16.gmra.mrb[0].mxu0 %v622
      %v1024 = vpop.f32.mrb[0].mxu0
      %v1025 = vadd.f32 0.0, %v1024
      %v1026 = vpop.f32.mrb[0].mxu0
      %v1027 = vpop.f32.mrb[0].mxu0
      %v1028 = vadd.f32 0.0, %v1027
      %v1029 = vpop.f32.mrb[0].mxu0
      %1030 = vmatprep.mubr.bf16.mxu0 %v627
      %1031 = vmatmul.mubr.bf16.gmra.mrb[0].mxu0 %v626
      %v1032 = vpop.f32.mrb[0].mxu0
      %v1033 = vadd.f32 0.0, %v1032
      %v1034 = vpop.f32.mrb[0].mxu0
      %v1035 = vpop.f32.mrb[0].mxu0
      %v1036 = vadd.f32 0.0, %v1035
      %v1037 = vpop.f32.mrb[0].mxu0
      %1038 = vmatprep.mubr.bf16.mxu0 %v631
      %1039 = vmatmul.mubr.bf16.gmra.mrb[0].mxu0 %v630
      %v1040 = vpop.f32.mrb[0].mxu0
      %v1041 = vadd.f32 0.0, %v1040
      %v1042 = vpop.f32.mrb[0].mxu0
      %v1043 = vpop.f32.mrb[0].mxu0
      %v1044 = vadd.f32 0.0, %v1043
      %v1045 = vpop.f32.mrb[0].mxu0
      %1046 = vmatprep.mubr.bf16.mxu0 %v635
      %1047 = vmatmul.mubr.bf16.gmra.mrb[0].mxu0 %v634
      %v1048 = vpop.f32.mrb[0].mxu0
      %v1049 = vadd.f32 0.0, %v1048
      %v1050 = vpop.f32.mrb[0].mxu0
      %v1051 = vpop.f32.mrb[0].mxu0
      %v1052 = vadd.f32 0.0, %v1051
      %v1053 = vpop.f32.mrb[0].mxu0
      %1054 = vdwg.mxu0
      %1055 = vmatprep.subr.bf16.mxu0 0
      %1056 = vmatpush1.bf16.msra.mxu0 %v846
      %1057 = vmatprep.subr.bf16.mxu0 0
      %1058 = vmatpush1.bf16.msra.mxu0 %v847
      %1059 = vmatprep.subr.bf16.mxu0 0
      %1060 = vmatpush1.bf16.msra.mxu0 %v848
      %1061 = vmatprep.subr.bf16.mxu0 0
      %1062 = vmatpush1.bf16.msra.mxu0 %v849
      %1063 = vmatprep.subr.bf16.mxu0 0
      %1064 = vmatpush1.bf16.msra.mxu0 %v850
      %1065 = vmatprep.subr.bf16.mxu0 0
      %1066 = vmatpush1.bf16.msra.mxu0 %v851
      %1067 = vmatprep.subr.bf16.mxu0 0
      %1068 = vmatpush1.bf16.msra.mxu0 %v852
      %1069 = vmatprep.subr.bf16.mxu0 0
      %1070 = vmatpush1.bf16.msra.mxu0 %v853
      %1071 = vmatprep.subr.bf16.mxu0 0
      %1072 = vmatpush1.bf16.msra.mxu0 %v854
      %1073 = vmatprep.subr.bf16.mxu0 0
      %1074 = vmatpush1.bf16.msra.mxu0 %v855
      %1075 = vmatprep.subr.bf16.mxu0 0
      %1076 = vmatpush1.bf16.msra.mxu0 %v856
      %1077 = vmatprep.subr.bf16.mxu0 0
      %1078 = vmatpush1.bf16.msra.mxu0 %v857
      %1079 = vmatprep.subr.bf16.mxu0 0
      %1080 = vmatpush1.bf16.msra.mxu0 %v858
      %1081 = vmatprep.subr.bf16.mxu0 0
      %1082 = vmatpush1.bf16.msra.mxu0 %v859
      %1083 = vmatprep.subr.bf16.mxu0 0
      %1084 = vmatpush1.bf16.msra.mxu0 %v860
      %1085 = vmatprep.subr.bf16.mxu0 0
      %1086 = vmatpush1.bf16.msra.mxu0 %v861
      %1087 = vmatprep.mubr.bf16.mxu0 %v577
      %1088 = vmatmul.mubr.bf16.gmra.mrb[0].mxu0 %v576
      %v1089 = vpop.f32.mrb[0].mxu0
      %v1090 = vadd.f32 %v929, %v1089
      %v1091 = vpop.f32.mrb[0].mxu0
      %v1092 = vpop.f32.mrb[0].mxu0
      %v1093 = vadd.f32 %v932, %v1092
      %v1094 = vpop.f32.mrb[0].mxu0
      %1095 = vmatprep.mubr.bf16.mxu0 %v581
      %1096 = vmatmul.mubr.bf16.gmra.mrb[0].mxu0 %v580
      %v1097 = vpop.f32.mrb[0].mxu0
      %v1098 = vadd.f32 %v937, %v1097
      %v1099 = vpop.f32.mrb[0].mxu0
      %v1100 = vpop.f32.mrb[0].mxu0
      %v1101 = vadd.f32 %v940, %v1100
      %v1102 = vpop.f32.mrb[0].mxu0
      %1103 = vmatprep.mubr.bf16.mxu0 %v585
      %1104 = vmatmul.mubr.bf16.gmra.mrb[0].mxu0 %v584
      %v1105 = vpop.f32.mrb[0].mxu0
      %v1106 = vadd.f32 %v945, %v1105
      %v1107 = vpop.f32.mrb[0].mxu0
      %v1108 = vpop.f32.mrb[0].mxu0
      %v1109 = vadd.f32 %v948, %v1108
      %v1110 = vpop.f32.mrb[0].mxu0
      %1111 = vmatprep.mubr.bf16.mxu0 %v589
      %1112 = vmatmul.mubr.bf16.gmra.mrb[0].mxu0 %v588
      %v1113 = vpop.f32.mrb[0].mxu0
      %v1114 = vadd.f32 %v953, %v1113
      %v1115 = vpop.f32.mrb[0].mxu0
      %v1116 = vpop.f32.mrb[0].mxu0
      %v1117 = vadd.f32 %v956, %v1116
      %v1118 = vpop.f32.mrb[0].mxu0
      %1119 = vmatprep.mubr.bf16.mxu0 %v593
      %1120 = vmatmul.mubr.bf16.gmra.mrb[0].mxu0 %v592
      %v1121 = vpop.f32.mrb[0].mxu0
      %v1122 = vadd.f32 %v961, %v1121
      %v1123 = vpop.f32.mrb[0].mxu0
      %v1124 = vpop.f32.mrb[0].mxu0
      %v1125 = vadd.f32 %v964, %v1124
      %v1126 = vpop.f32.mrb[0].mxu0
      %1127 = vmatprep.mubr.bf16.mxu0 %v597
      %1128 = vmatmul.mubr.bf16.gmra.mrb[0].mxu0 %v596
      %v1129 = vpop.f32.mrb[0].mxu0
      %v1130 = vadd.f32 %v969, %v1129
      %v1131 = vpop.f32.mrb[0].mxu0
      %v1132 = vpop.f32.mrb[0].mxu0
      %v1133 = vadd.f32 %v972, %v1132
      %v1134 = vpop.f32.mrb[0].mxu0
      %1135 = vmatprep.mubr.bf16.mxu0 %v601
      %1136 = vmatmul.mubr.bf16.gmra.mrb[0].mxu0 %v600
      %v1137 = vpop.f32.mrb[0].mxu0
      %v1138 = vadd.f32 %v977, %v1137
      %v1139 = vpop.f32.mrb[0].mxu0
      %v1140 = vpop.f32.mrb[0].mxu0
      %v1141 = vadd.f32 %v980, %v1140
      %v1142 = vpop.f32.mrb[0].mxu0
      %1143 = vmatprep.mubr.bf16.mxu0 %v605
      %1144 = vmatmul.mubr.bf16.gmra.mrb[0].mxu0 %v604
      %v1145 = vpop.f32.mrb[0].mxu0
      %v1146 = vadd.f32 %v985, %v1145
      %v1147 = vpop.f32.mrb[0].mxu0
      %v1148 = vpop.f32.mrb[0].mxu0
      %v1149 = vadd.f32 %v988, %v1148
      %v1150 = vpop.f32.mrb[0].mxu0
      %1151 = vmatprep.mubr.bf16.mxu0 %v609
      %1152 = vmatmul.mubr.bf16.gmra.mrb[0].mxu0 %v608
      %v1153 = vpop.f32.mrb[0].mxu0
      %v1154 = vadd.f32 %v993, %v1153
      %v1155 = vpop.f32.mrb[0].mxu0
      %v1156 = vpop.f32.mrb[0].mxu0
      %v1157 = vadd.f32 %v996, %v1156
      %v1158 = vpop.f32.mrb[0].mxu0
      %1159 = vmatprep.mubr.bf16.mxu0 %v613
      %1160 = vmatmul.mubr.bf16.gmra.mrb[0].mxu0 %v612
      %v1161 = vpop.f32.mrb[0].mxu0
      %v1162 = vadd.f32 %v1001, %v1161
      %v1163 = vpop.f32.mrb[0].mxu0
      %v1164 = vpop.f32.mrb[0].mxu0
      %v1165 = vadd.f32 %v1004, %v1164
      %v1166 = vpop.f32.mrb[0].mxu0
      %1167 = vmatprep.mubr.bf16.mxu0 %v617
      %1168 = vmatmul.mubr.bf16.gmra.mrb[0].mxu0 %v616
      %v1169 = vpop.f32.mrb[0].mxu0
      %v1170 = vadd.f32 %v1009, %v1169
      %v1171 = vpop.f32.mrb[0].mxu0
      %v1172 = vpop.f32.mrb[0].mxu0
      %v1173 = vadd.f32 %v1012, %v1172
      %v1174 = vpop.f32.mrb[0].mxu0
      %1175 = vmatprep.mubr.bf16.mxu0 %v621
      %1176 = vmatmul.mubr.bf16.gmra.mrb[0].mxu0 %v620
      %v1177 = vpop.f32.mrb[0].mxu0
      %v1178 = vadd.f32 %v1017, %v1177
      %v1179 = vpop.f32.mrb[0].mxu0
      %v1180 = vpop.f32.mrb[0].mxu0
      %v1181 = vadd.f32 %v1020, %v1180
      %v1182 = vpop.f32.mrb[0].mxu0
      %1183 = vmatprep.mubr.bf16.mxu0 %v625
      %1184 = vmatmul.mubr.bf16.gmra.mrb[0].mxu0 %v624
      %v1185 = vpop.f32.mrb[0].mxu0
      %v1186 = vadd.f32 %v1025, %v1185
      %v1187 = vpop.f32.mrb[0].mxu0
      %v1188 = vpop.f32.mrb[0].mxu0
      %v1189 = vadd.f32 %v1028, %v1188
      %v1190 = vpop.f32.mrb[0].mxu0
      %1191 = vmatprep.mubr.bf16.mxu0 %v629
      %1192 = vmatmul.mubr.bf16.gmra.mrb[0].mxu0 %v628
      %v1193 = vpop.f32.mrb[0].mxu0
      %v1194 = vadd.f32 %v1033, %v1193
      %v1195 = vpop.f32.mrb[0].mxu0
      %v1196 = vpop.f32.mrb[0].mxu0
      %v1197 = vadd.f32 %v1036, %v1196
      %v1198 = vpop.f32.mrb[0].mxu0
      %1199 = vmatprep.mubr.bf16.mxu0 %v633
      %1200 = vmatmul.mubr.bf16.gmra.mrb[0].mxu0 %v632
      %v1201 = vpop.f32.mrb[0].mxu0
      %v1202 = vadd.f32 %v1041, %v1201
      %v1203 = vpop.f32.mrb[0].mxu0
      %v1204 = vpop.f32.mrb[0].mxu0
      %v1205 = vadd.f32 %v1044, %v1204
      %v1206 = vpop.f32.mrb[0].mxu0
      %1207 = vmatprep.mubr.bf16.mxu0 %v637
      %1208 = vmatmul.mubr.bf16.gmra.mrb[0].mxu0 %v636
      %v1209 = vpop.f32.mrb[0].mxu0
      %v1210 = vadd.f32 %v1049, %v1209
      %v1211 = vpop.f32.mrb[0].mxu0
      %v1212 = vpop.f32.mrb[0].mxu0
      %v1213 = vadd.f32 %v1052, %v1212
      %v1214 = vpop.f32.mrb[0].mxu0
      %1215 = vdwg.mxu0
      %v1216 = vpack.c.bf16 %v1093, %v1090
      %v1217 = vpack.c.bf16 %v1101, %v1098
      %v1218 = vpack.c.bf16 %v1109, %v1106
      %v1219 = vpack.c.bf16 %v1117, %v1114
      %v1220 = vpack.c.bf16 %v1125, %v1122
      %v1221 = vpack.c.bf16 %v1133, %v1130
      %v1222 = vpack.c.bf16 %v1141, %v1138
      %v1223 = vpack.c.bf16 %v1149, %v1146
      %v1224 = vpack.c.bf16 %v1157, %v1154
      %v1225 = vpack.c.bf16 %v1165, %v1162
      %v1226 = vpack.c.bf16 %v1173, %v1170
      %v1227 = vpack.c.bf16 %v1181, %v1178
      %v1228 = vpack.c.bf16 %v1189, %v1186
      %v1229 = vpack.c.bf16 %v1197, %v1194
      %v1230 = vpack.c.bf16 %v1205, %v1202
      %v1231 = vpack.c.bf16 %v1213, %v1210
      %v1232 = vld [vmem:[%s245] sm:$0xf]
      %v1233 = vld [vmem:[%s245 + $0x4] sm:$0xf]
      %v1234 = vld [vmem:[%s245 + $0x8] sm:$0xf]
      %v1235 = vld [vmem:[%s245 + $0xc] sm:$0xf]
      %v1236 = vld [vmem:[%s245 + $0x10] sm:$0xf]
      %v1237 = vld [vmem:[%s245 + $0x14] sm:$0xf]
      %v1238 = vld [vmem:[%s245 + $0x18] sm:$0xf]
      %v1239 = vld [vmem:[%s245 + $0x1c] sm:$0xf]
      %v1240 = vld [vmem:[%s245 + $0x20] sm:$0xf]
      %v1241 = vld [vmem:[%s245 + $0x24] sm:$0xf]
      %v1242 = vld [vmem:[%s245 + $0x28] sm:$0xf]
      %v1243 = vld [vmem:[%s245 + $0x2c] sm:$0xf]
      %v1244 = vld [vmem:[%s245 + $0x30] sm:$0xf]
      %v1245 = vld [vmem:[%s245 + $0x34] sm:$0xf]
      %v1246 = vld [vmem:[%s245 + $0x38] sm:$0xf]
      %v1247 = vld [vmem:[%s245 + $0x3c] sm:$0xf]
      %v1248 = vld [vmem:[%s245 + $0x40] sm:$0xf]
      %v1249 = vld [vmem:[%s245 + $0x44] sm:$0xf]
      %v1250 = vld [vmem:[%s245 + $0x48] sm:$0xf]
      %v1251 = vld [vmem:[%s245 + $0x4c] sm:$0xf]
      %v1252 = vld [vmem:[%s245 + $0x50] sm:$0xf]
      %v1253 = vld [vmem:[%s245 + $0x54] sm:$0xf]
      %v1254 = vld [vmem:[%s245 + $0x58] sm:$0xf]
      %v1255 = vld [vmem:[%s245 + $0x5c] sm:$0xf]
      %v1256 = vld [vmem:[%s245 + $0x60] sm:$0xf]
      %v1257 = vld [vmem:[%s245 + $0x64] sm:$0xf]
      %v1258 = vld [vmem:[%s245 + $0x68] sm:$0xf]
      %v1259 = vld [vmem:[%s245 + $0x6c] sm:$0xf]
      %v1260 = vld [vmem:[%s245 + $0x70] sm:$0xf]
      %v1261 = vld [vmem:[%s245 + $0x74] sm:$0xf]
      %v1262 = vld [vmem:[%s245 + $0x78] sm:$0xf]
      %v1263 = vld [vmem:[%s245 + $0x7c] sm:$0xf]
      %v1296 = vunpack.c.l.b16 %v1232
      %v1297 = vunpack.c.l.b16 %v1233
      %v1298 = vunpack.c.l.b16 %v1234
      %v1299 = vunpack.c.l.b16 %v1235
      %v1300 = vunpack.c.l.b16 %v1236
      %v1301 = vunpack.c.l.b16 %v1237
      %v1302 = vunpack.c.l.b16 %v1238
      %v1303 = vunpack.c.l.b16 %v1239
      %v1304 = vunpack.c.l.b16 %v1240
      %v1305 = vunpack.c.l.b16 %v1241
      %v1306 = vunpack.c.l.b16 %v1242
      %v1307 = vunpack.c.l.b16 %v1243
      %v1308 = vunpack.c.l.b16 %v1244
      %v1309 = vunpack.c.l.b16 %v1245
      %v1310 = vunpack.c.l.b16 %v1246
      %v1311 = vunpack.c.l.b16 %v1247
      %v1312 = vunpack.c.l.b16 %v1248
      %v1313 = vunpack.c.l.b16 %v1249
      %v1314 = vunpack.c.l.b16 %v1250
      %v1315 = vunpack.c.l.b16 %v1251
      %v1316 = vunpack.c.l.b16 %v1252
      %v1317 = vunpack.c.l.b16 %v1253
      %v1318 = vunpack.c.l.b16 %v1254
      %v1319 = vunpack.c.l.b16 %v1255
      %v1320 = vunpack.c.l.b16 %v1256
      %v1321 = vunpack.c.l.b16 %v1257
      %v1322 = vunpack.c.l.b16 %v1258
      %v1323 = vunpack.c.l.b16 %v1259
      %v1324 = vunpack.c.l.b16 %v1260
      %v1325 = vunpack.c.l.b16 %v1261
      %v1326 = vunpack.c.l.b16 %v1262
      %v1327 = vunpack.c.l.b16 %v1263
      %v1328 = vpack.c.b16 %v1297, %v1296
      %v1329 = vpack.c.b16 %v1299, %v1298
      %v1330 = vpack.c.b16 %v1301, %v1300
      %v1331 = vpack.c.b16 %v1303, %v1302
      %v1332 = vpack.c.b16 %v1305, %v1304
      %v1333 = vpack.c.b16 %v1307, %v1306
      %v1334 = vpack.c.b16 %v1309, %v1308
      %v1335 = vpack.c.b16 %v1311, %v1310
      %v1336 = vpack.c.b16 %v1313, %v1312
      %v1337 = vpack.c.b16 %v1315, %v1314
      %v1338 = vpack.c.b16 %v1317, %v1316
      %v1339 = vpack.c.b16 %v1319, %v1318
      %v1340 = vpack.c.b16 %v1321, %v1320
      %v1341 = vpack.c.b16 %v1323, %v1322
      %v1342 = vpack.c.b16 %v1325, %v1324
      %v1343 = vpack.c.b16 %v1327, %v1326
      %v1360 = vld [vmem:[%s3] sm:$0xf]
      %v1361 = vld [vmem:[%s3 + $0x4] sm:$0xf]
      %v1362 = vld [vmem:[%s3 + $0x8] sm:$0xf]
      %v1363 = vld [vmem:[%s3 + $0xc] sm:$0xf]
      %v1364 = vld [vmem:[%s3 + $0x10] sm:$0xf]
      %v1365 = vld [vmem:[%s3 + $0x14] sm:$0xf]
      %v1366 = vld [vmem:[%s3 + $0x18] sm:$0xf]
      %v1367 = vld [vmem:[%s3 + $0x1c] sm:$0xf]
      %v1368 = vld [vmem:[%s3 + $0x20] sm:$0xf]
      %v1369 = vld [vmem:[%s3 + $0x24] sm:$0xf]
      %v1370 = vld [vmem:[%s3 + $0x28] sm:$0xf]
      %v1371 = vld [vmem:[%s3 + $0x2c] sm:$0xf]
      %v1372 = vld [vmem:[%s3 + $0x30] sm:$0xf]
      %v1373 = vld [vmem:[%s3 + $0x34] sm:$0xf]
      %v1374 = vld [vmem:[%s3 + $0x38] sm:$0xf]
      %v1375 = vld [vmem:[%s3 + $0x3c] sm:$0xf]
      %v1376 = vld [vmem:[%s3 + $0x40] sm:$0xf]
      %v1377 = vld [vmem:[%s3 + $0x44] sm:$0xf]
      %v1378 = vld [vmem:[%s3 + $0x48] sm:$0xf]
      %v1379 = vld [vmem:[%s3 + $0x4c] sm:$0xf]
      %v1380 = vld [vmem:[%s3 + $0x50] sm:$0xf]
      %v1381 = vld [vmem:[%s3 + $0x54] sm:$0xf]
      %v1382 = vld [vmem:[%s3 + $0x58] sm:$0xf]
      %v1383 = vld [vmem:[%s3 + $0x5c] sm:$0xf]
      %v1384 = vld [vmem:[%s3 + $0x60] sm:$0xf]
      %v1385 = vld [vmem:[%s3 + $0x64] sm:$0xf]
      %v1386 = vld [vmem:[%s3 + $0x68] sm:$0xf]
      %v1387 = vld [vmem:[%s3 + $0x6c] sm:$0xf]
      %v1388 = vld [vmem:[%s3 + $0x70] sm:$0xf]
      %v1389 = vld [vmem:[%s3 + $0x74] sm:$0xf]
      %v1390 = vld [vmem:[%s3 + $0x78] sm:$0xf]
      %v1391 = vld [vmem:[%s3 + $0x7c] sm:$0xf]
      %v1392 = vld [vmem:[%s4] sm:$0x1]
      %v1394 = vlaneseq
      %v1395 = vshrl.u32 %v1394, 7
      %v1396 = vsub.s32 0, %v1395
      %v1397 = vrot.slane %v1392, %v1396
      %v1431 = vunpack.c.l.b16 %v1360
      %v1432 = vunpack.c.l.b16 %v1361
      %v1433 = vunpack.c.l.b16 %v1362
      %v1434 = vunpack.c.l.b16 %v1363
      %v1435 = vunpack.c.l.b16 %v1364
      %v1436 = vunpack.c.l.b16 %v1365
      %v1437 = vunpack.c.l.b16 %v1366
      %v1438 = vunpack.c.l.b16 %v1367
      %v1439 = vunpack.c.l.b16 %v1368
      %v1440 = vunpack.c.l.b16 %v1369
      %v1441 = vunpack.c.l.b16 %v1370
      %v1442 = vunpack.c.l.b16 %v1371
      %v1443 = vunpack.c.l.b16 %v1372
      %v1444 = vunpack.c.l.b16 %v1373
      %v1445 = vunpack.c.l.b16 %v1374
      %v1446 = vunpack.c.l.b16 %v1375
      %v1447 = vunpack.c.l.b16 %v1376
      %v1448 = vunpack.c.l.b16 %v1377
      %v1449 = vunpack.c.l.b16 %v1378
      %v1450 = vunpack.c.l.b16 %v1379
      %v1451 = vunpack.c.l.b16 %v1380
      %v1452 = vunpack.c.l.b16 %v1381
      %v1453 = vunpack.c.l.b16 %v1382
      %v1454 = vunpack.c.l.b16 %v1383
      %v1455 = vunpack.c.l.b16 %v1384
      %v1456 = vunpack.c.l.b16 %v1385
      %v1457 = vunpack.c.l.b16 %v1386
      %v1458 = vunpack.c.l.b16 %v1387
      %v1459 = vunpack.c.l.b16 %v1388
      %v1460 = vunpack.c.l.b16 %v1389
      %v1461 = vunpack.c.l.b16 %v1390
      %v1462 = vunpack.c.l.b16 %v1391
      %v1463 = vpack.c.b16 %v1432, %v1431
      %v1464 = vpack.c.b16 %v1434, %v1433
      %v1465 = vpack.c.b16 %v1436, %v1435
      %v1466 = vpack.c.b16 %v1438, %v1437
      %v1467 = vpack.c.b16 %v1440, %v1439
      %v1468 = vpack.c.b16 %v1442, %v1441
      %v1469 = vpack.c.b16 %v1444, %v1443
      %v1470 = vpack.c.b16 %v1446, %v1445
      %v1471 = vpack.c.b16 %v1448, %v1447
      %v1472 = vpack.c.b16 %v1450, %v1449
      %v1473 = vpack.c.b16 %v1452, %v1451
      %v1474 = vpack.c.b16 %v1454, %v1453
      %v1475 = vpack.c.b16 %v1456, %v1455
      %v1476 = vpack.c.b16 %v1458, %v1457
      %v1477 = vpack.c.b16 %v1460, %v1459
      %v1478 = vpack.c.b16 %v1462, %v1461
      %1495 = vmatprep.subr.bf16.mxu0 0
      %1496 = vmatpush1.bf16.msra.mxu0 %v1463
      %1497 = vmatprep.subr.bf16.mxu0 0
      %1498 = vmatpush1.bf16.msra.mxu0 %v1464
      %1499 = vmatprep.subr.bf16.mxu0 0
      %1500 = vmatpush1.bf16.msra.mxu0 %v1465
      %1501 = vmatprep.subr.bf16.mxu0 0
      %1502 = vmatpush1.bf16.msra.mxu0 %v1466
      %1503 = vmatprep.subr.bf16.mxu0 0
      %1504 = vmatpush1.bf16.msra.mxu0 %v1467
      %1505 = vmatprep.subr.bf16.mxu0 0
      %1506 = vmatpush1.bf16.msra.mxu0 %v1468
      %1507 = vmatprep.subr.bf16.mxu0 0
      %1508 = vmatpush1.bf16.msra.mxu0 %v1469
      %1509 = vmatprep.subr.bf16.mxu0 0
      %1510 = vmatpush1.bf16.msra.mxu0 %v1470
      %1511 = vmatprep.subr.bf16.mxu0 0
      %1512 = vmatpush1.bf16.msra.mxu0 %v1471
      %1513 = vmatprep.subr.bf16.mxu0 0
      %1514 = vmatpush1.bf16.msra.mxu0 %v1472
      %1515 = vmatprep.subr.bf16.mxu0 0
      %1516 = vmatpush1.bf16.msra.mxu0 %v1473
      %1517 = vmatprep.subr.bf16.mxu0 0
      %1518 = vmatpush1.bf16.msra.mxu0 %v1474
      %1519 = vmatprep.subr.bf16.mxu0 0
      %1520 = vmatpush1.bf16.msra.mxu0 %v1475
      %1521 = vmatprep.subr.bf16.mxu0 0
      %1522 = vmatpush1.bf16.msra.mxu0 %v1476
      %1523 = vmatprep.subr.bf16.mxu0 0
      %1524 = vmatpush1.bf16.msra.mxu0 %v1477
      %1525 = vmatprep.subr.bf16.mxu0 0
      %1526 = vmatpush1.bf16.msra.mxu0 %v1478
      %1527 = vmatprep.mubr.bf16.mxu0 %v1328
      %1528 = vmatmul.mubr.bf16.gmra.mrb[0].mxu0 %v1216
      %v1529 = vpop.f32.mrb[0].mxu0
      %v1530 = vadd.f32 %v1397, %v1529
      %v1531 = vpop.f32.mrb[0].mxu0
      %v1532 = vpop.f32.mrb[0].mxu0
      %v1533 = vadd.f32 %v1397, %v1532
      %v1534 = vpop.f32.mrb[0].mxu0
      %1535 = vmatprep.mubr.bf16.mxu0 %v1329
      %1536 = vmatmul.mubr.bf16.gmra.mrb[0].mxu0 %v1217
      %v1537 = vpop.f32.mrb[0].mxu0
      %v1538 = vadd.f32 %v1397, %v1537
      %v1539 = vpop.f32.mrb[0].mxu0
      %v1540 = vpop.f32.mrb[0].mxu0
      %v1541 = vadd.f32 %v1397, %v1540
      %v1542 = vpop.f32.mrb[0].mxu0
      %1543 = vmatprep.mubr.bf16.mxu0 %v1330
      %1544 = vmatmul.mubr.bf16.gmra.mrb[0].mxu0 %v1218
      %v1545 = vpop.f32.mrb[0].mxu0
      %v1546 = vadd.f32 %v1397, %v1545
      %v1547 = vpop.f32.mrb[0].mxu0
      %v1548 = vpop.f32.mrb[0].mxu0
      %v1549 = vadd.f32 %v1397, %v1548
      %v1550 = vpop.f32.mrb[0].mxu0
      %1551 = vmatprep.mubr.bf16.mxu0 %v1331
      %1552 = vmatmul.mubr.bf16.gmra.mrb[0].mxu0 %v1219
      %v1553 = vpop.f32.mrb[0].mxu0
      %v1554 = vadd.f32 %v1397, %v1553
      %v1555 = vpop.f32.mrb[0].mxu0
      %v1556 = vpop.f32.mrb[0].mxu0
      %v1557 = vadd.f32 %v1397, %v1556
      %v1558 = vpop.f32.mrb[0].mxu0
      %1559 = vmatprep.mubr.bf16.mxu0 %v1332
      %1560 = vmatmul.mubr.bf16.gmra.mrb[0].mxu0 %v1220
      %v1561 = vpop.f32.mrb[0].mxu0
      %v1562 = vadd.f32 %v1397, %v1561
      %v1563 = vpop.f32.mrb[0].mxu0
      %v1564 = vpop.f32.mrb[0].mxu0
      %v1565 = vadd.f32 %v1397, %v1564
      %v1566 = vpop.f32.mrb[0].mxu0
      %1567 = vmatprep.mubr.bf16.mxu0 %v1333
      %1568 = vmatmul.mubr.bf16.gmra.mrb[0].mxu0 %v1221
      %v1569 = vpop.f32.mrb[0].mxu0
      %v1570 = vadd.f32 %v1397, %v1569
      %v1571 = vpop.f32.mrb[0].mxu0
      %v1572 = vpop.f32.mrb[0].mxu0
      %v1573 = vadd.f32 %v1397, %v1572
      %v1574 = vpop.f32.mrb[0].mxu0
      %1575 = vmatprep.mubr.bf16.mxu0 %v1334
      %1576 = vmatmul.mubr.bf16.gmra.mrb[0].mxu0 %v1222
      %v1577 = vpop.f32.mrb[0].mxu0
      %v1578 = vadd.f32 %v1397, %v1577
      %v1579 = vpop.f32.mrb[0].mxu0
      %v1580 = vpop.f32.mrb[0].mxu0
      %v1581 = vadd.f32 %v1397, %v1580
      %v1582 = vpop.f32.mrb[0].mxu0
      %1583 = vmatprep.mubr.bf16.mxu0 %v1335
      %1584 = vmatmul.mubr.bf16.gmra.mrb[0].mxu0 %v1223
      %v1585 = vpop.f32.mrb[0].mxu0
      %v1586 = vadd.f32 %v1397, %v1585
      %v1587 = vpop.f32.mrb[0].mxu0
      %v1588 = vpop.f32.mrb[0].mxu0
      %v1589 = vadd.f32 %v1397, %v1588
      %v1590 = vpop.f32.mrb[0].mxu0
      %1591 = vmatprep.mubr.bf16.mxu0 %v1336
      %1592 = vmatmul.mubr.bf16.gmra.mrb[0].mxu0 %v1224
      %v1593 = vpop.f32.mrb[0].mxu0
      %v1594 = vadd.f32 %v1397, %v1593
      %v1595 = vpop.f32.mrb[0].mxu0
      %v1596 = vpop.f32.mrb[0].mxu0
      %v1597 = vadd.f32 %v1397, %v1596
      %v1598 = vpop.f32.mrb[0].mxu0
      %1599 = vmatprep.mubr.bf16.mxu0 %v1337
      %1600 = vmatmul.mubr.bf16.gmra.mrb[0].mxu0 %v1225
      %v1601 = vpop.f32.mrb[0].mxu0
      %v1602 = vadd.f32 %v1397, %v1601
      %v1603 = vpop.f32.mrb[0].mxu0
      %v1604 = vpop.f32.mrb[0].mxu0
      %v1605 = vadd.f32 %v1397, %v1604
      %v1606 = vpop.f32.mrb[0].mxu0
      %1607 = vmatprep.mubr.bf16.mxu0 %v1338
      %1608 = vmatmul.mubr.bf16.gmra.mrb[0].mxu0 %v1226
      %v1609 = vpop.f32.mrb[0].mxu0
      %v1610 = vadd.f32 %v1397, %v1609
      %v1611 = vpop.f32.mrb[0].mxu0
      %v1612 = vpop.f32.mrb[0].mxu0
      %v1613 = vadd.f32 %v1397, %v1612
      %v1614 = vpop.f32.mrb[0].mxu0
      %1615 = vmatprep.mubr.bf16.mxu0 %v1339
      %1616 = vmatmul.mubr.bf16.gmra.mrb[0].mxu0 %v1227
      %v1617 = vpop.f32.mrb[0].mxu0
      %v1618 = vadd.f32 %v1397, %v1617
      %v1619 = vpop.f32.mrb[0].mxu0
      %v1620 = vpop.f32.mrb[0].mxu0
      %v1621 = vadd.f32 %v1397, %v1620
      %v1622 = vpop.f32.mrb[0].mxu0
      %1623 = vmatprep.mubr.bf16.mxu0 %v1340
      %1624 = vmatmul.mubr.bf16.gmra.mrb[0].mxu0 %v1228
      %v1625 = vpop.f32.mrb[0].mxu0
      %v1626 = vadd.f32 %v1397, %v1625
      %v1627 = vpop.f32.mrb[0].mxu0
      %v1628 = vpop.f32.mrb[0].mxu0
      %v1629 = vadd.f32 %v1397, %v1628
      %v1630 = vpop.f32.mrb[0].mxu0
      %1631 = vmatprep.mubr.bf16.mxu0 %v1341
      %1632 = vmatmul.mubr.bf16.gmra.mrb[0].mxu0 %v1229
      %v1633 = vpop.f32.mrb[0].mxu0
      %v1634 = vadd.f32 %v1397, %v1633
      %v1635 = vpop.f32.mrb[0].mxu0
      %v1636 = vpop.f32.mrb[0].mxu0
      %v1637 = vadd.f32 %v1397, %v1636
      %v1638 = vpop.f32.mrb[0].mxu0
      %1639 = vmatprep.mubr.bf16.mxu0 %v1342
      %1640 = vmatmul.mubr.bf16.gmra.mrb[0].mxu0 %v1230
      %v1641 = vpop.f32.mrb[0].mxu0
      %v1642 = vadd.f32 %v1397, %v1641
      %v1643 = vpop.f32.mrb[0].mxu0
      %v1644 = vpop.f32.mrb[0].mxu0
      %v1645 = vadd.f32 %v1397, %v1644
      %v1646 = vpop.f32.mrb[0].mxu0
      %1647 = vmatprep.mubr.bf16.mxu0 %v1343
      %1648 = vmatmul.mubr.bf16.gmra.mrb[0].mxu0 %v1231
      %v1649 = vpop.f32.mrb[0].mxu0
      %v1650 = vadd.f32 %v1397, %v1649
      %v1651 = vpop.f32.mrb[0].mxu0
      %v1652 = vpop.f32.mrb[0].mxu0
      %v1653 = vadd.f32 %v1397, %v1652
      %v1654 = vpop.f32.mrb[0].mxu0
      %1655 = vdwg.mxu0
      %v1656 = vlaneseq
      %v1657 = vand.u32 %v1656, 127
      %vm1658 = vcmp.lt.s32.totalorder %v1657, 48
      %v1659 = vsel %vm1658, %v1530, -inf
      %v1660 = vsel %vm1658, %v1533, -inf
      %v1661 = vsel %vm1658, %v1538, -inf
      %v1662 = vsel %vm1658, %v1541, -inf
      %v1663 = vsel %vm1658, %v1546, -inf
      %v1664 = vsel %vm1658, %v1549, -inf
      %v1665 = vsel %vm1658, %v1554, -inf
      %v1666 = vsel %vm1658, %v1557, -inf
      %v1667 = vsel %vm1658, %v1562, -inf
      %v1668 = vsel %vm1658, %v1565, -inf
      %v1669 = vsel %vm1658, %v1570, -inf
      %v1670 = vsel %vm1658, %v1573, -inf
      %v1671 = vsel %vm1658, %v1578, -inf
      %v1672 = vsel %vm1658, %v1581, -inf
      %v1673 = vsel %vm1658, %v1586, -inf
      %v1674 = vsel %vm1658, %v1589, -inf
      %v1675 = vsel %vm1658, %v1594, -inf
      %v1676 = vsel %vm1658, %v1597, -inf
      %v1677 = vsel %vm1658, %v1602, -inf
      %v1678 = vsel %vm1658, %v1605, -inf
      %v1679 = vsel %vm1658, %v1610, -inf
      %v1680 = vsel %vm1658, %v1613, -inf
      %v1681 = vsel %vm1658, %v1618, -inf
      %v1682 = vsel %vm1658, %v1621, -inf
      %v1683 = vsel %vm1658, %v1626, -inf
      %v1684 = vsel %vm1658, %v1629, -inf
      %v1685 = vsel %vm1658, %v1634, -inf
      %v1686 = vsel %vm1658, %v1637, -inf
      %v1687 = vsel %vm1658, %v1642, -inf
      %v1688 = vsel %vm1658, %v1645, -inf
      %v1689 = vsel %vm1658, %v1650, -inf
      %v1690 = vsel %vm1658, %v1653, -inf
      %1691 = vmax.xlane.f32.xlu0 %v1659
      %v1692 = vpop.xlane.xlu0 %1691
      %1693 = vmax.xlane.f32.xlu0 %v1660
      %v1694 = vpop.xlane.xlu0 %1693
      %1695 = vmax.xlane.f32.xlu0 %v1661
      %v1696 = vpop.xlane.xlu0 %1695
      %1697 = vmax.xlane.f32.xlu0 %v1662
      %v1698 = vpop.xlane.xlu0 %1697
      %1699 = vmax.xlane.f32.xlu0 %v1663
      %v1700 = vpop.xlane.xlu0 %1699
      %1701 = vmax.xlane.f32.xlu0 %v1664
      %v1702 = vpop.xlane.xlu0 %1701
      %1703 = vmax.xlane.f32.xlu0 %v1665
      %v1704 = vpop.xlane.xlu0 %1703
      %1705 = vmax.xlane.f32.xlu0 %v1666
      %v1706 = vpop.xlane.xlu0 %1705
      %1707 = vmax.xlane.f32.xlu0 %v1667
      %v1708 = vpop.xlane.xlu0 %1707
      %1709 = vmax.xlane.f32.xlu0 %v1668
      %v1710 = vpop.xlane.xlu0 %1709
      %1711 = vmax.xlane.f32.xlu0 %v1669
      %v1712 = vpop.xlane.xlu0 %1711
      %1713 = vmax.xlane.f32.xlu0 %v1670
      %v1714 = vpop.xlane.xlu0 %1713
      %1715 = vmax.xlane.f32.xlu0 %v1671
      %v1716 = vpop.xlane.xlu0 %1715
      %1717 = vmax.xlane.f32.xlu0 %v1672
      %v1718 = vpop.xlane.xlu0 %1717
      %1719 = vmax.xlane.f32.xlu0 %v1673
      %v1720 = vpop.xlane.xlu0 %1719
      %1721 = vmax.xlane.f32.xlu0 %v1674
      %v1722 = vpop.xlane.xlu0 %1721
      %1723 = vmax.xlane.f32.xlu0 %v1675
      %v1724 = vpop.xlane.xlu0 %1723
      %1725 = vmax.xlane.f32.xlu0 %v1676
      %v1726 = vpop.xlane.xlu0 %1725
      %1727 = vmax.xlane.f32.xlu0 %v1677
      %v1728 = vpop.xlane.xlu0 %1727
      %1729 = vmax.xlane.f32.xlu0 %v1678
      %v1730 = vpop.xlane.xlu0 %1729
      %1731 = vmax.xlane.f32.xlu0 %v1679
      %v1732 = vpop.xlane.xlu0 %1731
      %1733 = vmax.xlane.f32.xlu0 %v1680
      %v1734 = vpop.xlane.xlu0 %1733
      %1735 = vmax.xlane.f32.xlu0 %v1681
      %v1736 = vpop.xlane.xlu0 %1735
      %1737 = vmax.xlane.f32.xlu0 %v1682
      %v1738 = vpop.xlane.xlu0 %1737
      %1739 = vmax.xlane.f32.xlu0 %v1683
      %v1740 = vpop.xlane.xlu0 %1739
      %1741 = vmax.xlane.f32.xlu0 %v1684
      %v1742 = vpop.xlane.xlu0 %1741
      %1743 = vmax.xlane.f32.xlu0 %v1685
      %v1744 = vpop.xlane.xlu0 %1743
      %1745 = vmax.xlane.f32.xlu0 %v1686
      %v1746 = vpop.xlane.xlu0 %1745
      %1747 = vmax.xlane.f32.xlu0 %v1687
      %v1748 = vpop.xlane.xlu0 %1747
      %1749 = vmax.xlane.f32.xlu0 %v1688
      %v1750 = vpop.xlane.xlu0 %1749
      %1751 = vmax.xlane.f32.xlu0 %v1689
      %v1752 = vpop.xlane.xlu0 %1751
      %1753 = vmax.xlane.f32.xlu0 %v1690
      %v1754 = vpop.xlane.xlu0 %1753
      %v1755 = vsub.f32 %v1659, %v1692
      %v1756 = vsub.f32 %v1660, %v1694
      %v1757 = vsub.f32 %v1661, %v1696
      %v1758 = vsub.f32 %v1662, %v1698
      %v1759 = vsub.f32 %v1663, %v1700
      %v1760 = vsub.f32 %v1664, %v1702
      %v1761 = vsub.f32 %v1665, %v1704
      %v1762 = vsub.f32 %v1666, %v1706
      %v1763 = vsub.f32 %v1667, %v1708
      %v1764 = vsub.f32 %v1668, %v1710
      %v1765 = vsub.f32 %v1669, %v1712
      %v1766 = vsub.f32 %v1670, %v1714
      %v1767 = vsub.f32 %v1671, %v1716
      %v1768 = vsub.f32 %v1672, %v1718
      %v1769 = vsub.f32 %v1673, %v1720
      %v1770 = vsub.f32 %v1674, %v1722
      %v1771 = vsub.f32 %v1675, %v1724
      %v1772 = vsub.f32 %v1676, %v1726
      %v1773 = vsub.f32 %v1677, %v1728
      %v1774 = vsub.f32 %v1678, %v1730
      %v1775 = vsub.f32 %v1679, %v1732
      %v1776 = vsub.f32 %v1680, %v1734
      %v1777 = vsub.f32 %v1681, %v1736
      %v1778 = vsub.f32 %v1682, %v1738
      %v1779 = vsub.f32 %v1683, %v1740
      %v1780 = vsub.f32 %v1684, %v1742
      %v1781 = vsub.f32 %v1685, %v1744
      %v1782 = vsub.f32 %v1686, %v1746
      %v1783 = vsub.f32 %v1687, %v1748
      %v1784 = vsub.f32 %v1688, %v1750
      %v1785 = vsub.f32 %v1689, %v1752
      %v1786 = vsub.f32 %v1690, %v1754
      %v1787 = vmul.f32 %v1755, 1.442695
      %v1788 = vpow.pop %v1787
      %v1789 = vmul.f32 %v1756, 1.442695
      %v1790 = vpow.pop %v1789
      %v1791 = vmul.f32 %v1757, 1.442695
      %v1792 = vpow.pop %v1791
      %v1793 = vmul.f32 %v1758, 1.442695
      %v1794 = vpow.pop %v1793
      %v1795 = vmul.f32 %v1759, 1.442695
      %v1796 = vpow.pop %v1795
      %v1797 = vmul.f32 %v1760, 1.442695
      %v1798 = vpow.pop %v1797
      %v1799 = vmul.f32 %v1761, 1.442695
      %v1800 = vpow.pop %v1799
      %v1801 = vmul.f32 %v1762, 1.442695
      %v1802 = vpow.pop %v1801
      %v1803 = vmul.f32 %v1763, 1.442695
      %v1804 = vpow.pop %v1803
      %v1805 = vmul.f32 %v1764, 1.442695
      %v1806 = vpow.pop %v1805
      %v1807 = vmul.f32 %v1765, 1.442695
      %v1808 = vpow.pop %v1807
      %v1809 = vmul.f32 %v1766, 1.442695
      %v1810 = vpow.pop %v1809
      %v1811 = vmul.f32 %v1767, 1.442695
      %v1812 = vpow.pop %v1811
      %v1813 = vmul.f32 %v1768, 1.442695
      %v1814 = vpow.pop %v1813
      %v1815 = vmul.f32 %v1769, 1.442695
      %v1816 = vpow.pop %v1815
      %v1817 = vmul.f32 %v1770, 1.442695
      %v1818 = vpow.pop %v1817
      %v1819 = vmul.f32 %v1771, 1.442695
      %v1820 = vpow.pop %v1819
      %v1821 = vmul.f32 %v1772, 1.442695
      %v1822 = vpow.pop %v1821
      %v1823 = vmul.f32 %v1773, 1.442695
      %v1824 = vpow.pop %v1823
      %v1825 = vmul.f32 %v1774, 1.442695
      %v1826 = vpow.pop %v1825
      %v1827 = vmul.f32 %v1775, 1.442695
      %v1828 = vpow.pop %v1827
      %v1829 = vmul.f32 %v1776, 1.442695
      %v1830 = vpow.pop %v1829
      %v1831 = vmul.f32 %v1777, 1.442695
      %v1832 = vpow.pop %v1831
      %v1833 = vmul.f32 %v1778, 1.442695
      %v1834 = vpow.pop %v1833
      %v1835 = vmul.f32 %v1779, 1.442695
      %v1836 = vpow.pop %v1835
      %v1837 = vmul.f32 %v1780, 1.442695
      %v1838 = vpow.pop %v1837
      %v1839 = vmul.f32 %v1781, 1.442695
      %v1840 = vpow.pop %v1839
      %v1841 = vmul.f32 %v1782, 1.442695
      %v1842 = vpow.pop %v1841
      %v1843 = vmul.f32 %v1783, 1.442695
      %v1844 = vpow.pop %v1843
      %v1845 = vmul.f32 %v1784, 1.442695
      %v1846 = vpow.pop %v1845
      %v1847 = vmul.f32 %v1785, 1.442695
      %v1848 = vpow.pop %v1847
      %v1849 = vmul.f32 %v1786, 1.442695
      %v1850 = vpow.pop %v1849
      %1851 = vadd.xlane.f32.xlu0 %v1788
      %v1852 = vpop.xlane.xlu0 %1851
      %1853 = vadd.xlane.f32.xlu0 %v1790
      %v1854 = vpop.xlane.xlu0 %1853
      %1855 = vadd.xlane.f32.xlu0 %v1792
      %v1856 = vpop.xlane.xlu0 %1855
      %1857 = vadd.xlane.f32.xlu0 %v1794
      %v1858 = vpop.xlane.xlu0 %1857
      %1859 = vadd.xlane.f32.xlu0 %v1796
      %v1860 = vpop.xlane.xlu0 %1859
      %1861 = vadd.xlane.f32.xlu0 %v1798
      %v1862 = vpop.xlane.xlu0 %1861
      %1863 = vadd.xlane.f32.xlu0 %v1800
      %v1864 = vpop.xlane.xlu0 %1863
      %1865 = vadd.xlane.f32.xlu0 %v1802
      %v1866 = vpop.xlane.xlu0 %1865
      %1867 = vadd.xlane.f32.xlu0 %v1804
      %v1868 = vpop.xlane.xlu0 %1867
      %1869 = vadd.xlane.f32.xlu0 %v1806
      %v1870 = vpop.xlane.xlu0 %1869
      %1871 = vadd.xlane.f32.xlu0 %v1808
      %v1872 = vpop.xlane.xlu0 %1871
      %1873 = vadd.xlane.f32.xlu0 %v1810
      %v1874 = vpop.xlane.xlu0 %1873
      %1875 = vadd.xlane.f32.xlu0 %v1812
      %v1876 = vpop.xlane.xlu0 %1875
      %1877 = vadd.xlane.f32.xlu0 %v1814
      %v1878 = vpop.xlane.xlu0 %1877
      %1879 = vadd.xlane.f32.xlu0 %v1816
      %v1880 = vpop.xlane.xlu0 %1879
      %1881 = vadd.xlane.f32.xlu0 %v1818
      %v1882 = vpop.xlane.xlu0 %1881
      %1883 = vadd.xlane.f32.xlu0 %v1820
      %v1884 = vpop.xlane.xlu0 %1883
      %1885 = vadd.xlane.f32.xlu0 %v1822
      %v1886 = vpop.xlane.xlu0 %1885
      %1887 = vadd.xlane.f32.xlu0 %v1824
      %v1888 = vpop.xlane.xlu0 %1887
      %1889 = vadd.xlane.f32.xlu0 %v1826
      %v1890 = vpop.xlane.xlu0 %1889
      %1891 = vadd.xlane.f32.xlu0 %v1828
      %v1892 = vpop.xlane.xlu0 %1891
      %1893 = vadd.xlane.f32.xlu0 %v1830
      %v1894 = vpop.xlane.xlu0 %1893
      %1895 = vadd.xlane.f32.xlu0 %v1832
      %v1896 = vpop.xlane.xlu0 %1895
      %1897 = vadd.xlane.f32.xlu0 %v1834
      %v1898 = vpop.xlane.xlu0 %1897
      %1899 = vadd.xlane.f32.xlu0 %v1836
      %v1900 = vpop.xlane.xlu0 %1899
      %1901 = vadd.xlane.f32.xlu0 %v1838
      %v1902 = vpop.xlane.xlu0 %1901
      %1903 = vadd.xlane.f32.xlu0 %v1840
      %v1904 = vpop.xlane.xlu0 %1903
      %1905 = vadd.xlane.f32.xlu0 %v1842
      %v1906 = vpop.xlane.xlu0 %1905
      %1907 = vadd.xlane.f32.xlu0 %v1844
      %v1908 = vpop.xlane.xlu0 %1907
      %1909 = vadd.xlane.f32.xlu0 %v1846
      %v1910 = vpop.xlane.xlu0 %1909
      %1911 = vadd.xlane.f32.xlu0 %v1848
      %v1912 = vpop.xlane.xlu0 %1911
      %1913 = vadd.xlane.f32.xlu0 %v1850
      %v1914 = vpop.xlane.xlu0 %1913
      %v1915 = vlog2.pop %v1852
      %v1916 = vmul.f32 %v1915, 0.6931472
      %v1917 = vlog2.pop %v1854
      %v1918 = vmul.f32 %v1917, 0.6931472
      %v1919 = vlog2.pop %v1856
      %v1920 = vmul.f32 %v1919, 0.6931472
      %v1921 = vlog2.pop %v1858
      %v1922 = vmul.f32 %v1921, 0.6931472
      %v1923 = vlog2.pop %v1860
      %v1924 = vmul.f32 %v1923, 0.6931472
      %v1925 = vlog2.pop %v1862
      %v1926 = vmul.f32 %v1925, 0.6931472
      %v1927 = vlog2.pop %v1864
      %v1928 = vmul.f32 %v1927, 0.6931472
      %v1929 = vlog2.pop %v1866
      %v1930 = vmul.f32 %v1929, 0.6931472
      %v1931 = vlog2.pop %v1868
      %v1932 = vmul.f32 %v1931, 0.6931472
      %v1933 = vlog2.pop %v1870
      %v1934 = vmul.f32 %v1933, 0.6931472
      %v1935 = vlog2.pop %v1872
      %v1936 = vmul.f32 %v1935, 0.6931472
      %v1937 = vlog2.pop %v1874
      %v1938 = vmul.f32 %v1937, 0.6931472
      %v1939 = vlog2.pop %v1876
      %v1940 = vmul.f32 %v1939, 0.6931472
      %v1941 = vlog2.pop %v1878
      %v1942 = vmul.f32 %v1941, 0.6931472
      %v1943 = vlog2.pop %v1880
      %v1944 = vmul.f32 %v1943, 0.6931472
      %v1945 = vlog2.pop %v1882
      %v1946 = vmul.f32 %v1945, 0.6931472
      %v1947 = vlog2.pop %v1884
      %v1948 = vmul.f32 %v1947, 0.6931472
      %v1949 = vlog2.pop %v1886
      %v1950 = vmul.f32 %v1949, 0.6931472
      %v1951 = vlog2.pop %v1888
      %v1952 = vmul.f32 %v1951, 0.6931472
      %v1953 = vlog2.pop %v1890
      %v1954 = vmul.f32 %v1953, 0.6931472
      %v1955 = vlog2.pop %v1892
      %v1956 = vmul.f32 %v1955, 0.6931472
      %v1957 = vlog2.pop %v1894
      %v1958 = vmul.f32 %v1957, 0.6931472
      %v1959 = vlog2.pop %v1896
      %v1960 = vmul.f32 %v1959, 0.6931472
      %v1961 = vlog2.pop %v1898
      %v1962 = vmul.f32 %v1961, 0.6931472
      %v1963 = vlog2.pop %v1900
      %v1964 = vmul.f32 %v1963, 0.6931472
      %v1965 = vlog2.pop %v1902
      %v1966 = vmul.f32 %v1965, 0.6931472
      %v1967 = vlog2.pop %v1904
      %v1968 = vmul.f32 %v1967, 0.6931472
      %v1969 = vlog2.pop %v1906
      %v1970 = vmul.f32 %v1969, 0.6931472
      %v1971 = vlog2.pop %v1908
      %v1972 = vmul.f32 %v1971, 0.6931472
      %v1973 = vlog2.pop %v1910
      %v1974 = vmul.f32 %v1973, 0.6931472
      %v1975 = vlog2.pop %v1912
      %v1976 = vmul.f32 %v1975, 0.6931472
      %v1977 = vlog2.pop %v1914
      %v1978 = vmul.f32 %v1977, 0.6931472
      %v1979 = vsub.f32 %v1755, %v1916
      %v1980 = vsub.f32 %v1756, %v1918
      %v1981 = vsub.f32 %v1757, %v1920
      %v1982 = vsub.f32 %v1758, %v1922
      %v1983 = vsub.f32 %v1759, %v1924
      %v1984 = vsub.f32 %v1760, %v1926
      %v1985 = vsub.f32 %v1761, %v1928
      %v1986 = vsub.f32 %v1762, %v1930
      %v1987 = vsub.f32 %v1763, %v1932
      %v1988 = vsub.f32 %v1764, %v1934
      %v1989 = vsub.f32 %v1765, %v1936
      %v1990 = vsub.f32 %v1766, %v1938
      %v1991 = vsub.f32 %v1767, %v1940
      %v1992 = vsub.f32 %v1768, %v1942
      %v1993 = vsub.f32 %v1769, %v1944
      %v1994 = vsub.f32 %v1770, %v1946
      %v1995 = vsub.f32 %v1771, %v1948
      %v1996 = vsub.f32 %v1772, %v1950
      %v1997 = vsub.f32 %v1773, %v1952
      %v1998 = vsub.f32 %v1774, %v1954
      %v1999 = vsub.f32 %v1775, %v1956
      %v2000 = vsub.f32 %v1776, %v1958
      %v2001 = vsub.f32 %v1777, %v1960
      %v2002 = vsub.f32 %v1778, %v1962
      %v2003 = vsub.f32 %v1779, %v1964
      %v2004 = vsub.f32 %v1780, %v1966
      %v2005 = vsub.f32 %v1781, %v1968
      %v2006 = vsub.f32 %v1782, %v1970
      %v2007 = vsub.f32 %v1783, %v1972
      %v2008 = vsub.f32 %v1784, %v1974
      %v2009 = vsub.f32 %v1785, %v1976
      %v2010 = vsub.f32 %v1786, %v1978
      %2011 = vst [vmem:[%s251] sm:$0xff] %v1979
      %2012 = vst [vmem:[%s251 + $0x8] sm:$0xff] %v1980
      %2013 = vst [vmem:[%s251 + $0x10] sm:$0xff] %v1981
      %2014 = vst [vmem:[%s251 + $0x18] sm:$0xff] %v1982
      %2015 = vst [vmem:[%s251 + $0x20] sm:$0xff] %v1983
      %2016 = vst [vmem:[%s251 + $0x28] sm:$0xff] %v1984
      %2017 = vst [vmem:[%s251 + $0x30] sm:$0xff] %v1985
      %2018 = vst [vmem:[%s251 + $0x38] sm:$0xff] %v1986
      %2019 = vst [vmem:[%s251 + $0x40] sm:$0xff] %v1987
      %2020 = vst [vmem:[%s251 + $0x48] sm:$0xff] %v1988
      %2021 = vst [vmem:[%s251 + $0x50] sm:$0xff] %v1989
      %2022 = vst [vmem:[%s251 + $0x58] sm:$0xff] %v1990
      %2023 = vst [vmem:[%s251 + $0x60] sm:$0xff] %v1991
      %2024 = vst [vmem:[%s251 + $0x68] sm:$0xff] %v1992
      %2025 = vst [vmem:[%s251 + $0x70] sm:$0xff] %v1993
      %2026 = vst [vmem:[%s251 + $0x78] sm:$0xff] %v1994
      %2027 = vst [vmem:[%s251 + $0x80] sm:$0xff] %v1995
      %2028 = vst [vmem:[%s251 + $0x88] sm:$0xff] %v1996
      %2029 = vst [vmem:[%s251 + $0x90] sm:$0xff] %v1997
      %2030 = vst [vmem:[%s251 + $0x98] sm:$0xff] %v1998
      %2031 = vst [vmem:[%s251 + $0xa0] sm:$0xff] %v1999
      %2032 = vst [vmem:[%s251 + $0xa8] sm:$0xff] %v2000
      %2033 = vst [vmem:[%s251 + $0xb0] sm:$0xff] %v2001
      %2034 = vst [vmem:[%s251 + $0xb8] sm:$0xff] %v2002
      %2035 = vst [vmem:[%s251 + $0xc0] sm:$0xff] %v2003
      %2036 = vst [vmem:[%s251 + $0xc8] sm:$0xff] %v2004
      %2037 = vst [vmem:[%s251 + $0xd0] sm:$0xff] %v2005
      %2038 = vst [vmem:[%s251 + $0xd8] sm:$0xff] %v2006
      %2039 = vst [vmem:[%s251 + $0xe0] sm:$0xff] %v2007
      %2040 = vst [vmem:[%s251 + $0xe8] sm:$0xff] %v2008
      %2041 = vst [vmem:[%s251 + $0xf0] sm:$0xff] %v2009
      %2042 = vst [vmem:[%s251 + $0xf8] sm:$0xff] %v2010
      %s2043 = smul.u32 32, %s16
      %p2044 = scmp.lt.s32.totalorder %s2043, 63
      %s2045 = scalar_select %p2044, %s2043, 63
      %s2046 = smul.addr %s2045, 8
      %s2047 = scalar_lea.vmem %s5, %s2046
      // Predicated region
      $region41: #{graphsage_forward.3} parent=39 // pred_check
        %p2048 = pneg %p149
      $region42: #{graphsage_forward.3} parent=39 // pred_check_branch
        %2050 = sbr.rel (%p2048) target = $region44
      $region43: #{graphsage_forward.3} parent=39 // pred_region
        %s2051 = smul.u32 32, %s16
      $region44: #{graphsage_forward.3} parent=39 // pred_fallthru
        _
    $region40: #{graphsage_forward.3} parent=5 // pred_fallthru
      _
    %p2052 = scmp.le.s32.totalorder 2, %s11
    // Predicated region
    $region45: #{graphsage_forward.3} parent=5 // pred_check
      %p2053 = pneg %p2052
    $region46: #{graphsage_forward.3} parent=5 // pred_check_branch
      %2055 = sbr.rel (%p2053) target = $region48
    $region47: #{graphsage_forward.3} parent=5 // pred_region
      %s2056 = ssub.s32 %s11, 2
      // Predicated region
      $region49: #{graphsage_forward.3} parent=47 // pred_check
        %p2057 = pneg %p155
      $region50: #{graphsage_forward.3} parent=47 // pred_check_branch
        %2059 = sbr.rel (%p2057) target = $region52
      $region51: #{graphsage_forward.3} parent=47 // pred_region
        %s2060 = smul.u32 32, %s17
        %p2061 = scmp.lt.s32.totalorder %s2060, 63
        %s2062 = scalar_select %p2061, %s2060, 63
        %s2063 = smul.addr %s2062, 8
        %s2064 = scalar_lea.vmem %s5, %s2063
      $region52: #{graphsage_forward.3} parent=47 // pred_fallthru
        _
    $region48: #{graphsage_forward.3} parent=5 // pred_fallthru
      _
  $region6: #{graphsage_forward.3} parent=0 // loop_footer
    %s15 = sadd.s32 1, %s11
  $region7: #{graphsage_forward.3} parent=0 // loop_footer_branch
    %10 = sbr.rel target = $region3
  $region8: #{graphsage_forward.3} parent=0 // loop_exit
    _

</llo_original>
